<compile_context>
chip_gen: v7x
topology: tpu7x:2x2x1
jax: 0.10.0
libtpu: 0.0.40
codegen_flags: <defaults>
</compile_context>

<pallas_src>
import functools

import jax
import jax.numpy as jnp
from jax.experimental import pallas as pl
from jax.experimental.pallas import tpu as pltpu


def _round_up(x, m):
    return (x + m - 1) // m * m


# Lane-aligned halo on each side of every image's flattened H*W pixel segment
# inside the VMEM pad buffer.  Must be >= W + 1; 128 keeps stores aligned.
_HALO = 128


def _fused_cnn_kernel(x_ref, *rest, H, W, bt, n_layers):
    """All conv layers for one batch tile; activations stay in VMEM.

    x_ref : (Cin_pad0, bt*H*W)   lane-dense input (batch*pixels on lanes)
    rest  : n_layers weight refs (Cout_pad_i, 9*Cin_pad_i),
            then o_ref (Cout_pad_last, bt*H*W),
            then pad_ref VMEM (C_max, bt*(2*_HALO + H*W))   (haloed activations),
            then col_ref VMEM (9*C_in_max, bt*H*W)          (im2col scratch).
    """
    w_refs = rest[:n_layers]
    o_ref = rest[n_layers]
    pad_ref = rest[n_layers + 1]
    col_ref = rest[n_layers + 2]

    HW = H * W
    SEG = 2 * _HALO + HW  # per-image segment (halo | pixels | halo)

    # Zero the padded buffer once per invocation (grid is a single step by
    # default).  Halo columns are never written afterwards, so vertical (dy)
    # taps at image borders read zeros for the whole network.
    pad_ref[...] = jnp.zeros(pad_ref.shape, pad_ref.dtype)

    # Park each image's input activation in its lane-aligned live region.
    cin0 = x_ref.shape[0]
    for b in range(bt):
        pad_ref[0:cin0, b * SEG + _HALO:b * SEG + _HALO + HW] = (
            x_ref[:, b * HW:(b + 1) * HW])

    # Horizontal wrap masks (per-image column position), hoisted out of the
    # layer loop.  Vertical taps are handled by the zero halo; only the two
    # row-wrap cases (dx = 0 at w == 0, dx = 2 at w == W-1) need masking.
    wpos = jax.lax.broadcasted_iota(jnp.int32, (1, HW), 1) % W
    mask_left = wpos > 0           # tap dx=0 reads source column w-1
    mask_right = wpos < (W - 1)    # tap dx=2 reads source column w+1

    for li, w_ref in enumerate(w_refs):
        cout = w_ref.shape[0]              # padded to a multiple of 8
        cin = w_ref.shape[1] // 9          # padded to a multiple of 8

        # im2col into VMEM scratch: 9 shifted (masked) views, one per tap,
        # stacked on the sublane axis for every image in the tile -> a single
        # deep matmul with K = 9*cin and N = bt*HW per layer.
        for dy in range(3):
            for dx in range(3):
                t = dy * 3 + dx
                off = _HALO + (dy - 1) * W + (dx - 1)
                for b in range(bt):
                    v = pad_ref[0:cin, b * SEG + off:b * SEG + off + HW]
                    if dx == 0:
                        v = jnp.where(mask_left, v, 0.0)
                    elif dx == 2:
                        v = jnp.where(mask_right, v, 0.0)
                    col_ref[t * cin:(t + 1) * cin,
                            b * HW:(b + 1) * HW] = v.astype(col_ref.dtype)

        out = jnp.dot(w_ref[...], col_ref[0:9 * cin, :],
                      preferred_element_type=jnp.float32)   # (cout, bt*HW)

        if li < n_layers - 1:
            out = jnp.maximum(out, 0.0)                      # fused ReLU
            for b in range(bt):                              # next layer input
                pad_ref[0:cout, b * SEG + _HALO:b * SEG + _HALO + HW] = (
                    out[:, b * HW:(b + 1) * HW])
        else:
            # output_activation defaults to identity.
            o_ref[...] = out.astype(o_ref.dtype)
    # TODO(synk): config['output_activation'] other than None/identity is not wired up.


def _prep_weight(w, dtype=jnp.float32):
    """HWIO (3,3,Cin,Cout) -> (Cout_pad, 9*Cin_pad); Cin and Cout zero-padded
    to multiples of 8.  Flat K order is (dy, dx, ci) to match the im2col."""
    kh, kw, cin, cout = w.shape
    cin_pad = _round_up(cin, 8)
    cout_pad = _round_up(cout, 8)
    w = jnp.pad(w, ((0, 0), (0, 0), (0, cin_pad - cin), (0, cout_pad - cout)))
    return jnp.transpose(w, (3, 0, 1, 2)).reshape(
        cout_pad, kh * kw * cin_pad).astype(dtype)


def vanilla_cnn_forward(x, weights, *, batch_tiles=1, mxu_dtype=jnp.float32):
    """x: (B, H, W, dim_in) -> (B, H, W, dim_out). Matches VanillaCNN.forward
    (autocast disabled -> f32; output_activation = None -> identity).

    batch_tiles: grid size over batch (1 = fold everything into lanes; set 2
      on v7x to use both TensorCores when B is larger).
    mxu_dtype: dtype for the im2col operands / weights fed to the MXU.  The
      default f32 preserves the module's autocast(enabled=False) contract;
      jnp.bfloat16 trades ~1e-2 relative error for ~3x MXU throughput.
    """
    x = x.astype(jnp.float32)
    B, H, W, cin = x.shape
    HW = H * W
    assert _HALO >= W + 1 and _HALO % 128 == 0, "halo too small for this W"
    assert B % batch_tiles == 0
    bt = B // batch_tiles
    if batch_tiles > 1:
        assert (bt * HW) % 128 == 0, "batch tile must be lane-aligned"

    n_layers = len(weights)
    dim_out = weights[-1].shape[-1]
    dim_out_pad = _round_up(dim_out, 8)

    # Layout plumbing (wrapper-side): BHWC -> lane-dense (Cin_pad, B*H*W).
    cin_pad0 = _round_up(cin, 8)
    x_l = jnp.transpose(x, (3, 0, 1, 2)).reshape(cin, B * HW)
    if cin_pad0 != cin:
        x_l = jnp.pad(x_l, ((0, cin_pad0 - cin), (0, 0)))

    wflats = [_prep_weight(w, mxu_dtype) for w in weights]
    cin_pads = [wf.shape[1] // 9 for wf in wflats]
    cout_pads = [wf.shape[0] for wf in wflats]
    c_max = max(cin_pads + cout_pads + [cin_pad0])
    k_max = 9 * max(cin_pads)
    SEG = 2 * _HALO + HW

    kernel = functools.partial(_fused_cnn_kernel, H=H, W=W, bt=bt,
                               n_layers=n_layers)

    in_specs = [pl.BlockSpec((cin_pad0, bt * HW), lambda t: (0, t))]
    for wf in wflats:
        in_specs.append(pl.BlockSpec(wf.shape, lambda t: (0, 0)))

    out_flat = pl.pallas_call(
        kernel,
        out_shape=jax.ShapeDtypeStruct((dim_out_pad, B * HW), jnp.float32),
        grid_spec=pltpu.PrefetchScalarGridSpec(
            num_scalar_prefetch=0,
            grid=(batch_tiles,),
            in_specs=in_specs,
            out_specs=pl.BlockSpec((dim_out_pad, bt * HW), lambda t: (0, t)),
            scratch_shapes=[
                pltpu.VMEM((c_max, bt * SEG), jnp.float32),   # haloed acts
                pltpu.VMEM((k_max, bt * HW), mxu_dtype),      # im2col
            ]),
        compiler_params=pltpu.CompilerParams(
            dimension_semantics=("parallel",)),
    )(x_l, *wflats)

    # Lane-dense (Cout_pad, B*H*W) -> module's BHWC contract (padding sliced).
    out = out_flat[:dim_out].reshape(dim_out, B, H, W)
    return jnp.transpose(out, (1, 2, 3, 0))


def init_vanilla_cnn_params(key, dim_in, dim_out, n_neurons, n_hidden_layers):
    """Deterministic weights for n_hidden_layers + 1 convs (HWIO, no bias).

    Mirrors PyTorch Conv2d default init (uniform bound 1/sqrt(fan_in),
    fan_in = Cin * 3 * 3), generated with the JAX PRNG.
    """
    channel_pairs = [(dim_in, n_neurons)]
    channel_pairs += [(n_neurons, n_neurons)] * (n_hidden_layers - 1)
    channel_pairs += [(n_neurons, dim_out)]
    weights = []
    for cin, cout in channel_pairs:
        key, sub = jax.random.split(key)
        bound = 1.0 / jnp.sqrt(cin * 9.0)
        w = jax.random.uniform(sub, (3, 3, cin, cout), jnp.float32,
                               minval=-bound, maxval=bound)
        weights.append(w)
    return weights


def _reference_forward(x, weights):
    """Pure-JAX reference (lax conv) for correctness checking."""
    x = x.astype(jnp.float32)
    n = len(weights)
    for i, w in enumerate(weights):
        x = jax.lax.conv_general_dilated(
            x, w, window_strides=(1, 1), padding="SAME",
            dimension_numbers=("NHWC", "HWIO", "NHWC"))
        if i < n - 1:
            x = jnp.maximum(x, 0.0)
    return x


if __name__ == "__main__":
    B, H, W = 2, 16, 16
    dim_in, dim_out = 4, 3
    config = {"n_neurons": 32, "n_hidden_layers": 2, "output_activation": None}

    key = jax.random.PRNGKey(0)
    kx, kw = jax.random.split(key)
    x = jax.random.normal(kx, (B, H, W, dim_in), jnp.float32)
    weights = init_vanilla_cnn_params(
        kw, dim_in, dim_out, config["n_neurons"], config["n_hidden_layers"])

    fwd = jax.jit(vanilla_cnn_forward)
    y = jax.block_until_ready(fwd(x, weights))
    assert y.shape == (B, H, W, dim_out) and y.dtype == jnp.float32

    y_ref = jax.block_until_ready(_reference_forward(x, weights))
    assert jnp.allclose(y, y_ref, atol=2e-4, rtol=2e-4), "Pallas CNN mismatch"

    print("KERNEL_OK")
</pallas_src>

<mosaic_0001>
module attributes {stable_mosaic.version = 11 : i64} {
  func.func @_fused_cnn_kernel(%arg0: i32, %arg1: memref<8x512xf32, #tpu.memory_space<vmem>>, %arg2: memref<32x72xf32, #tpu.memory_space<vmem>>, %arg3: memref<32x288xf32, #tpu.memory_space<vmem>>, %arg4: memref<8x288xf32, #tpu.memory_space<vmem>>, %arg5: memref<8x512xf32, #tpu.memory_space<vmem>>, %arg6: memref<32x1024xf32, #tpu.memory_space<vmem>>, %arg7: memref<288x512xf32, #tpu.memory_space<vmem>>) attributes {dimension_semantics = [#tpu.dimension_semantics<parallel>], iteration_bounds = array<i64: 1>, scalar_prefetch = 0 : i64, scratch_operands = 2 : i64, tpu.core_type = #tpu.core_type<tc>, window_params = [{transform_indices = @transform_0, window_bounds = array<i64: 8, 512>}, {pipeline_mode = #tpu.pipeline_mode<synchronous>, transform_indices = @transform_1, window_bounds = array<i64: 32, 72>}, {pipeline_mode = #tpu.pipeline_mode<synchronous>, transform_indices = @transform_2, window_bounds = array<i64: 32, 288>}, {pipeline_mode = #tpu.pipeline_mode<synchronous>, transform_indices = @transform_3, window_bounds = array<i64: 8, 288>}, {transform_indices = @transform_4, window_bounds = array<i64: 8, 512>}]} {
    %cst = arith.constant 0.000000e+00 : f32
    %0 = vector.broadcast %cst : f32 to vector<32x1024xf32>
    %c0 = arith.constant 0 : index
    %c0_0 = arith.constant 0 : index
    %1 = vector.load %arg6[%c0, %c0_0] : memref<32x1024xf32, #tpu.memory_space<vmem>>, vector<32x1024xf32>
    tpu.vector_store %arg6[%c0, %c0_0], %0 {strides = array<i32>} : memref<32x1024xf32, #tpu.memory_space<vmem>>, vector<32x1024xf32>,
    %c0_1 = arith.constant 0 : index
    %c0_2 = arith.constant 0 : index
    %2 = vector.load %arg1[%c0_1, %c0_2] : memref<8x512xf32, #tpu.memory_space<vmem>>, vector<8x256xf32>
    %c0_3 = arith.constant 0 : index
    %c128 = arith.constant 128 : index
    %3 = vector.load %arg6[%c0_3, %c128] : memref<32x1024xf32, #tpu.memory_space<vmem>>, vector<8x256xf32>
    tpu.vector_store %arg6[%c0_3, %c128], %2 {strides = array<i32>} : memref<32x1024xf32, #tpu.memory_space<vmem>>, vector<8x256xf32>,
    %c0_4 = arith.constant 0 : index
    %c256 = arith.constant 256 : index
    %4 = vector.load %arg1[%c0_4, %c256] : memref<8x512xf32, #tpu.memory_space<vmem>>, vector<8x256xf32>
    %c0_5 = arith.constant 0 : index
    %c640 = arith.constant 640 : index
    %5 = vector.load %arg6[%c0_5, %c640] : memref<32x1024xf32, #tpu.memory_space<vmem>>, vector<8x256xf32>
    tpu.vector_store %arg6[%c0_5, %c640], %4 {strides = array<i32>} : memref<32x1024xf32, #tpu.memory_space<vmem>>, vector<8x256xf32>,
    %6 = tpu.iota {dimensions = array<i32: 1>} : vector<1x256xi32>
    %c16_i32 = arith.constant 16 : i32
    %c0_i32 = arith.constant 0 : i32
    %7 = arith.cmpi eq, %c16_i32, %c0_i32 : i32
    %c1_i32 = arith.constant 1 : i32
    %8 = arith.select %7, %c1_i32, %c16_i32 : i32
    %9 = vector.broadcast %8 : i32 to vector<1x256xi32>
    %10 = arith.remsi %6, %9 : vector<1x256xi32>
    %c0_i32_6 = arith.constant 0 : i32
    %11 = vector.broadcast %c0_i32_6 : i32 to vector<1x256xi32>
    %12 = arith.cmpi ne, %10, %11 : vector<1x256xi32>
    %c0_i32_7 = arith.constant 0 : i32
    %13 = vector.broadcast %c0_i32_7 : i32 to vector<1x256xi32>
    %14 = arith.cmpi slt, %10, %13 : vector<1x256xi32>
    %c0_i32_8 = arith.constant 0 : i32
    %15 = arith.cmpi slt, %8, %c0_i32_8 : i32
    %16 = vector.broadcast %15 : i1 to vector<1x256xi1>
    %17 = vector.broadcast %16 : vector<1x256xi1> to vector<1x256xi1>
    %18 = arith.xori %14, %17 : vector<1x256xi1>
    %19 = arith.andi %18, %12 : vector<1x256xi1>
    %20 = vector.broadcast %8 : i32 to vector<1x256xi32>
    %21 = arith.addi %10, %20 : vector<1x256xi32>
    %22 = arith.select %19, %21, %10 : vector<1x256xi1>, vector<1x256xi32>
    %c0_i32_9 = arith.constant 0 : i32
    %23 = vector.broadcast %c0_i32_9 : i32 to vector<1x256xi32>
    %24 = arith.cmpi sgt, %22, %23 : vector<1x256xi32>
    %c15_i32 = arith.constant 15 : i32
    %25 = vector.broadcast %c15_i32 : i32 to vector<1x256xi32>
    %26 = arith.cmpi slt, %22, %25 : vector<1x256xi32>
    %c0_10 = arith.constant 0 : index
    %c111 = arith.constant 111 : index
    %27 = vector.load %arg6[%c0_10, %c111] : memref<32x1024xf32, #tpu.memory_space<vmem>>, vector<8x256xf32>
    %cst_11 = arith.constant 0.000000e+00 : f32
    %28 = vector.shape_cast %24 : vector<1x256xi1> to vector<1x256xi1>
    %29 = vector.broadcast %28 : vector<1x256xi1> to vector<8x256xi1>
    %30 = vector.broadcast %cst_11 : f32 to vector<8x256xf32>
    %31 = arith.select %29, %27, %30 : vector<8x256xi1>, vector<8x256xf32>
    %c0_12 = arith.constant 0 : index
    %c0_13 = arith.constant 0 : index
    %32 = vector.load %arg7[%c0_12, %c0_13] : memref<288x512xf32, #tpu.memory_space<vmem>>, vector<8x256xf32>
    tpu.vector_store %arg7[%c0_12, %c0_13], %31 {strides = array<i32>} : memref<288x512xf32, #tpu.memory_space<vmem>>, vector<8x256xf32>,
    %c0_14 = arith.constant 0 : index
    %c623 = arith.constant 623 : index
    %33 = vector.load %arg6[%c0_14, %c623] : memref<32x1024xf32, #tpu.memory_space<vmem>>, vector<8x256xf32>
    %cst_15 = arith.constant 0.000000e+00 : f32
    %34 = vector.shape_cast %24 : vector<1x256xi1> to vector<1x256xi1>
    %35 = vector.broadcast %34 : vector<1x256xi1> to vector<8x256xi1>
    %36 = vector.broadcast %cst_15 : f32 to vector<8x256xf32>
    %37 = arith.select %35, %33, %36 : vector<8x256xi1>, vector<8x256xf32>
    %c0_16 = arith.constant 0 : index
    %c256_17 = arith.constant 256 : index
    %38 = vector.load %arg7[%c0_16, %c256_17] : memref<288x512xf32, #tpu.memory_space<vmem>>, vector<8x256xf32>
    tpu.vector_store %arg7[%c0_16, %c256_17], %37 {strides = array<i32>} : memref<288x512xf32, #tpu.memory_space<vmem>>, vector<8x256xf32>,
    %c0_18 = arith.constant 0 : index
    %c112 = arith.constant 112 : index
    %39 = vector.load %arg6[%c0_18, %c112] : memref<32x1024xf32, #tpu.memory_space<vmem>>, vector<8x256xf32>
    %c8 = arith.constant 8 : index
    %c0_19 = arith.constant 0 : index
    %40 = vector.load %arg7[%c8, %c0_19] : memref<288x512xf32, #tpu.memory_space<vmem>>, vector<8x256xf32>
    tpu.vector_store %arg7[%c8, %c0_19], %39 {strides = array<i32>} : memref<288x512xf32, #tpu.memory_space<vmem>>, vector<8x256xf32>,
    %c0_20 = arith.constant 0 : index
    %c624 = arith.constant 624 : index
    %41 = vector.load %arg6[%c0_20, %c624] : memref<32x1024xf32, #tpu.memory_space<vmem>>, vector<8x256xf32>
    %c8_21 = arith.constant 8 : index
    %c256_22 = arith.constant 256 : index
    %42 = vector.load %arg7[%c8_21, %c256_22] : memref<288x512xf32, #tpu.memory_space<vmem>>, vector<8x256xf32>
    tpu.vector_store %arg7[%c8_21, %c256_22], %41 {strides = array<i32>} : memref<288x512xf32, #tpu.memory_space<vmem>>, vector<8x256xf32>,
    %c0_23 = arith.constant 0 : index
    %c113 = arith.constant 113 : index
    %43 = vector.load %arg6[%c0_23, %c113] : memref<32x1024xf32, #tpu.memory_space<vmem>>, vector<8x256xf32>
    %cst_24 = arith.constant 0.000000e+00 : f32
    %44 = vector.shape_cast %26 : vector<1x256xi1> to vector<1x256xi1>
    %45 = vector.broadcast %44 : vector<1x256xi1> to vector<8x256xi1>
    %46 = vector.broadcast %cst_24 : f32 to vector<8x256xf32>
    %47 = arith.select %45, %43, %46 : vector<8x256xi1>, vector<8x256xf32>
    %c16 = arith.constant 16 : index
    %c0_25 = arith.constant 0 : index
    %48 = vector.load %arg7[%c16, %c0_25] : memref<288x512xf32, #tpu.memory_space<vmem>>, vector<8x256xf32>
    tpu.vector_store %arg7[%c16, %c0_25], %47 {strides = array<i32>} : memref<288x512xf32, #tpu.memory_space<vmem>>, vector<8x256xf32>,
    %c0_26 = arith.constant 0 : index
    %c625 = arith.constant 625 : index
    %49 = vector.load %arg6[%c0_26, %c625] : memref<32x1024xf32, #tpu.memory_space<vmem>>, vector<8x256xf32>
    %cst_27 = arith.constant 0.000000e+00 : f32
    %50 = vector.shape_cast %26 : vector<1x256xi1> to vector<1x256xi1>
    %51 = vector.broadcast %50 : vector<1x256xi1> to vector<8x256xi1>
    %52 = vector.broadcast %cst_27 : f32 to vector<8x256xf32>
    %53 = arith.select %51, %49, %52 : vector<8x256xi1>, vector<8x256xf32>
    %c16_28 = arith.constant 16 : index
    %c256_29 = arith.constant 256 : index
    %54 = vector.load %arg7[%c16_28, %c256_29] : memref<288x512xf32, #tpu.memory_space<vmem>>, vector<8x256xf32>
    tpu.vector_store %arg7[%c16_28, %c256_29], %53 {strides = array<i32>} : memref<288x512xf32, #tpu.memory_space<vmem>>, vector<8x256xf32>,
    %c0_30 = arith.constant 0 : index
    %c127 = arith.constant 127 : index
    %55 = vector.load %arg6[%c0_30, %c127] : memref<32x1024xf32, #tpu.memory_space<vmem>>, vector<8x256xf32>
    %cst_31 = arith.constant 0.000000e+00 : f32
    %56 = vector.shape_cast %24 : vector<1x256xi1> to vector<1x256xi1>
    %57 = vector.broadcast %56 : vector<1x256xi1> to vector<8x256xi1>
    %58 = vector.broadcast %cst_31 : f32 to vector<8x256xf32>
    %59 = arith.select %57, %55, %58 : vector<8x256xi1>, vector<8x256xf32>
    %c24 = arith.constant 24 : index
    %c0_32 = arith.constant 0 : index
    %60 = vector.load %arg7[%c24, %c0_32] : memref<288x512xf32, #tpu.memory_space<vmem>>, vector<8x256xf32>
    tpu.vector_store %arg7[%c24, %c0_32], %59 {strides = array<i32>} : memref<288x512xf32, #tpu.memory_space<vmem>>, vector<8x256xf32>,
    %c0_33 = arith.constant 0 : index
    %c639 = arith.constant 639 : index
    %61 = vector.load %arg6[%c0_33, %c639] : memref<32x1024xf32, #tpu.memory_space<vmem>>, vector<8x256xf32>
    %cst_34 = arith.constant 0.000000e+00 : f32
    %62 = vector.shape_cast %24 : vector<1x256xi1> to vector<1x256xi1>
    %63 = vector.broadcast %62 : vector<1x256xi1> to vector<8x256xi1>
    %64 = vector.broadcast %cst_34 : f32 to vector<8x256xf32>
    %65 = arith.select %63, %61, %64 : vector<8x256xi1>, vector<8x256xf32>
    %c24_35 = arith.constant 24 : index
    %c256_36 = arith.constant 256 : index
    %66 = vector.load %arg7[%c24_35, %c256_36] : memref<288x512xf32, #tpu.memory_space<vmem>>, vector<8x256xf32>
    tpu.vector_store %arg7[%c24_35, %c256_36], %65 {strides = array<i32>} : memref<288x512xf32, #tpu.memory_space<vmem>>, vector<8x256xf32>,
    %c0_37 = arith.constant 0 : index
    %c128_38 = arith.constant 128 : index
    %67 = vector.load %arg6[%c0_37, %c128_38] : memref<32x1024xf32, #tpu.memory_space<vmem>>, vector<8x256xf32>
    %c32 = arith.constant 32 : index
    %c0_39 = arith.constant 0 : index
    %68 = vector.load %arg7[%c32, %c0_39] : memref<288x512xf32, #tpu.memory_space<vmem>>, vector<8x256xf32>
    tpu.vector_store %arg7[%c32, %c0_39], %67 {strides = array<i32>} : memref<288x512xf32, #tpu.memory_space<vmem>>, vector<8x256xf32>,
    %c0_40 = arith.constant 0 : index
    %c640_41 = arith.constant 640 : index
    %69 = vector.load %arg6[%c0_40, %c640_41] : memref<32x1024xf32, #tpu.memory_space<vmem>>, vector<8x256xf32>
    %c32_42 = arith.constant 32 : index
    %c256_43 = arith.constant 256 : index
    %70 = vector.load %arg7[%c32_42, %c256_43] : memref<288x512xf32, #tpu.memory_space<vmem>>, vector<8x256xf32>
    tpu.vector_store %arg7[%c32_42, %c256_43], %69 {strides = array<i32>} : memref<288x512xf32, #tpu.memory_space<vmem>>, vector<8x256xf32>,
    %c0_44 = arith.constant 0 : index
    %c129 = arith.constant 129 : index
    %71 = vector.load %arg6[%c0_44, %c129] : memref<32x1024xf32, #tpu.memory_space<vmem>>, vector<8x256xf32>
    %cst_45 = arith.constant 0.000000e+00 : f32
    %72 = vector.shape_cast %26 : vector<1x256xi1> to vector<1x256xi1>
    %73 = vector.broadcast %72 : vector<1x256xi1> to vector<8x256xi1>
    %74 = vector.broadcast %cst_45 : f32 to vector<8x256xf32>
    %75 = arith.select %73, %71, %74 : vector<8x256xi1>, vector<8x256xf32>
    %c40 = arith.constant 40 : index
    %c0_46 = arith.constant 0 : index
    %76 = vector.load %arg7[%c40, %c0_46] : memref<288x512xf32, #tpu.memory_space<vmem>>, vector<8x256xf32>
    tpu.vector_store %arg7[%c40, %c0_46], %75 {strides = array<i32>} : memref<288x512xf32, #tpu.memory_space<vmem>>, vector<8x256xf32>,
    %c0_47 = arith.constant 0 : index
    %c641 = arith.constant 641 : index
    %77 = vector.load %arg6[%c0_47, %c641] : memref<32x1024xf32, #tpu.memory_space<vmem>>, vector<8x256xf32>
    %cst_48 = arith.constant 0.000000e+00 : f32
    %78 = vector.shape_cast %26 : vector<1x256xi1> to vector<1x256xi1>
    %79 = vector.broadcast %78 : vector<1x256xi1> to vector<8x256xi1>
    %80 = vector.broadcast %cst_48 : f32 to vector<8x256xf32>
    %81 = arith.select %79, %77, %80 : vector<8x256xi1>, vector<8x256xf32>
    %c40_49 = arith.constant 40 : index
    %c256_50 = arith.constant 256 : index
    %82 = vector.load %arg7[%c40_49, %c256_50] : memref<288x512xf32, #tpu.memory_space<vmem>>, vector<8x256xf32>
    tpu.vector_store %arg7[%c40_49, %c256_50], %81 {strides = array<i32>} : memref<288x512xf32, #tpu.memory_space<vmem>>, vector<8x256xf32>,
    %c0_51 = arith.constant 0 : index
    %c143 = arith.constant 143 : index
    %83 = vector.load %arg6[%c0_51, %c143] : memref<32x1024xf32, #tpu.memory_space<vmem>>, vector<8x256xf32>
    %cst_52 = arith.constant 0.000000e+00 : f32
    %84 = vector.shape_cast %24 : vector<1x256xi1> to vector<1x256xi1>
    %85 = vector.broadcast %84 : vector<1x256xi1> to vector<8x256xi1>
    %86 = vector.broadcast %cst_52 : f32 to vector<8x256xf32>
    %87 = arith.select %85, %83, %86 : vector<8x256xi1>, vector<8x256xf32>
    %c48 = arith.constant 48 : index
    %c0_53 = arith.constant 0 : index
    %88 = vector.load %arg7[%c48, %c0_53] : memref<288x512xf32, #tpu.memory_space<vmem>>, vector<8x256xf32>
    tpu.vector_store %arg7[%c48, %c0_53], %87 {strides = array<i32>} : memref<288x512xf32, #tpu.memory_space<vmem>>, vector<8x256xf32>,
    %c0_54 = arith.constant 0 : index
    %c655 = arith.constant 655 : index
    %89 = vector.load %arg6[%c0_54, %c655] : memref<32x1024xf32, #tpu.memory_space<vmem>>, vector<8x256xf32>
    %cst_55 = arith.constant 0.000000e+00 : f32
    %90 = vector.shape_cast %24 : vector<1x256xi1> to vector<1x256xi1>
    %91 = vector.broadcast %90 : vector<1x256xi1> to vector<8x256xi1>
    %92 = vector.broadcast %cst_55 : f32 to vector<8x256xf32>
    %93 = arith.select %91, %89, %92 : vector<8x256xi1>, vector<8x256xf32>
    %c48_56 = arith.constant 48 : index
    %c256_57 = arith.constant 256 : index
    %94 = vector.load %arg7[%c48_56, %c256_57] : memref<288x512xf32, #tpu.memory_space<vmem>>, vector<8x256xf32>
    tpu.vector_store %arg7[%c48_56, %c256_57], %93 {strides = array<i32>} : memref<288x512xf32, #tpu.memory_space<vmem>>, vector<8x256xf32>,
    %c0_58 = arith.constant 0 : index
    %c144 = arith.constant 144 : index
    %95 = vector.load %arg6[%c0_58, %c144] : memref<32x1024xf32, #tpu.memory_space<vmem>>, vector<8x256xf32>
    %c56 = arith.constant 56 : index
    %c0_59 = arith.constant 0 : index
    %96 = vector.load %arg7[%c56, %c0_59] : memref<288x512xf32, #tpu.memory_space<vmem>>, vector<8x256xf32>
    tpu.vector_store %arg7[%c56, %c0_59], %95 {strides = array<i32>} : memref<288x512xf32, #tpu.memory_space<vmem>>, vector<8x256xf32>,
    %c0_60 = arith.constant 0 : index
    %c656 = arith.constant 656 : index
    %97 = vector.load %arg6[%c0_60, %c656] : memref<32x1024xf32, #tpu.memory_space<vmem>>, vector<8x256xf32>
    %c56_61 = arith.constant 56 : index
    %c256_62 = arith.constant 256 : index
    %98 = vector.load %arg7[%c56_61, %c256_62] : memref<288x512xf32, #tpu.memory_space<vmem>>, vector<8x256xf32>
    tpu.vector_store %arg7[%c56_61, %c256_62], %97 {strides = array<i32>} : memref<288x512xf32, #tpu.memory_space<vmem>>, vector<8x256xf32>,
    %c0_63 = arith.constant 0 : index
    %c145 = arith.constant 145 : index
    %99 = vector.load %arg6[%c0_63, %c145] : memref<32x1024xf32, #tpu.memory_space<vmem>>, vector<8x256xf32>
    %cst_64 = arith.constant 0.000000e+00 : f32
    %100 = vector.shape_cast %26 : vector<1x256xi1> to vector<1x256xi1>
    %101 = vector.broadcast %100 : vector<1x256xi1> to vector<8x256xi1>
    %102 = vector.broadcast %cst_64 : f32 to vector<8x256xf32>
    %103 = arith.select %101, %99, %102 : vector<8x256xi1>, vector<8x256xf32>
    %c64 = arith.constant 64 : index
    %c0_65 = arith.constant 0 : index
    %104 = vector.load %arg7[%c64, %c0_65] : memref<288x512xf32, #tpu.memory_space<vmem>>, vector<8x256xf32>
    tpu.vector_store %arg7[%c64, %c0_65], %103 {strides = array<i32>} : memref<288x512xf32, #tpu.memory_space<vmem>>, vector<8x256xf32>,
    %c0_66 = arith.constant 0 : index
    %c657 = arith.constant 657 : index
    %105 = vector.load %arg6[%c0_66, %c657] : memref<32x1024xf32, #tpu.memory_space<vmem>>, vector<8x256xf32>
    %cst_67 = arith.constant 0.000000e+00 : f32
    %106 = vector.shape_cast %26 : vector<1x256xi1> to vector<1x256xi1>
    %107 = vector.broadcast %106 : vector<1x256xi1> to vector<8x256xi1>
    %108 = vector.broadcast %cst_67 : f32 to vector<8x256xf32>
    %109 = arith.select %107, %105, %108 : vector<8x256xi1>, vector<8x256xf32>
    %c64_68 = arith.constant 64 : index
    %c256_69 = arith.constant 256 : index
    %110 = vector.load %arg7[%c64_68, %c256_69] : memref<288x512xf32, #tpu.memory_space<vmem>>, vector<8x256xf32>
    tpu.vector_store %arg7[%c64_68, %c256_69], %109 {strides = array<i32>} : memref<288x512xf32, #tpu.memory_space<vmem>>, vector<8x256xf32>,
    %c0_70 = arith.constant 0 : index
    %c0_71 = arith.constant 0 : index
    %111 = vector.load %arg2[%c0_70, %c0_71] : memref<32x72xf32, #tpu.memory_space<vmem>>, vector<32x72xf32>
    %c0_72 = arith.constant 0 : index
    %c0_73 = arith.constant 0 : index
    %112 = vector.load %arg7[%c0_72, %c0_73] : memref<288x512xf32, #tpu.memory_space<vmem>>, vector<72x512xf32>
    %cst_74 = arith.constant dense<0.000000e+00> : vector<32x512xf32>
    %113 = tpu.matmul %111, %112, %cst_74 {dimension_numbers = #tpu.dot_dimension_numbers<[1], [0], [0], [1], [0, 0, 1, 1], [], []>} : vector<32x72xf32>, vector<72x512xf32>, vector<32x512xf32> -> vector<32x512xf32>
    %cst_75 = arith.constant 0.000000e+00 : f32
    %114 = vector.broadcast %cst_75 : f32 to vector<32x512xf32>
    %115 = arith.maximumf %113, %114 : vector<32x512xf32>
    %116 = vector.extract_strided_slice %115 {offsets = [0, 0], sizes = [32, 256], strides = [1, 1]} : vector<32x512xf32> to vector<32x256xf32>
    %c0_76 = arith.constant 0 : index
    %c128_77 = arith.constant 128 : index
    %117 = vector.load %arg6[%c0_76, %c128_77] : memref<32x1024xf32, #tpu.memory_space<vmem>>, vector<32x256xf32>
    tpu.vector_store %arg6[%c0_76, %c128_77], %116 {strides = array<i32>} : memref<32x1024xf32, #tpu.memory_space<vmem>>, vector<32x256xf32>,
    %118 = vector.extract_strided_slice %115 {offsets = [0, 256], sizes = [32, 256], strides = [1, 1]} : vector<32x512xf32> to vector<32x256xf32>
    %c0_78 = arith.constant 0 : index
    %c640_79 = arith.constant 640 : index
    %119 = vector.load %arg6[%c0_78, %c640_79] : memref<32x1024xf32, #tpu.memory_space<vmem>>, vector<32x256xf32>
    tpu.vector_store %arg6[%c0_78, %c640_79], %118 {strides = array<i32>} : memref<32x1024xf32, #tpu.memory_space<vmem>>, vector<32x256xf32>,
    %c0_80 = arith.constant 0 : index
    %c111_81 = arith.constant 111 : index
    %120 = vector.load %arg6[%c0_80, %c111_81] : memref<32x1024xf32, #tpu.memory_space<vmem>>, vector<32x256xf32>
    %cst_82 = arith.constant 0.000000e+00 : f32
    %121 = vector.shape_cast %24 : vector<1x256xi1> to vector<1x256xi1>
    %122 = vector.broadcast %121 : vector<1x256xi1> to vector<32x256xi1>
    %123 = vector.broadcast %cst_82 : f32 to vector<32x256xf32>
    %124 = arith.select %122, %120, %123 : vector<32x256xi1>, vector<32x256xf32>
    %c0_83 = arith.constant 0 : index
    %c0_84 = arith.constant 0 : index
    %125 = vector.load %arg7[%c0_83, %c0_84] : memref<288x512xf32, #tpu.memory_space<vmem>>, vector<32x256xf32>
    tpu.vector_store %arg7[%c0_83, %c0_84], %124 {strides = array<i32>} : memref<288x512xf32, #tpu.memory_space<vmem>>, vector<32x256xf32>,
    %c0_85 = arith.constant 0 : index
    %c623_86 = arith.constant 623 : index
    %126 = vector.load %arg6[%c0_85, %c623_86] : memref<32x1024xf32, #tpu.memory_space<vmem>>, vector<32x256xf32>
    %cst_87 = arith.constant 0.000000e+00 : f32
    %127 = vector.shape_cast %24 : vector<1x256xi1> to vector<1x256xi1>
    %128 = vector.broadcast %127 : vector<1x256xi1> to vector<32x256xi1>
    %129 = vector.broadcast %cst_87 : f32 to vector<32x256xf32>
    %130 = arith.select %128, %126, %129 : vector<32x256xi1>, vector<32x256xf32>
    %c0_88 = arith.constant 0 : index
    %c256_89 = arith.constant 256 : index
    %131 = vector.load %arg7[%c0_88, %c256_89] : memref<288x512xf32, #tpu.memory_space<vmem>>, vector<32x256xf32>
    tpu.vector_store %arg7[%c0_88, %c256_89], %130 {strides = array<i32>} : memref<288x512xf32, #tpu.memory_space<vmem>>, vector<32x256xf32>,
    %c0_90 = arith.constant 0 : index
    %c112_91 = arith.constant 112 : index
    %132 = vector.load %arg6[%c0_90, %c112_91] : memref<32x1024xf32, #tpu.memory_space<vmem>>, vector<32x256xf32>
    %c32_92 = arith.constant 32 : index
    %c0_93 = arith.constant 0 : index
    %133 = vector.load %arg7[%c32_92, %c0_93] : memref<288x512xf32, #tpu.memory_space<vmem>>, vector<32x256xf32>
    tpu.vector_store %arg7[%c32_92, %c0_93], %132 {strides = array<i32>} : memref<288x512xf32, #tpu.memory_space<vmem>>, vector<32x256xf32>,
    %c0_94 = arith.constant 0 : index
    %c624_95 = arith.constant 624 : index
    %134 = vector.load %arg6[%c0_94, %c624_95] : memref<32x1024xf32, #tpu.memory_space<vmem>>, vector<32x256xf32>
    %c32_96 = arith.constant 32 : index
    %c256_97 = arith.constant 256 : index
    %135 = vector.load %arg7[%c32_96, %c256_97] : memref<288x512xf32, #tpu.memory_space<vmem>>, vector<32x256xf32>
    tpu.vector_store %arg7[%c32_96, %c256_97], %134 {strides = array<i32>} : memref<288x512xf32, #tpu.memory_space<vmem>>, vector<32x256xf32>,
    %c0_98 = arith.constant 0 : index
    %c113_99 = arith.constant 113 : index
    %136 = vector.load %arg6[%c0_98, %c113_99] : memref<32x1024xf32, #tpu.memory_space<vmem>>, vector<32x256xf32>
    %cst_100 = arith.constant 0.000000e+00 : f32
    %137 = vector.shape_cast %26 : vector<1x256xi1> to vector<1x256xi1>
    %138 = vector.broadcast %137 : vector<1x256xi1> to vector<32x256xi1>
    %139 = vector.broadcast %cst_100 : f32 to vector<32x256xf32>
    %140 = arith.select %138, %136, %139 : vector<32x256xi1>, vector<32x256xf32>
    %c64_101 = arith.constant 64 : index
    %c0_102 = arith.constant 0 : index
    %141 = vector.load %arg7[%c64_101, %c0_102] : memref<288x512xf32, #tpu.memory_space<vmem>>, vector<32x256xf32>
    tpu.vector_store %arg7[%c64_101, %c0_102], %140 {strides = array<i32>} : memref<288x512xf32, #tpu.memory_space<vmem>>, vector<32x256xf32>,
    %c0_103 = arith.constant 0 : index
    %c625_104 = arith.constant 625 : index
    %142 = vector.load %arg6[%c0_103, %c625_104] : memref<32x1024xf32, #tpu.memory_space<vmem>>, vector<32x256xf32>
    %cst_105 = arith.constant 0.000000e+00 : f32
    %143 = vector.shape_cast %26 : vector<1x256xi1> to vector<1x256xi1>
    %144 = vector.broadcast %143 : vector<1x256xi1> to vector<32x256xi1>
    %145 = vector.broadcast %cst_105 : f32 to vector<32x256xf32>
    %146 = arith.select %144, %142, %145 : vector<32x256xi1>, vector<32x256xf32>
    %c64_106 = arith.constant 64 : index
    %c256_107 = arith.constant 256 : index
    %147 = vector.load %arg7[%c64_106, %c256_107] : memref<288x512xf32, #tpu.memory_space<vmem>>, vector<32x256xf32>
    tpu.vector_store %arg7[%c64_106, %c256_107], %146 {strides = array<i32>} : memref<288x512xf32, #tpu.memory_space<vmem>>, vector<32x256xf32>,
    %c0_108 = arith.constant 0 : index
    %c127_109 = arith.constant 127 : index
    %148 = vector.load %arg6[%c0_108, %c127_109] : memref<32x1024xf32, #tpu.memory_space<vmem>>, vector<32x256xf32>
    %cst_110 = arith.constant 0.000000e+00 : f32
    %149 = vector.shape_cast %24 : vector<1x256xi1> to vector<1x256xi1>
    %150 = vector.broadcast %149 : vector<1x256xi1> to vector<32x256xi1>
    %151 = vector.broadcast %cst_110 : f32 to vector<32x256xf32>
    %152 = arith.select %150, %148, %151 : vector<32x256xi1>, vector<32x256xf32>
    %c96 = arith.constant 96 : index
    %c0_111 = arith.constant 0 : index
    %153 = vector.load %arg7[%c96, %c0_111] : memref<288x512xf32, #tpu.memory_space<vmem>>, vector<32x256xf32>
    tpu.vector_store %arg7[%c96, %c0_111], %152 {strides = array<i32>} : memref<288x512xf32, #tpu.memory_space<vmem>>, vector<32x256xf32>,
    %c0_112 = arith.constant 0 : index
    %c639_113 = arith.constant 639 : index
    %154 = vector.load %arg6[%c0_112, %c639_113] : memref<32x1024xf32, #tpu.memory_space<vmem>>, vector<32x256xf32>
    %cst_114 = arith.constant 0.000000e+00 : f32
    %155 = vector.shape_cast %24 : vector<1x256xi1> to vector<1x256xi1>
    %156 = vector.broadcast %155 : vector<1x256xi1> to vector<32x256xi1>
    %157 = vector.broadcast %cst_114 : f32 to vector<32x256xf32>
    %158 = arith.select %156, %154, %157 : vector<32x256xi1>, vector<32x256xf32>
    %c96_115 = arith.constant 96 : index
    %c256_116 = arith.constant 256 : index
    %159 = vector.load %arg7[%c96_115, %c256_116] : memref<288x512xf32, #tpu.memory_space<vmem>>, vector<32x256xf32>
    tpu.vector_store %arg7[%c96_115, %c256_116], %158 {strides = array<i32>} : memref<288x512xf32, #tpu.memory_space<vmem>>, vector<32x256xf32>,
    %c0_117 = arith.constant 0 : index
    %c128_118 = arith.constant 128 : index
    %160 = vector.load %arg6[%c0_117, %c128_118] : memref<32x1024xf32, #tpu.memory_space<vmem>>, vector<32x256xf32>
    %c128_119 = arith.constant 128 : index
    %c0_120 = arith.constant 0 : index
    %161 = vector.load %arg7[%c128_119, %c0_120] : memref<288x512xf32, #tpu.memory_space<vmem>>, vector<32x256xf32>
    tpu.vector_store %arg7[%c128_119, %c0_120], %160 {strides = array<i32>} : memref<288x512xf32, #tpu.memory_space<vmem>>, vector<32x256xf32>,
    %c0_121 = arith.constant 0 : index
    %c640_122 = arith.constant 640 : index
    %162 = vector.load %arg6[%c0_121, %c640_122] : memref<32x1024xf32, #tpu.memory_space<vmem>>, vector<32x256xf32>
    %c128_123 = arith.constant 128 : index
    %c256_124 = arith.constant 256 : index
    %163 = vector.load %arg7[%c128_123, %c256_124] : memref<288x512xf32, #tpu.memory_space<vmem>>, vector<32x256xf32>
    tpu.vector_store %arg7[%c128_123, %c256_124], %162 {strides = array<i32>} : memref<288x512xf32, #tpu.memory_space<vmem>>, vector<32x256xf32>,
    %c0_125 = arith.constant 0 : index
    %c129_126 = arith.constant 129 : index
    %164 = vector.load %arg6[%c0_125, %c129_126] : memref<32x1024xf32, #tpu.memory_space<vmem>>, vector<32x256xf32>
    %cst_127 = arith.constant 0.000000e+00 : f32
    %165 = vector.shape_cast %26 : vector<1x256xi1> to vector<1x256xi1>
    %166 = vector.broadcast %165 : vector<1x256xi1> to vector<32x256xi1>
    %167 = vector.broadcast %cst_127 : f32 to vector<32x256xf32>
    %168 = arith.select %166, %164, %167 : vector<32x256xi1>, vector<32x256xf32>
    %c160 = arith.constant 160 : index
    %c0_128 = arith.constant 0 : index
    %169 = vector.load %arg7[%c160, %c0_128] : memref<288x512xf32, #tpu.memory_space<vmem>>, vector<32x256xf32>
    tpu.vector_store %arg7[%c160, %c0_128], %168 {strides = array<i32>} : memref<288x512xf32, #tpu.memory_space<vmem>>, vector<32x256xf32>,
    %c0_129 = arith.constant 0 : index
    %c641_130 = arith.constant 641 : index
    %170 = vector.load %arg6[%c0_129, %c641_130] : memref<32x1024xf32, #tpu.memory_space<vmem>>, vector<32x256xf32>
    %cst_131 = arith.constant 0.000000e+00 : f32
    %171 = vector.shape_cast %26 : vector<1x256xi1> to vector<1x256xi1>
    %172 = vector.broadcast %171 : vector<1x256xi1> to vector<32x256xi1>
    %173 = vector.broadcast %cst_131 : f32 to vector<32x256xf32>
    %174 = arith.select %172, %170, %173 : vector<32x256xi1>, vector<32x256xf32>
    %c160_132 = arith.constant 160 : index
    %c256_133 = arith.constant 256 : index
    %175 = vector.load %arg7[%c160_132, %c256_133] : memref<288x512xf32, #tpu.memory_space<vmem>>, vector<32x256xf32>
    tpu.vector_store %arg7[%c160_132, %c256_133], %174 {strides = array<i32>} : memref<288x512xf32, #tpu.memory_space<vmem>>, vector<32x256xf32>,
    %c0_134 = arith.constant 0 : index
    %c143_135 = arith.constant 143 : index
    %176 = vector.load %arg6[%c0_134, %c143_135] : memref<32x1024xf32, #tpu.memory_space<vmem>>, vector<32x256xf32>
    %cst_136 = arith.constant 0.000000e+00 : f32
    %177 = vector.shape_cast %24 : vector<1x256xi1> to vector<1x256xi1>
    %178 = vector.broadcast %177 : vector<1x256xi1> to vector<32x256xi1>
    %179 = vector.broadcast %cst_136 : f32 to vector<32x256xf32>
    %180 = arith.select %178, %176, %179 : vector<32x256xi1>, vector<32x256xf32>
    %c192 = arith.constant 192 : index
    %c0_137 = arith.constant 0 : index
    %181 = vector.load %arg7[%c192, %c0_137] : memref<288x512xf32, #tpu.memory_space<vmem>>, vector<32x256xf32>
    tpu.vector_store %arg7[%c192, %c0_137], %180 {strides = array<i32>} : memref<288x512xf32, #tpu.memory_space<vmem>>, vector<32x256xf32>,
    %c0_138 = arith.constant 0 : index
    %c655_139 = arith.constant 655 : index
    %182 = vector.load %arg6[%c0_138, %c655_139] : memref<32x1024xf32, #tpu.memory_space<vmem>>, vector<32x256xf32>
    %cst_140 = arith.constant 0.000000e+00 : f32
    %183 = vector.shape_cast %24 : vector<1x256xi1> to vector<1x256xi1>
    %184 = vector.broadcast %183 : vector<1x256xi1> to vector<32x256xi1>
    %185 = vector.broadcast %cst_140 : f32 to vector<32x256xf32>
    %186 = arith.select %184, %182, %185 : vector<32x256xi1>, vector<32x256xf32>
    %c192_141 = arith.constant 192 : index
    %c256_142 = arith.constant 256 : index
    %187 = vector.load %arg7[%c192_141, %c256_142] : memref<288x512xf32, #tpu.memory_space<vmem>>, vector<32x256xf32>
    tpu.vector_store %arg7[%c192_141, %c256_142], %186 {strides = array<i32>} : memref<288x512xf32, #tpu.memory_space<vmem>>, vector<32x256xf32>,
    %c0_143 = arith.constant 0 : index
    %c144_144 = arith.constant 144 : index
    %188 = vector.load %arg6[%c0_143, %c144_144] : memref<32x1024xf32, #tpu.memory_space<vmem>>, vector<32x256xf32>
    %c224 = arith.constant 224 : index
    %c0_145 = arith.constant 0 : index
    %189 = vector.load %arg7[%c224, %c0_145] : memref<288x512xf32, #tpu.memory_space<vmem>>, vector<32x256xf32>
    tpu.vector_store %arg7[%c224, %c0_145], %188 {strides = array<i32>} : memref<288x512xf32, #tpu.memory_space<vmem>>, vector<32x256xf32>,
    %c0_146 = arith.constant 0 : index
    %c656_147 = arith.constant 656 : index
    %190 = vector.load %arg6[%c0_146, %c656_147] : memref<32x1024xf32, #tpu.memory_space<vmem>>, vector<32x256xf32>
    %c224_148 = arith.constant 224 : index
    %c256_149 = arith.constant 256 : index
    %191 = vector.load %arg7[%c224_148, %c256_149] : memref<288x512xf32, #tpu.memory_space<vmem>>, vector<32x256xf32>
    tpu.vector_store %arg7[%c224_148, %c256_149], %190 {strides = array<i32>} : memref<288x512xf32, #tpu.memory_space<vmem>>, vector<32x256xf32>,
    %c0_150 = arith.constant 0 : index
    %c145_151 = arith.constant 145 : index
    %192 = vector.load %arg6[%c0_150, %c145_151] : memref<32x1024xf32, #tpu.memory_space<vmem>>, vector<32x256xf32>
    %cst_152 = arith.constant 0.000000e+00 : f32
    %193 = vector.shape_cast %26 : vector<1x256xi1> to vector<1x256xi1>
    %194 = vector.broadcast %193 : vector<1x256xi1> to vector<32x256xi1>
    %195 = vector.broadcast %cst_152 : f32 to vector<32x256xf32>
    %196 = arith.select %194, %192, %195 : vector<32x256xi1>, vector<32x256xf32>
    %c256_153 = arith.constant 256 : index
    %c0_154 = arith.constant 0 : index
    %197 = vector.load %arg7[%c256_153, %c0_154] : memref<288x512xf32, #tpu.memory_space<vmem>>, vector<32x256xf32>
    tpu.vector_store %arg7[%c256_153, %c0_154], %196 {strides = array<i32>} : memref<288x512xf32, #tpu.memory_space<vmem>>, vector<32x256xf32>,
    %c0_155 = arith.constant 0 : index
    %c657_156 = arith.constant 657 : index
    %198 = vector.load %arg6[%c0_155, %c657_156] : memref<32x1024xf32, #tpu.memory_space<vmem>>, vector<32x256xf32>
    %cst_157 = arith.constant 0.000000e+00 : f32
    %199 = vector.shape_cast %26 : vector<1x256xi1> to vector<1x256xi1>
    %200 = vector.broadcast %199 : vector<1x256xi1> to vector<32x256xi1>
    %201 = vector.broadcast %cst_157 : f32 to vector<32x256xf32>
    %202 = arith.select %200, %198, %201 : vector<32x256xi1>, vector<32x256xf32>
    %c256_158 = arith.constant 256 : index
    %c256_159 = arith.constant 256 : index
    %203 = vector.load %arg7[%c256_158, %c256_159] : memref<288x512xf32, #tpu.memory_space<vmem>>, vector<32x256xf32>
    tpu.vector_store %arg7[%c256_158, %c256_159], %202 {strides = array<i32>} : memref<288x512xf32, #tpu.memory_space<vmem>>, vector<32x256xf32>,
    %c0_160 = arith.constant 0 : index
    %c0_161 = arith.constant 0 : index
    %204 = vector.load %arg3[%c0_160, %c0_161] : memref<32x288xf32, #tpu.memory_space<vmem>>, vector<32x288xf32>
    %c0_162 = arith.constant 0 : index
    %c0_163 = arith.constant 0 : index
    %205 = vector.load %arg7[%c0_162, %c0_163] : memref<288x512xf32, #tpu.memory_space<vmem>>, vector<288x512xf32>
    %cst_164 = arith.constant dense<0.000000e+00> : vector<32x512xf32>
    %206 = tpu.matmul %204, %205, %cst_164 {dimension_numbers = #tpu.dot_dimension_numbers<[1], [0], [0], [1], [0, 0, 1, 1], [], []>} : vector<32x288xf32>, vector<288x512xf32>, vector<32x512xf32> -> vector<32x512xf32>
    %cst_165 = arith.constant 0.000000e+00 : f32
    %207 = vector.broadcast %cst_165 : f32 to vector<32x512xf32>
    %208 = arith.maximumf %206, %207 : vector<32x512xf32>
    %209 = vector.extract_strided_slice %208 {offsets = [0, 0], sizes = [32, 256], strides = [1, 1]} : vector<32x512xf32> to vector<32x256xf32>
    %c0_166 = arith.constant 0 : index
    %c128_167 = arith.constant 128 : index
    %210 = vector.load %arg6[%c0_166, %c128_167] : memref<32x1024xf32, #tpu.memory_space<vmem>>, vector<32x256xf32>
    tpu.vector_store %arg6[%c0_166, %c128_167], %209 {strides = array<i32>} : memref<32x1024xf32, #tpu.memory_space<vmem>>, vector<32x256xf32>,
    %211 = vector.extract_strided_slice %208 {offsets = [0, 256], sizes = [32, 256], strides = [1, 1]} : vector<32x512xf32> to vector<32x256xf32>
    %c0_168 = arith.constant 0 : index
    %c640_169 = arith.constant 640 : index
    %212 = vector.load %arg6[%c0_168, %c640_169] : memref<32x1024xf32, #tpu.memory_space<vmem>>, vector<32x256xf32>
    tpu.vector_store %arg6[%c0_168, %c640_169], %211 {strides = array<i32>} : memref<32x1024xf32, #tpu.memory_space<vmem>>, vector<32x256xf32>,
    %c0_170 = arith.constant 0 : index
    %c111_171 = arith.constant 111 : index
    %213 = vector.load %arg6[%c0_170, %c111_171] : memref<32x1024xf32, #tpu.memory_space<vmem>>, vector<32x256xf32>
    %cst_172 = arith.constant 0.000000e+00 : f32
    %214 = vector.shape_cast %24 : vector<1x256xi1> to vector<1x256xi1>
    %215 = vector.broadcast %214 : vector<1x256xi1> to vector<32x256xi1>
    %216 = vector.broadcast %cst_172 : f32 to vector<32x256xf32>
    %217 = arith.select %215, %213, %216 : vector<32x256xi1>, vector<32x256xf32>
    %c0_173 = arith.constant 0 : index
    %c0_174 = arith.constant 0 : index
    %218 = vector.load %arg7[%c0_173, %c0_174] : memref<288x512xf32, #tpu.memory_space<vmem>>, vector<32x256xf32>
    tpu.vector_store %arg7[%c0_173, %c0_174], %217 {strides = array<i32>} : memref<288x512xf32, #tpu.memory_space<vmem>>, vector<32x256xf32>,
    %c0_175 = arith.constant 0 : index
    %c623_176 = arith.constant 623 : index
    %219 = vector.load %arg6[%c0_175, %c623_176] : memref<32x1024xf32, #tpu.memory_space<vmem>>, vector<32x256xf32>
    %cst_177 = arith.constant 0.000000e+00 : f32
    %220 = vector.shape_cast %24 : vector<1x256xi1> to vector<1x256xi1>
    %221 = vector.broadcast %220 : vector<1x256xi1> to vector<32x256xi1>
    %222 = vector.broadcast %cst_177 : f32 to vector<32x256xf32>
    %223 = arith.select %221, %219, %222 : vector<32x256xi1>, vector<32x256xf32>
    %c0_178 = arith.constant 0 : index
    %c256_179 = arith.constant 256 : index
    %224 = vector.load %arg7[%c0_178, %c256_179] : memref<288x512xf32, #tpu.memory_space<vmem>>, vector<32x256xf32>
    tpu.vector_store %arg7[%c0_178, %c256_179], %223 {strides = array<i32>} : memref<288x512xf32, #tpu.memory_space<vmem>>, vector<32x256xf32>,
    %c0_180 = arith.constant 0 : index
    %c112_181 = arith.constant 112 : index
    %225 = vector.load %arg6[%c0_180, %c112_181] : memref<32x1024xf32, #tpu.memory_space<vmem>>, vector<32x256xf32>
    %c32_182 = arith.constant 32 : index
    %c0_183 = arith.constant 0 : index
    %226 = vector.load %arg7[%c32_182, %c0_183] : memref<288x512xf32, #tpu.memory_space<vmem>>, vector<32x256xf32>
    tpu.vector_store %arg7[%c32_182, %c0_183], %225 {strides = array<i32>} : memref<288x512xf32, #tpu.memory_space<vmem>>, vector<32x256xf32>,
    %c0_184 = arith.constant 0 : index
    %c624_185 = arith.constant 624 : index
    %227 = vector.load %arg6[%c0_184, %c624_185] : memref<32x1024xf32, #tpu.memory_space<vmem>>, vector<32x256xf32>
    %c32_186 = arith.constant 32 : index
    %c256_187 = arith.constant 256 : index
    %228 = vector.load %arg7[%c32_186, %c256_187] : memref<288x512xf32, #tpu.memory_space<vmem>>, vector<32x256xf32>
    tpu.vector_store %arg7[%c32_186, %c256_187], %227 {strides = array<i32>} : memref<288x512xf32, #tpu.memory_space<vmem>>, vector<32x256xf32>,
    %c0_188 = arith.constant 0 : index
    %c113_189 = arith.constant 113 : index
    %229 = vector.load %arg6[%c0_188, %c113_189] : memref<32x1024xf32, #tpu.memory_space<vmem>>, vector<32x256xf32>
    %cst_190 = arith.constant 0.000000e+00 : f32
    %230 = vector.shape_cast %26 : vector<1x256xi1> to vector<1x256xi1>
    %231 = vector.broadcast %230 : vector<1x256xi1> to vector<32x256xi1>
    %232 = vector.broadcast %cst_190 : f32 to vector<32x256xf32>
    %233 = arith.select %231, %229, %232 : vector<32x256xi1>, vector<32x256xf32>
    %c64_191 = arith.constant 64 : index
    %c0_192 = arith.constant 0 : index
    %234 = vector.load %arg7[%c64_191, %c0_192] : memref<288x512xf32, #tpu.memory_space<vmem>>, vector<32x256xf32>
    tpu.vector_store %arg7[%c64_191, %c0_192], %233 {strides = array<i32>} : memref<288x512xf32, #tpu.memory_space<vmem>>, vector<32x256xf32>,
    %c0_193 = arith.constant 0 : index
    %c625_194 = arith.constant 625 : index
    %235 = vector.load %arg6[%c0_193, %c625_194] : memref<32x1024xf32, #tpu.memory_space<vmem>>, vector<32x256xf32>
    %cst_195 = arith.constant 0.000000e+00 : f32
    %236 = vector.shape_cast %26 : vector<1x256xi1> to vector<1x256xi1>
    %237 = vector.broadcast %236 : vector<1x256xi1> to vector<32x256xi1>
    %238 = vector.broadcast %cst_195 : f32 to vector<32x256xf32>
    %239 = arith.select %237, %235, %238 : vector<32x256xi1>, vector<32x256xf32>
    %c64_196 = arith.constant 64 : index
    %c256_197 = arith.constant 256 : index
    %240 = vector.load %arg7[%c64_196, %c256_197] : memref<288x512xf32, #tpu.memory_space<vmem>>, vector<32x256xf32>
    tpu.vector_store %arg7[%c64_196, %c256_197], %239 {strides = array<i32>} : memref<288x512xf32, #tpu.memory_space<vmem>>, vector<32x256xf32>,
    %c0_198 = arith.constant 0 : index
    %c127_199 = arith.constant 127 : index
    %241 = vector.load %arg6[%c0_198, %c127_199] : memref<32x1024xf32, #tpu.memory_space<vmem>>, vector<32x256xf32>
    %cst_200 = arith.constant 0.000000e+00 : f32
    %242 = vector.shape_cast %24 : vector<1x256xi1> to vector<1x256xi1>
    %243 = vector.broadcast %242 : vector<1x256xi1> to vector<32x256xi1>
    %244 = vector.broadcast %cst_200 : f32 to vector<32x256xf32>
    %245 = arith.select %243, %241, %244 : vector<32x256xi1>, vector<32x256xf32>
    %c96_201 = arith.constant 96 : index
    %c0_202 = arith.constant 0 : index
    %246 = vector.load %arg7[%c96_201, %c0_202] : memref<288x512xf32, #tpu.memory_space<vmem>>, vector<32x256xf32>
    tpu.vector_store %arg7[%c96_201, %c0_202], %245 {strides = array<i32>} : memref<288x512xf32, #tpu.memory_space<vmem>>, vector<32x256xf32>,
    %c0_203 = arith.constant 0 : index
    %c639_204 = arith.constant 639 : index
    %247 = vector.load %arg6[%c0_203, %c639_204] : memref<32x1024xf32, #tpu.memory_space<vmem>>, vector<32x256xf32>
    %cst_205 = arith.constant 0.000000e+00 : f32
    %248 = vector.shape_cast %24 : vector<1x256xi1> to vector<1x256xi1>
    %249 = vector.broadcast %248 : vector<1x256xi1> to vector<32x256xi1>
    %250 = vector.broadcast %cst_205 : f32 to vector<32x256xf32>
    %251 = arith.select %249, %247, %250 : vector<32x256xi1>, vector<32x256xf32>
    %c96_206 = arith.constant 96 : index
    %c256_207 = arith.constant 256 : index
    %252 = vector.load %arg7[%c96_206, %c256_207] : memref<288x512xf32, #tpu.memory_space<vmem>>, vector<32x256xf32>
    tpu.vector_store %arg7[%c96_206, %c256_207], %251 {strides = array<i32>} : memref<288x512xf32, #tpu.memory_space<vmem>>, vector<32x256xf32>,
    %c0_208 = arith.constant 0 : index
    %c128_209 = arith.constant 128 : index
    %253 = vector.load %arg6[%c0_208, %c128_209] : memref<32x1024xf32, #tpu.memory_space<vmem>>, vector<32x256xf32>
    %c128_210 = arith.constant 128 : index
    %c0_211 = arith.constant 0 : index
    %254 = vector.load %arg7[%c128_210, %c0_211] : memref<288x512xf32, #tpu.memory_space<vmem>>, vector<32x256xf32>
    tpu.vector_store %arg7[%c128_210, %c0_211], %253 {strides = array<i32>} : memref<288x512xf32, #tpu.memory_space<vmem>>, vector<32x256xf32>,
    %c0_212 = arith.constant 0 : index
    %c640_213 = arith.constant 640 : index
    %255 = vector.load %arg6[%c0_212, %c640_213] : memref<32x1024xf32, #tpu.memory_space<vmem>>, vector<32x256xf32>
    %c128_214 = arith.constant 128 : index
    %c256_215 = arith.constant 256 : index
    %256 = vector.load %arg7[%c128_214, %c256_215] : memref<288x512xf32, #tpu.memory_space<vmem>>, vector<32x256xf32>
    tpu.vector_store %arg7[%c128_214, %c256_215], %255 {strides = array<i32>} : memref<288x512xf32, #tpu.memory_space<vmem>>, vector<32x256xf32>,
    %c0_216 = arith.constant 0 : index
    %c129_217 = arith.constant 129 : index
    %257 = vector.load %arg6[%c0_216, %c129_217] : memref<32x1024xf32, #tpu.memory_space<vmem>>, vector<32x256xf32>
    %cst_218 = arith.constant 0.000000e+00 : f32
    %258 = vector.shape_cast %26 : vector<1x256xi1> to vector<1x256xi1>
    %259 = vector.broadcast %258 : vector<1x256xi1> to vector<32x256xi1>
    %260 = vector.broadcast %cst_218 : f32 to vector<32x256xf32>
    %261 = arith.select %259, %257, %260 : vector<32x256xi1>, vector<32x256xf32>
    %c160_219 = arith.constant 160 : index
    %c0_220 = arith.constant 0 : index
    %262 = vector.load %arg7[%c160_219, %c0_220] : memref<288x512xf32, #tpu.memory_space<vmem>>, vector<32x256xf32>
    tpu.vector_store %arg7[%c160_219, %c0_220], %261 {strides = array<i32>} : memref<288x512xf32, #tpu.memory_space<vmem>>, vector<32x256xf32>,
    %c0_221 = arith.constant 0 : index
    %c641_222 = arith.constant 641 : index
    %263 = vector.load %arg6[%c0_221, %c641_222] : memref<32x1024xf32, #tpu.memory_space<vmem>>, vector<32x256xf32>
    %cst_223 = arith.constant 0.000000e+00 : f32
    %264 = vector.shape_cast %26 : vector<1x256xi1> to vector<1x256xi1>
    %265 = vector.broadcast %264 : vector<1x256xi1> to vector<32x256xi1>
    %266 = vector.broadcast %cst_223 : f32 to vector<32x256xf32>
    %267 = arith.select %265, %263, %266 : vector<32x256xi1>, vector<32x256xf32>
    %c160_224 = arith.constant 160 : index
    %c256_225 = arith.constant 256 : index
    %268 = vector.load %arg7[%c160_224, %c256_225] : memref<288x512xf32, #tpu.memory_space<vmem>>, vector<32x256xf32>
    tpu.vector_store %arg7[%c160_224, %c256_225], %267 {strides = array<i32>} : memref<288x512xf32, #tpu.memory_space<vmem>>, vector<32x256xf32>,
    %c0_226 = arith.constant 0 : index
    %c143_227 = arith.constant 143 : index
    %269 = vector.load %arg6[%c0_226, %c143_227] : memref<32x1024xf32, #tpu.memory_space<vmem>>, vector<32x256xf32>
    %cst_228 = arith.constant 0.000000e+00 : f32
    %270 = vector.shape_cast %24 : vector<1x256xi1> to vector<1x256xi1>
    %271 = vector.broadcast %270 : vector<1x256xi1> to vector<32x256xi1>
    %272 = vector.broadcast %cst_228 : f32 to vector<32x256xf32>
    %273 = arith.select %271, %269, %272 : vector<32x256xi1>, vector<32x256xf32>
    %c192_229 = arith.constant 192 : index
    %c0_230 = arith.constant 0 : index
    %274 = vector.load %arg7[%c192_229, %c0_230] : memref<288x512xf32, #tpu.memory_space<vmem>>, vector<32x256xf32>
    tpu.vector_store %arg7[%c192_229, %c0_230], %273 {strides = array<i32>} : memref<288x512xf32, #tpu.memory_space<vmem>>, vector<32x256xf32>,
    %c0_231 = arith.constant 0 : index
    %c655_232 = arith.constant 655 : index
    %275 = vector.load %arg6[%c0_231, %c655_232] : memref<32x1024xf32, #tpu.memory_space<vmem>>, vector<32x256xf32>
    %cst_233 = arith.constant 0.000000e+00 : f32
    %276 = vector.shape_cast %24 : vector<1x256xi1> to vector<1x256xi1>
    %277 = vector.broadcast %276 : vector<1x256xi1> to vector<32x256xi1>
    %278 = vector.broadcast %cst_233 : f32 to vector<32x256xf32>
    %279 = arith.select %277, %275, %278 : vector<32x256xi1>, vector<32x256xf32>
    %c192_234 = arith.constant 192 : index
    %c256_235 = arith.constant 256 : index
    %280 = vector.load %arg7[%c192_234, %c256_235] : memref<288x512xf32, #tpu.memory_space<vmem>>, vector<32x256xf32>
    tpu.vector_store %arg7[%c192_234, %c256_235], %279 {strides = array<i32>} : memref<288x512xf32, #tpu.memory_space<vmem>>, vector<32x256xf32>,
    %c0_236 = arith.constant 0 : index
    %c144_237 = arith.constant 144 : index
    %281 = vector.load %arg6[%c0_236, %c144_237] : memref<32x1024xf32, #tpu.memory_space<vmem>>, vector<32x256xf32>
    %c224_238 = arith.constant 224 : index
    %c0_239 = arith.constant 0 : index
    %282 = vector.load %arg7[%c224_238, %c0_239] : memref<288x512xf32, #tpu.memory_space<vmem>>, vector<32x256xf32>
    tpu.vector_store %arg7[%c224_238, %c0_239], %281 {strides = array<i32>} : memref<288x512xf32, #tpu.memory_space<vmem>>, vector<32x256xf32>,
    %c0_240 = arith.constant 0 : index
    %c656_241 = arith.constant 656 : index
    %283 = vector.load %arg6[%c0_240, %c656_241] : memref<32x1024xf32, #tpu.memory_space<vmem>>, vector<32x256xf32>
    %c224_242 = arith.constant 224 : index
    %c256_243 = arith.constant 256 : index
    %284 = vector.load %arg7[%c224_242, %c256_243] : memref<288x512xf32, #tpu.memory_space<vmem>>, vector<32x256xf32>
    tpu.vector_store %arg7[%c224_242, %c256_243], %283 {strides = array<i32>} : memref<288x512xf32, #tpu.memory_space<vmem>>, vector<32x256xf32>,
    %c0_244 = arith.constant 0 : index
    %c145_245 = arith.constant 145 : index
    %285 = vector.load %arg6[%c0_244, %c145_245] : memref<32x1024xf32, #tpu.memory_space<vmem>>, vector<32x256xf32>
    %cst_246 = arith.constant 0.000000e+00 : f32
    %286 = vector.shape_cast %26 : vector<1x256xi1> to vector<1x256xi1>
    %287 = vector.broadcast %286 : vector<1x256xi1> to vector<32x256xi1>
    %288 = vector.broadcast %cst_246 : f32 to vector<32x256xf32>
    %289 = arith.select %287, %285, %288 : vector<32x256xi1>, vector<32x256xf32>
    %c256_247 = arith.constant 256 : index
    %c0_248 = arith.constant 0 : index
    %290 = vector.load %arg7[%c256_247, %c0_248] : memref<288x512xf32, #tpu.memory_space<vmem>>, vector<32x256xf32>
    tpu.vector_store %arg7[%c256_247, %c0_248], %289 {strides = array<i32>} : memref<288x512xf32, #tpu.memory_space<vmem>>, vector<32x256xf32>,
    %c0_249 = arith.constant 0 : index
    %c657_250 = arith.constant 657 : index
    %291 = vector.load %arg6[%c0_249, %c657_250] : memref<32x1024xf32, #tpu.memory_space<vmem>>, vector<32x256xf32>
    %cst_251 = arith.constant 0.000000e+00 : f32
    %292 = vector.shape_cast %26 : vector<1x256xi1> to vector<1x256xi1>
    %293 = vector.broadcast %292 : vector<1x256xi1> to vector<32x256xi1>
    %294 = vector.broadcast %cst_251 : f32 to vector<32x256xf32>
    %295 = arith.select %293, %291, %294 : vector<32x256xi1>, vector<32x256xf32>
    %c256_252 = arith.constant 256 : index
    %c256_253 = arith.constant 256 : index
    %296 = vector.load %arg7[%c256_252, %c256_253] : memref<288x512xf32, #tpu.memory_space<vmem>>, vector<32x256xf32>
    tpu.vector_store %arg7[%c256_252, %c256_253], %295 {strides = array<i32>} : memref<288x512xf32, #tpu.memory_space<vmem>>, vector<32x256xf32>,
    %c0_254 = arith.constant 0 : index
    %c0_255 = arith.constant 0 : index
    %297 = vector.load %arg4[%c0_254, %c0_255] : memref<8x288xf32, #tpu.memory_space<vmem>>, vector<8x288xf32>
    %c0_256 = arith.constant 0 : index
    %c0_257 = arith.constant 0 : index
    %298 = vector.load %arg7[%c0_256, %c0_257] : memref<288x512xf32, #tpu.memory_space<vmem>>, vector<288x512xf32>
    %cst_258 = arith.constant dense<0.000000e+00> : vector<8x512xf32>
    %299 = tpu.matmul %297, %298, %cst_258 {dimension_numbers = #tpu.dot_dimension_numbers<[1], [0], [0], [1], [0, 0, 1, 1], [], []>} : vector<8x288xf32>, vector<288x512xf32>, vector<8x512xf32> -> vector<8x512xf32>
    %c0_259 = arith.constant 0 : index
    %c0_260 = arith.constant 0 : index
    %300 = vector.load %arg5[%c0_259, %c0_260] : memref<8x512xf32, #tpu.memory_space<vmem>>, vector<8x512xf32>
    tpu.vector_store %arg5[%c0_259, %c0_260], %299 {strides = array<i32>} : memref<8x512xf32, #tpu.memory_space<vmem>>, vector<8x512xf32>,
    return
  }
  func.func @transform_0(%arg0: i32) -> (i32, i32) {
    %c0_i32 = arith.constant 0 : i32
    %c0_i32_0 = arith.constant 0 : i32
    return %c0_i32, %arg0 : i32, i32
  }
  func.func @transform_1(%arg0: i32) -> (i32, i32) {
    %c0_i32 = arith.constant 0 : i32
    %c0_i32_0 = arith.constant 0 : i32
    %c0_i32_1 = arith.constant 0 : i32
    return %c0_i32, %c0_i32_0 : i32, i32
  }
  func.func @transform_2(%arg0: i32) -> (i32, i32) {
    %c0_i32 = arith.constant 0 : i32
    %c0_i32_0 = arith.constant 0 : i32
    %c0_i32_1 = arith.constant 0 : i32
    return %c0_i32, %c0_i32_0 : i32, i32
  }
  func.func @transform_3(%arg0: i32) -> (i32, i32) {
    %c0_i32 = arith.constant 0 : i32
    %c0_i32_0 = arith.constant 0 : i32
    %c0_i32_1 = arith.constant 0 : i32
    return %c0_i32, %c0_i32_0 : i32, i32
  }
  func.func @transform_4(%arg0: i32) -> (i32, i32) {
    %c0_i32 = arith.constant 0 : i32
    %c0_i32_0 = arith.constant 0 : i32
    return %c0_i32, %arg0 : i32, i32
  }
}

</mosaic_0001>

<llo_original>
// kernel: vanilla_cnn_forward.1
$region0: #{vanilla_cnn_forward.1}
  #allocation0 [shape = 'u32[]', space=smem, size = 0x4, offset = 0x4, fixed_abs, tag = 'smem constant byte address 0x4 - core index']
  #allocation1 [shape = 'u32[144,128]{1,0:T(1,128)}', space=vmem, size = 0x12000, scoped, tag = 'internal scratch']
  #allocation2 [shape = 'f32[32,1024]{1,0:T(8,128)}', space=vmem, size = 0x20000, scoped, tag = 'scratch operand']
  #allocation3 [shape = 'f32[288,512]{1,0:T(8,128)}', space=vmem, size = 0x90000, scoped, tag = 'scratch operand']
  %s0 = inlined_call_operand.vmem [shape: f32[8,512], index: 0, kind: input, shape index: {}]
  %s1 = inlined_call_operand.vmem [shape: f32[32,72], index: 1, kind: input, shape index: {}]
  %s2 = inlined_call_operand.vmem [shape: f32[32,288], index: 2, kind: input, shape index: {}]
  %s3 = inlined_call_operand.vmem [shape: f32[8,288], index: 3, kind: input, shape index: {}]
  %s4 = inlined_call_operand.vmem [shape: f32[8,512], index: 4, kind: output, shape index: {}]
  %s5 = sld [smem:[#allocation0]]
  $region26: #{vanilla_cnn_forward.1} parent=0
    _
  %s7 = ssub.s32 1, %s5
  %s8 = scalar_select 0, %s7, %s5
  // Predicated region
  $region2: #{vanilla_cnn_forward.1} parent=0 // pred_check
    _
  $region3: #{vanilla_cnn_forward.1} parent=0 // pred_check_branch
    %10 = sbr.rel (0) target = $region5
  $region4: #{vanilla_cnn_forward.1} parent=0 // pred_region
    _
  $region5: #{vanilla_cnn_forward.1} parent=0 // pred_fallthru
    _
  // Predicated region
  $region6: #{vanilla_cnn_forward.1} parent=0 // pred_check
    _
  $region7: #{vanilla_cnn_forward.1} parent=0 // pred_check_branch
    %12 = sbr.rel (0) target = $region9
  $region8: #{vanilla_cnn_forward.1} parent=0 // pred_region
    _
  $region9: #{vanilla_cnn_forward.1} parent=0 // pred_fallthru
    _
  // Predicated region
  $region10: #{vanilla_cnn_forward.1} parent=0 // pred_check
    _
  $region11: #{vanilla_cnn_forward.1} parent=0 // pred_check_branch
    %14 = sbr.rel (0) target = $region13
  $region12: #{vanilla_cnn_forward.1} parent=0 // pred_region
    _
  $region13: #{vanilla_cnn_forward.1} parent=0 // pred_fallthru
    _
  // Predicated region
  $region14: #{vanilla_cnn_forward.1} parent=0 // pred_check
    _
  $region15: #{vanilla_cnn_forward.1} parent=0 // pred_check_branch
    %16 = sbr.rel (0) target = $region17
  $region16: #{vanilla_cnn_forward.1} parent=0 // pred_region
    _
  $region17: #{vanilla_cnn_forward.1} parent=0 // pred_fallthru
    _
  %17 = vst [vmem:[#allocation2] sm:$0xff] 0.0
  %18 = vst [vmem:[#allocation2 + $0x8] sm:$0xff] 0.0
  %19 = vst [vmem:[#allocation2 + $0x10] sm:$0xff] 0.0
  %20 = vst [vmem:[#allocation2 + $0x18] sm:$0xff] 0.0
  %21 = vst [vmem:[#allocation2 + $0x20] sm:$0xff] 0.0
  %22 = vst [vmem:[#allocation2 + $0x28] sm:$0xff] 0.0
  %23 = vst [vmem:[#allocation2 + $0x30] sm:$0xff] 0.0
  %24 = vst [vmem:[#allocation2 + $0x38] sm:$0xff] 0.0
  %25 = vst [vmem:[#allocation2 + $0x40] sm:$0xff] 0.0
  %26 = vst [vmem:[#allocation2 + $0x48] sm:$0xff] 0.0
  %27 = vst [vmem:[#allocation2 + $0x50] sm:$0xff] 0.0
  %28 = vst [vmem:[#allocation2 + $0x58] sm:$0xff] 0.0
  %29 = vst [vmem:[#allocation2 + $0x60] sm:$0xff] 0.0
  %30 = vst [vmem:[#allocation2 + $0x68] sm:$0xff] 0.0
  %31 = vst [vmem:[#allocation2 + $0x70] sm:$0xff] 0.0
  %32 = vst [vmem:[#allocation2 + $0x78] sm:$0xff] 0.0
  %33 = vst [vmem:[#allocation2 + $0x80] sm:$0xff] 0.0
  %34 = vst [vmem:[#allocation2 + $0x88] sm:$0xff] 0.0
  %35 = vst [vmem:[#allocation2 + $0x90] sm:$0xff] 0.0
  %36 = vst [vmem:[#allocation2 + $0x98] sm:$0xff] 0.0
  %37 = vst [vmem:[#allocation2 + $0xa0] sm:$0xff] 0.0
  %38 = vst [vmem:[#allocation2 + $0xa8] sm:$0xff] 0.0
  %39 = vst [vmem:[#allocation2 + $0xb0] sm:$0xff] 0.0
  %40 = vst [vmem:[#allocation2 + $0xb8] sm:$0xff] 0.0
  %41 = vst [vmem:[#allocation2 + $0xc0] sm:$0xff] 0.0
  %42 = vst [vmem:[#allocation2 + $0xc8] sm:$0xff] 0.0
  %43 = vst [vmem:[#allocation2 + $0xd0] sm:$0xff] 0.0
  %44 = vst [vmem:[#allocation2 + $0xd8] sm:$0xff] 0.0
  %45 = vst [vmem:[#allocation2 + $0xe0] sm:$0xff] 0.0
  %46 = vst [vmem:[#allocation2 + $0xe8] sm:$0xff] 0.0
  %47 = vst [vmem:[#allocation2 + $0xf0] sm:$0xff] 0.0
  %48 = vst [vmem:[#allocation2 + $0xf8] sm:$0xff] 0.0
  %v49 = vld [vmem:[%s0] sm:$0xff]
  %v50 = vld [vmem:[%s0 + $0x8] sm:$0xff]
  %51 = vst [vmem:[#allocation2 + $0x8] sm:$0xff] %v49
  %52 = vst [vmem:[#allocation2 + $0x10] sm:$0xff] %v50
  %v53 = vld [vmem:[%s0 + $0x10] sm:$0xff]
  %v54 = vld [vmem:[%s0 + $0x18] sm:$0xff]
  %55 = vst [vmem:[#allocation2 + $0x28] sm:$0xff] %v53
  %56 = vst [vmem:[#allocation2 + $0x30] sm:$0xff] %v54
  %v57 = vlaneseq
  %v58 = vand.u32 %v57, 127
  %v59 = vadd.s32 %v58, 128
  %vm60 = vcmp.lt.s32.totalorder %v58, 0
  %v61 = vsub.s32 0, %v58
  %v62 = vsel %vm60, %v61, %v58
  %v63 = vshrl.u32 %v62, 4
  %v64 = vand.u32 %v62, 15
  %v65 = vsub.s32 0, %v64
  %v66 = vsel %vm60, %v65, %v64
  %vm67 = vcmp.lt.s32.totalorder %v59, 0
  %v68 = vsub.s32 0, %v59
  %v69 = vsel %vm67, %v68, %v59
  %v70 = vshrl.u32 %v69, 4
  %v71 = vand.u32 %v69, 15
  %v72 = vsub.s32 0, %v71
  %v73 = vsel %vm67, %v72, %v71
  %vm74 = vcmp.ne.s32.totalorder %v66, 0
  %vm75 = vcmp.ne.s32.totalorder %v73, 0
  %vm76 = vcmp.lt.s32.totalorder %v66, 0
  %vm77 = vcmp.lt.s32.totalorder %v73, 0
  %vm78 = vmand %vm76, %vm74
  %vm79 = vmand %vm77, %vm75
  %v80 = vadd.s32 %v66, 16
  %v81 = vadd.s32 %v73, 16
  %v82 = vsel %vm78, %v80, %v66
  %v83 = vsel %vm79, %v81, %v73
  %vm84 = vcmp.gt.s32.totalorder %v82, 0
  %vm85 = vcmp.gt.s32.totalorder %v83, 0
  %vm86 = vcmp.lt.s32.totalorder %v82, 15
  %vm87 = vcmp.lt.s32.totalorder %v83, 15
  %v88 = vld [vmem:[#allocation2] sm:$0xff]
  %v89 = vld [vmem:[#allocation2 + $0x8] sm:$0xff]
  %v90 = vld [vmem:[#allocation2 + $0x10] sm:$0xff]
  %v91 = vsel %vm84, 1, 0
  %v92 = vsel %vm85, 1, 0
  %vm93 = vcmp.eq.s32.totalorder %v91, 1
  %vm94 = vcmp.eq.s32.totalorder %v92, 1
  %98 = vrot.lane.b32.xlu0 %v88, 17
  %v99 = vpop.permute.xlu0 %98
  %100 = vrot.lane.b32.xlu0 %v89, 17
  %v101 = vpop.permute.xlu0 %100
  %102 = vrot.lane.b32.xlu0 %v90, 17
  %v103 = vpop.permute.xlu0 %102
  %vm104 = vcmask 138240
  %v105 = vsel %vm104, %v99, %v101
  %v106 = vsel %vm104, %v101, %v103
  %v109 = vsel %vm93, %v105, 0.0
  %v110 = vsel %vm94, %v106, 0.0
  %111 = vst [vmem:[#allocation3] sm:$0xff] %v109
  %112 = vst [vmem:[#allocation3 + $0x8] sm:$0xff] %v110
  %v113 = vld [vmem:[#allocation2 + $0x20] sm:$0xff]
  %v114 = vld [vmem:[#allocation2 + $0x28] sm:$0xff]
  %v115 = vld [vmem:[#allocation2 + $0x30] sm:$0xff]
  %119 = vrot.lane.b32.xlu0 %v113, 17
  %v120 = vpop.permute.xlu0 %119
  %121 = vrot.lane.b32.xlu0 %v114, 17
  %v122 = vpop.permute.xlu0 %121
  %123 = vrot.lane.b32.xlu0 %v115, 17
  %v124 = vpop.permute.xlu0 %123
  %v125 = vsel %vm104, %v120, %v122
  %v126 = vsel %vm104, %v122, %v124
  %v129 = vsel %vm93, %v125, 0.0
  %v130 = vsel %vm94, %v126, 0.0
  %131 = vst [vmem:[#allocation3 + $0x10] sm:$0xff] %v129
  %132 = vst [vmem:[#allocation3 + $0x18] sm:$0xff] %v130
  %v133 = vld [vmem:[#allocation2] sm:$0xff]
  %v134 = vld [vmem:[#allocation2 + $0x8] sm:$0xff]
  %v135 = vld [vmem:[#allocation2 + $0x10] sm:$0xff]
  %139 = vrot.lane.b32.xlu0 %v133, 16
  %v140 = vpop.permute.xlu0 %139
  %141 = vrot.lane.b32.xlu0 %v134, 16
  %v142 = vpop.permute.xlu0 %141
  %143 = vrot.lane.b32.xlu0 %v135, 16
  %v144 = vpop.permute.xlu0 %143
  %vm145 = vcmask 130048
  %v146 = vsel %vm145, %v140, %v142
  %v147 = vsel %vm145, %v142, %v144
  %150 = vst [vmem:[#allocation3 + $0x20] sm:$0xff] %v146
  %151 = vst [vmem:[#allocation3 + $0x28] sm:$0xff] %v147
  %v152 = vld [vmem:[#allocation2 + $0x20] sm:$0xff]
  %v153 = vld [vmem:[#allocation2 + $0x28] sm:$0xff]
  %v154 = vld [vmem:[#allocation2 + $0x30] sm:$0xff]
  %158 = vrot.lane.b32.xlu0 %v152, 16
  %v159 = vpop.permute.xlu0 %158
  %160 = vrot.lane.b32.xlu0 %v153, 16
  %v161 = vpop.permute.xlu0 %160
  %162 = vrot.lane.b32.xlu0 %v154, 16
  %v163 = vpop.permute.xlu0 %162
  %v164 = vsel %vm145, %v159, %v161
  %v165 = vsel %vm145, %v161, %v163
  %168 = vst [vmem:[#allocation3 + $0x30] sm:$0xff] %v164
  %169 = vst [vmem:[#allocation3 + $0x38] sm:$0xff] %v165
  %v170 = vld [vmem:[#allocation2] sm:$0xff]
  %v171 = vld [vmem:[#allocation2 + $0x8] sm:$0xff]
  %v172 = vld [vmem:[#allocation2 + $0x10] sm:$0xff]
  %v173 = vsel %vm86, 1, 0
  %v174 = vsel %vm87, 1, 0
  %vm175 = vcmp.eq.s32.totalorder %v173, 1
  %vm176 = vcmp.eq.s32.totalorder %v174, 1
  %180 = vrot.lane.b32.xlu0 %v170, 15
  %v181 = vpop.permute.xlu0 %180
  %182 = vrot.lane.b32.xlu0 %v171, 15
  %v183 = vpop.permute.xlu0 %182
  %184 = vrot.lane.b32.xlu0 %v172, 15
  %v185 = vpop.permute.xlu0 %184
  %vm186 = vcmask 121856
  %v187 = vsel %vm186, %v181, %v183
  %v188 = vsel %vm186, %v183, %v185
  %v191 = vsel %vm175, %v187, 0.0
  %v192 = vsel %vm176, %v188, 0.0
  %193 = vst [vmem:[#allocation3 + $0x40] sm:$0xff] %v191
  %194 = vst [vmem:[#allocation3 + $0x48] sm:$0xff] %v192
  %v195 = vld [vmem:[#allocation2 + $0x20] sm:$0xff]
  %v196 = vld [vmem:[#allocation2 + $0x28] sm:$0xff]
  %v197 = vld [vmem:[#allocation2 + $0x30] sm:$0xff]
  %201 = vrot.lane.b32.xlu0 %v195, 15
  %v202 = vpop.permute.xlu0 %201
  %203 = vrot.lane.b32.xlu0 %v196, 15
  %v204 = vpop.permute.xlu0 %203
  %205 = vrot.lane.b32.xlu0 %v197, 15
  %v206 = vpop.permute.xlu0 %205
  %v207 = vsel %vm186, %v202, %v204
  %v208 = vsel %vm186, %v204, %v206
  %v211 = vsel %vm175, %v207, 0.0
  %v212 = vsel %vm176, %v208, 0.0
  %213 = vst [vmem:[#allocation3 + $0x50] sm:$0xff] %v211
  %214 = vst [vmem:[#allocation3 + $0x58] sm:$0xff] %v212
  %v215 = vld [vmem:[#allocation2] sm:$0xff]
  %v216 = vld [vmem:[#allocation2 + $0x8] sm:$0xff]
  %v217 = vld [vmem:[#allocation2 + $0x10] sm:$0xff]
  %221 = vrot.lane.b32.xlu0 %v215, 1
  %v222 = vpop.permute.xlu0 %221
  %223 = vrot.lane.b32.xlu0 %v216, 1
  %v224 = vpop.permute.xlu0 %223
  %225 = vrot.lane.b32.xlu0 %v217, 1
  %v226 = vpop.permute.xlu0 %225
  %vm227 = vcmask 7168
  %v228 = vsel %vm227, %v222, %v224
  %v229 = vsel %vm227, %v224, %v226
  %v232 = vsel %vm93, %v228, 0.0
  %v233 = vsel %vm94, %v229, 0.0
  %234 = vst [vmem:[#allocation3 + $0x60] sm:$0xff] %v232
  %235 = vst [vmem:[#allocation3 + $0x68] sm:$0xff] %v233
  %v236 = vld [vmem:[#allocation2 + $0x20] sm:$0xff]
  %v237 = vld [vmem:[#allocation2 + $0x28] sm:$0xff]
  %v238 = vld [vmem:[#allocation2 + $0x30] sm:$0xff]
  %242 = vrot.lane.b32.xlu0 %v236, 1
  %v243 = vpop.permute.xlu0 %242
  %244 = vrot.lane.b32.xlu0 %v237, 1
  %v245 = vpop.permute.xlu0 %244
  %246 = vrot.lane.b32.xlu0 %v238, 1
  %v247 = vpop.permute.xlu0 %246
  %v248 = vsel %vm227, %v243, %v245
  %v249 = vsel %vm227, %v245, %v247
  %v252 = vsel %vm93, %v248, 0.0
  %v253 = vsel %vm94, %v249, 0.0
  %254 = vst [vmem:[#allocation3 + $0x70] sm:$0xff] %v252
  %255 = vst [vmem:[#allocation3 + $0x78] sm:$0xff] %v253
  %v256 = vld [vmem:[#allocation2 + $0x8] sm:$0xff]
  %v257 = vld [vmem:[#allocation2 + $0x10] sm:$0xff]
  %258 = vst [vmem:[#allocation3 + $0x80] sm:$0xff] %v256
  %259 = vst [vmem:[#allocation3 + $0x88] sm:$0xff] %v257
  %v260 = vld [vmem:[#allocation2 + $0x28] sm:$0xff]
  %v261 = vld [vmem:[#allocation2 + $0x30] sm:$0xff]
  %262 = vst [vmem:[#allocation3 + $0x90] sm:$0xff] %v260
  %263 = vst [vmem:[#allocation3 + $0x98] sm:$0xff] %v261
  %v264 = vld [vmem:[#allocation2 + $0x8] sm:$0xff]
  %v265 = vld [vmem:[#allocation2 + $0x10] sm:$0xff]
  %v266 = vld [vmem:[#allocation2 + $0x18] sm:$0xff]
  %270 = vrot.lane.b32.xlu0 %v264, 127
  %v271 = vpop.permute.xlu0 %270
  %272 = vrot.lane.b32.xlu0 %v265, 127
  %v273 = vpop.permute.xlu0 %272
  %274 = vrot.lane.b32.xlu0 %v266, 127
  %v275 = vpop.permute.xlu0 %274
  %vm276 = vcmask 1039360
  %v277 = vsel %vm276, %v271, %v273
  %v278 = vsel %vm276, %v273, %v275
  %v281 = vsel %vm175, %v277, 0.0
  %v282 = vsel %vm176, %v278, 0.0
  %283 = vst [vmem:[#allocation3 + $0xa0] sm:$0xff] %v281
  %284 = vst [vmem:[#allocation3 + $0xa8] sm:$0xff] %v282
  %v285 = vld [vmem:[#allocation2 + $0x28] sm:$0xff]
  %v286 = vld [vmem:[#allocation2 + $0x30] sm:$0xff]
  %v287 = vld [vmem:[#allocation2 + $0x38] sm:$0xff]
  %291 = vrot.lane.b32.xlu0 %v285, 127
  %v292 = vpop.permute.xlu0 %291
  %293 = vrot.lane.b32.xlu0 %v286, 127
  %v294 = vpop.permute.xlu0 %293
  %295 = vrot.lane.b32.xlu0 %v287, 127
  %v296 = vpop.permute.xlu0 %295
  %v297 = vsel %vm276, %v292, %v294
  %v298 = vsel %vm276, %v294, %v296
  %v301 = vsel %vm175, %v297, 0.0
  %v302 = vsel %vm176, %v298, 0.0
  %303 = vst [vmem:[#allocation3 + $0xb0] sm:$0xff] %v301
  %304 = vst [vmem:[#allocation3 + $0xb8] sm:$0xff] %v302
  %v305 = vld [vmem:[#allocation2 + $0x8] sm:$0xff]
  %v306 = vld [vmem:[#allocation2 + $0x10] sm:$0xff]
  %v307 = vld [vmem:[#allocation2 + $0x18] sm:$0xff]
  %311 = vrot.lane.b32.xlu0 %v305, 113
  %v312 = vpop.permute.xlu0 %311
  %313 = vrot.lane.b32.xlu0 %v306, 113
  %v314 = vpop.permute.xlu0 %313
  %315 = vrot.lane.b32.xlu0 %v307, 113
  %v316 = vpop.permute.xlu0 %315
  %vm317 = vcmask 924672
  %v318 = vsel %vm317, %v312, %v314
  %v319 = vsel %vm317, %v314, %v316
  %v322 = vsel %vm93, %v318, 0.0
  %v323 = vsel %vm94, %v319, 0.0
  %324 = vst [vmem:[#allocation3 + $0xc0] sm:$0xff] %v322
  %325 = vst [vmem:[#allocation3 + $0xc8] sm:$0xff] %v323
  %v326 = vld [vmem:[#allocation2 + $0x28] sm:$0xff]
  %v327 = vld [vmem:[#allocation2 + $0x30] sm:$0xff]
  %v328 = vld [vmem:[#allocation2 + $0x38] sm:$0xff]
  %332 = vrot.lane.b32.xlu0 %v326, 113
  %v333 = vpop.permute.xlu0 %332
  %334 = vrot.lane.b32.xlu0 %v327, 113
  %v335 = vpop.permute.xlu0 %334
  %336 = vrot.lane.b32.xlu0 %v328, 113
  %v337 = vpop.permute.xlu0 %336
  %v338 = vsel %vm317, %v333, %v335
  %v339 = vsel %vm317, %v335, %v337
  %v342 = vsel %vm93, %v338, 0.0
  %v343 = vsel %vm94, %v339, 0.0
  %344 = vst [vmem:[#allocation3 + $0xd0] sm:$0xff] %v342
  %345 = vst [vmem:[#allocation3 + $0xd8] sm:$0xff] %v343
  %v346 = vld [vmem:[#allocation2 + $0x8] sm:$0xff]
  %v347 = vld [vmem:[#allocation2 + $0x10] sm:$0xff]
  %v348 = vld [vmem:[#allocation2 + $0x18] sm:$0xff]
  %352 = vrot.lane.b32.xlu0 %v346, 112
  %v353 = vpop.permute.xlu0 %352
  %354 = vrot.lane.b32.xlu0 %v347, 112
  %v355 = vpop.permute.xlu0 %354
  %356 = vrot.lane.b32.xlu0 %v348, 112
  %v357 = vpop.permute.xlu0 %356
  %vm358 = vcmask 916480
  %v359 = vsel %vm358, %v353, %v355
  %v360 = vsel %vm358, %v355, %v357
  %363 = vst [vmem:[#allocation3 + $0xe0] sm:$0xff] %v359
  %364 = vst [vmem:[#allocation3 + $0xe8] sm:$0xff] %v360
  %v365 = vld [vmem:[#allocation2 + $0x28] sm:$0xff]
  %v366 = vld [vmem:[#allocation2 + $0x30] sm:$0xff]
  %v367 = vld [vmem:[#allocation2 + $0x38] sm:$0xff]
  %371 = vrot.lane.b32.xlu0 %v365, 112
  %v372 = vpop.permute.xlu0 %371
  %373 = vrot.lane.b32.xlu0 %v366, 112
  %v374 = vpop.permute.xlu0 %373
  %375 = vrot.lane.b32.xlu0 %v367, 112
  %v376 = vpop.permute.xlu0 %375
  %v377 = vsel %vm358, %v372, %v374
  %v378 = vsel %vm358, %v374, %v376
  %381 = vst [vmem:[#allocation3 + $0xf0] sm:$0xff] %v377
  %382 = vst [vmem:[#allocation3 + $0xf8] sm:$0xff] %v378
  %v383 = vld [vmem:[#allocation2 + $0x8] sm:$0xff]
  %v384 = vld [vmem:[#allocation2 + $0x10] sm:$0xff]
  %v385 = vld [vmem:[#allocation2 + $0x18] sm:$0xff]
  %389 = vrot.lane.b32.xlu0 %v383, 111
  %v390 = vpop.permute.xlu0 %389
  %391 = vrot.lane.b32.xlu0 %v384, 111
  %v392 = vpop.permute.xlu0 %391
  %393 = vrot.lane.b32.xlu0 %v385, 111
  %v394 = vpop.permute.xlu0 %393
  %vm395 = vcmask 908288
  %v396 = vsel %vm395, %v390, %v392
  %v397 = vsel %vm395, %v392, %v394
  %v400 = vsel %vm175, %v396, 0.0
  %v401 = vsel %vm176, %v397, 0.0
  %402 = vst [vmem:[#allocation3 + $0x100] sm:$0xff] %v400
  %403 = vst [vmem:[#allocation3 + $0x108] sm:$0xff] %v401
  %v404 = vld [vmem:[#allocation2 + $0x28] sm:$0xff]
  %v405 = vld [vmem:[#allocation2 + $0x30] sm:$0xff]
  %v406 = vld [vmem:[#allocation2 + $0x38] sm:$0xff]
  %410 = vrot.lane.b32.xlu0 %v404, 111
  %v411 = vpop.permute.xlu0 %410
  %412 = vrot.lane.b32.xlu0 %v405, 111
  %v413 = vpop.permute.xlu0 %412
  %414 = vrot.lane.b32.xlu0 %v406, 111
  %v415 = vpop.permute.xlu0 %414
  %v416 = vsel %vm395, %v411, %v413
  %v417 = vsel %vm395, %v413, %v415
  %v420 = vsel %vm175, %v416, 0.0
  %v421 = vsel %vm176, %v417, 0.0
  %422 = vst [vmem:[#allocation3 + $0x110] sm:$0xff] %v420
  %423 = vst [vmem:[#allocation3 + $0x118] sm:$0xff] %v421
  %v424 = vld [vmem:[%s1] sm:$0xff]
  %v425 = vld [vmem:[%s1 + $0x8] sm:$0xff]
  %v426 = vld [vmem:[%s1 + $0x10] sm:$0xff]
  %v427 = vld [vmem:[%s1 + $0x18] sm:$0xff]
  %v428 = vld [vmem:[#allocation3] sm:$0xff]
  %v429 = vld [vmem:[#allocation3 + $0x8] sm:$0xff]
  %v430 = vld [vmem:[#allocation3 + $0x10] sm:$0xff]
  %v431 = vld [vmem:[#allocation3 + $0x18] sm:$0xff]
  %v432 = vld [vmem:[#allocation3 + $0x20] sm:$0xff]
  %v433 = vld [vmem:[#allocation3 + $0x28] sm:$0xff]
  %v434 = vld [vmem:[#allocation3 + $0x30] sm:$0xff]
  %v435 = vld [vmem:[#allocation3 + $0x38] sm:$0xff]
  %v436 = vld [vmem:[#allocation3 + $0x40] sm:$0xff]
  %v437 = vld [vmem:[#allocation3 + $0x48] sm:$0xff]
  %v438 = vld [vmem:[#allocation3 + $0x50] sm:$0xff]
  %v439 = vld [vmem:[#allocation3 + $0x58] sm:$0xff]
  %v440 = vld [vmem:[#allocation3 + $0x60] sm:$0xff]
  %v441 = vld [vmem:[#allocation3 + $0x68] sm:$0xff]
  %v442 = vld [vmem:[#allocation3 + $0x70] sm:$0xff]
  %v443 = vld [vmem:[#allocation3 + $0x78] sm:$0xff]
  %v444 = vld [vmem:[#allocation3 + $0x80] sm:$0xff]
  %v445 = vld [vmem:[#allocation3 + $0x88] sm:$0xff]
  %v446 = vld [vmem:[#allocation3 + $0x90] sm:$0xff]
  %v447 = vld [vmem:[#allocation3 + $0x98] sm:$0xff]
  %v448 = vld [vmem:[#allocation3 + $0xa0] sm:$0xff]
  %v449 = vld [vmem:[#allocation3 + $0xa8] sm:$0xff]
  %v450 = vld [vmem:[#allocation3 + $0xb0] sm:$0xff]
  %v451 = vld [vmem:[#allocation3 + $0xb8] sm:$0xff]
  %v452 = vld [vmem:[#allocation3 + $0xc0] sm:$0xff]
  %v453 = vld [vmem:[#allocation3 + $0xc8] sm:$0xff]
  %v454 = vld [vmem:[#allocation3 + $0xd0] sm:$0xff]
  %v455 = vld [vmem:[#allocation3 + $0xd8] sm:$0xff]
  %v456 = vld [vmem:[#allocation3 + $0xe0] sm:$0xff]
  %v457 = vld [vmem:[#allocation3 + $0xe8] sm:$0xff]
  %v458 = vld [vmem:[#allocation3 + $0xf0] sm:$0xff]
  %v459 = vld [vmem:[#allocation3 + $0xf8] sm:$0xff]
  %v460 = vld [vmem:[#allocation3 + $0x100] sm:$0xff]
  %v461 = vld [vmem:[#allocation3 + $0x108] sm:$0xff]
  %v462 = vld [vmem:[#allocation3 + $0x110] sm:$0xff]
  %v463 = vld [vmem:[#allocation3 + $0x118] sm:$0xff]
  %vm464 = vcmask 588800
  %v466 = vsel %vm464, %v424, 0
  %v469 = vsel %vm464, %v425, 0
  %v472 = vsel %vm464, %v426, 0
  %v475 = vsel %vm464, %v427, 0
  %477 = vmatprep.subr.mxu0 %v429
  %478 = vmatpush1.msra.mxu0 %v428
  %479 = vmatprep.subr.mxu0 %v433
  %480 = vmatpush1.msra.mxu0 %v432
  %481 = vmatprep.subr.mxu0 %v437
  %482 = vmatpush1.msra.mxu0 %v436
  %483 = vmatprep.subr.mxu0 %v441
  %484 = vmatpush1.msra.mxu0 %v440
  %485 = vmatprep.subr.mxu0 %v445
  %486 = vmatpush1.msra.mxu0 %v444
  %487 = vmatprep.subr.mxu0 %v449
  %488 = vmatpush1.msra.mxu0 %v448
  %489 = vmatprep.subr.mxu0 %v453
  %490 = vmatpush1.msra.mxu0 %v452
  %491 = vmatprep.subr.mxu0 %v457
  %492 = vmatpush1.msra.mxu0 %v456
  %493 = vmatprep.subr.mxu0 %v461
  %494 = vmatpush1.msra.mxu0 %v460
  %495 = vmatprep.subr.mxu0 0.0
  %496 = vmatpush1.msra.mxu0 0.0
  %497 = vmatprep.subr.mxu0 0.0
  %498 = vmatpush1.msra.mxu0 0.0
  %499 = vmatprep.subr.mxu0 0.0
  %500 = vmatpush1.msra.mxu0 0.0
  %501 = vmatprep.subr.mxu0 0.0
  %502 = vmatpush1.msra.mxu0 0.0
  %503 = vmatprep.subr.mxu0 0.0
  %504 = vmatpush1.msra.mxu0 0.0
  %505 = vmatprep.subr.mxu0 0.0
  %506 = vmatpush1.msra.mxu0 0.0
  %507 = vmatprep.subr.mxu0 0.0
  %508 = vmatpush1.msra.mxu0 0.0
  %509 = vmatprep.subr.mxu0 0.0
  %510 = vmatpush1.msra.mxu0 0.0
  %511 = vmatprep.subr.mxu0 0.0
  %512 = vmatpush1.msra.mxu0 0.0
  %513 = vmatprep.subr.mxu0 0.0
  %514 = vmatpush1.msra.mxu0 0.0
  %515 = vmatprep.subr.mxu0 0.0
  %516 = vmatpush1.msra.mxu0 0.0
  %517 = vmatprep.subr.mxu0 0.0
  %518 = vmatpush1.msra.mxu0 0.0
  %519 = vmatprep.subr.mxu0 0.0
  %520 = vmatpush1.msra.mxu0 0.0
  %521 = vmatprep.subr.mxu0 0.0
  %522 = vmatpush1.msra.mxu0 0.0
  %523 = vmatprep.subr.mxu0 0.0
  %524 = vmatpush1.msra.mxu0 0.0
  %525 = vmatprep.subr.mxu0 0.0
  %526 = vmatpush1.msra.mxu0 0.0
  %527 = vmatprep.subr.mxu0 0.0
  %528 = vmatpush1.msra.mxu0 0.0
  %529 = vmatprep.subr.mxu0 0.0
  %530 = vmatpush1.msra.mxu0 0.0
  %531 = vmatprep.subr.mxu0 0.0
  %532 = vmatpush1.msra.mxu0 0.0
  %533 = vmatprep.subr.mxu0 0.0
  %534 = vmatpush1.msra.mxu0 0.0
  %535 = vmatprep.subr.mxu0 0.0
  %536 = vmatpush1.msra.mxu0 0.0
  %537 = vmatprep.subr.mxu0 0.0
  %538 = vmatpush1.msra.mxu0 0.0
  %539 = vmatprep.subr.mxu0 0.0
  %540 = vmatpush1.msra.mxu0 0.0
  %541 = vmatprep.mubr.f32.mxu0 0.0
  %542 = vmatmul.mubr.f32.gmra.mrb[0].mxu0 %v466
  %v543 = vpop.f32.mrb[0].mxu0
  %v544 = vadd.f32 0.0, %v543
  %v545 = vpop.f32.mrb[0].mxu0
  %v546 = vadd.f32 0.0, %v545
  %547 = vmatprep.mubr.f32.mxu0 0.0
  %548 = vmatmul.mubr.f32.gmra.mrb[0].mxu0 %v469
  %v549 = vpop.f32.mrb[0].mxu0
  %v550 = vadd.f32 0.0, %v549
  %v551 = vpop.f32.mrb[0].mxu0
  %v552 = vadd.f32 0.0, %v551
  %553 = vmatprep.mubr.f32.mxu0 0.0
  %554 = vmatmul.mubr.f32.gmra.mrb[0].mxu0 %v472
  %v555 = vpop.f32.mrb[0].mxu0
  %v556 = vadd.f32 0.0, %v555
  %v557 = vpop.f32.mrb[0].mxu0
  %v558 = vadd.f32 0.0, %v557
  %559 = vmatprep.mubr.f32.mxu0 0.0
  %560 = vmatmul.mubr.f32.gmra.mrb[0].mxu0 %v475
  %v561 = vpop.f32.mrb[0].mxu0
  %v562 = vadd.f32 0.0, %v561
  %v563 = vpop.f32.mrb[0].mxu0
  %v564 = vadd.f32 0.0, %v563
  %565 = vdwg.mxu0
  %566 = vmatprep.subr.mxu0 %v431
  %567 = vmatpush1.msra.mxu0 %v430
  %568 = vmatprep.subr.mxu0 %v435
  %569 = vmatpush1.msra.mxu0 %v434
  %570 = vmatprep.subr.mxu0 %v439
  %571 = vmatpush1.msra.mxu0 %v438
  %572 = vmatprep.subr.mxu0 %v443
  %573 = vmatpush1.msra.mxu0 %v442
  %574 = vmatprep.subr.mxu0 %v447
  %575 = vmatpush1.msra.mxu0 %v446
  %576 = vmatprep.subr.mxu0 %v451
  %577 = vmatpush1.msra.mxu0 %v450
  %578 = vmatprep.subr.mxu0 %v455
  %579 = vmatpush1.msra.mxu0 %v454
  %580 = vmatprep.subr.mxu0 %v459
  %581 = vmatpush1.msra.mxu0 %v458
  %582 = vmatprep.subr.mxu0 %v463
  %583 = vmatpush1.msra.mxu0 %v462
  %584 = vmatprep.subr.mxu0 0.0
  %585 = vmatpush1.msra.mxu0 0.0
  %586 = vmatprep.subr.mxu0 0.0
  %587 = vmatpush1.msra.mxu0 0.0
  %588 = vmatprep.subr.mxu0 0.0
  %589 = vmatpush1.msra.mxu0 0.0
  %590 = vmatprep.subr.mxu0 0.0
  %591 = vmatpush1.msra.mxu0 0.0
  %592 = vmatprep.subr.mxu0 0.0
  %593 = vmatpush1.msra.mxu0 0.0
  %594 = vmatprep.subr.mxu0 0.0
  %595 = vmatpush1.msra.mxu0 0.0
  %596 = vmatprep.subr.mxu0 0.0
  %597 = vmatpush1.msra.mxu0 0.0
  %598 = vmatprep.subr.mxu0 0.0
  %599 = vmatpush1.msra.mxu0 0.0
  %600 = vmatprep.subr.mxu0 0.0
  %601 = vmatpush1.msra.mxu0 0.0
  %602 = vmatprep.subr.mxu0 0.0
  %603 = vmatpush1.msra.mxu0 0.0
  %604 = vmatprep.subr.mxu0 0.0
  %605 = vmatpush1.msra.mxu0 0.0
  %606 = vmatprep.subr.mxu0 0.0
  %607 = vmatpush1.msra.mxu0 0.0
  %608 = vmatprep.subr.mxu0 0.0
  %609 = vmatpush1.msra.mxu0 0.0
  %610 = vmatprep.subr.mxu0 0.0
  %611 = vmatpush1.msra.mxu0 0.0
  %612 = vmatprep.subr.mxu0 0.0
  %613 = vmatpush1.msra.mxu0 0.0
  %614 = vmatprep.subr.mxu0 0.0
  %615 = vmatpush1.msra.mxu0 0.0
  %616 = vmatprep.subr.mxu0 0.0
  %617 = vmatpush1.msra.mxu0 0.0
  %618 = vmatprep.subr.mxu0 0.0
  %619 = vmatpush1.msra.mxu0 0.0
  %620 = vmatprep.subr.mxu0 0.0
  %621 = vmatpush1.msra.mxu0 0.0
  %622 = vmatprep.subr.mxu0 0.0
  %623 = vmatpush1.msra.mxu0 0.0
  %624 = vmatprep.subr.mxu0 0.0
  %625 = vmatpush1.msra.mxu0 0.0
  %626 = vmatprep.subr.mxu0 0.0
  %627 = vmatpush1.msra.mxu0 0.0
  %628 = vmatprep.subr.mxu0 0.0
  %629 = vmatpush1.msra.mxu0 0.0
  %630 = vmatprep.mubr.f32.mxu0 0.0
  %631 = vmatmul.mubr.f32.gmra.mrb[0].mxu0 %v466
  %v632 = vpop.f32.mrb[0].mxu0
  %v633 = vadd.f32 0.0, %v632
  %v634 = vpop.f32.mrb[0].mxu0
  %v635 = vadd.f32 0.0, %v634
  %636 = vmatprep.mubr.f32.mxu0 0.0
  %637 = vmatmul.mubr.f32.gmra.mrb[0].mxu0 %v469
  %v638 = vpop.f32.mrb[0].mxu0
  %v639 = vadd.f32 0.0, %v638
  %v640 = vpop.f32.mrb[0].mxu0
  %v641 = vadd.f32 0.0, %v640
  %642 = vmatprep.mubr.f32.mxu0 0.0
  %643 = vmatmul.mubr.f32.gmra.mrb[0].mxu0 %v472
  %v644 = vpop.f32.mrb[0].mxu0
  %v645 = vadd.f32 0.0, %v644
  %v646 = vpop.f32.mrb[0].mxu0
  %v647 = vadd.f32 0.0, %v646
  %648 = vmatprep.mubr.f32.mxu0 0.0
  %649 = vmatmul.mubr.f32.gmra.mrb[0].mxu0 %v475
  %v650 = vpop.f32.mrb[0].mxu0
  %v651 = vadd.f32 0.0, %v650
  %v652 = vpop.f32.mrb[0].mxu0
  %v653 = vadd.f32 0.0, %v652
  %654 = vdwg.mxu0
  %v655 = vmax.f32 %v544, 0.0
  %v656 = vmax.f32 %v546, 0.0
  %v657 = vmax.f32 %v633, 0.0
  %v658 = vmax.f32 %v635, 0.0
  %v659 = vmax.f32 %v550, 0.0
  %v660 = vmax.f32 %v552, 0.0
  %v661 = vmax.f32 %v639, 0.0
  %v662 = vmax.f32 %v641, 0.0
  %v663 = vmax.f32 %v556, 0.0
  %v664 = vmax.f32 %v558, 0.0
  %v665 = vmax.f32 %v645, 0.0
  %v666 = vmax.f32 %v647, 0.0
  %v667 = vmax.f32 %v562, 0.0
  %v668 = vmax.f32 %v564, 0.0
  %v669 = vmax.f32 %v651, 0.0
  %v670 = vmax.f32 %v653, 0.0
  %671 = vst [vmem:[#allocation2 + $0x8] sm:$0xff] %v655
  %672 = vst [vmem:[#allocation2 + $0x10] sm:$0xff] %v656
  %673 = vst [vmem:[#allocation2 + $0x48] sm:$0xff] %v659
  %674 = vst [vmem:[#allocation2 + $0x50] sm:$0xff] %v660
  %675 = vst [vmem:[#allocation2 + $0x88] sm:$0xff] %v663
  %676 = vst [vmem:[#allocation2 + $0x90] sm:$0xff] %v664
  %677 = vst [vmem:[#allocation2 + $0xc8] sm:$0xff] %v667
  %678 = vst [vmem:[#allocation2 + $0xd0] sm:$0xff] %v668
  %679 = vst [vmem:[#allocation2 + $0x28] sm:$0xff] %v657
  %680 = vst [vmem:[#allocation2 + $0x30] sm:$0xff] %v658
  %681 = vst [vmem:[#allocation2 + $0x68] sm:$0xff] %v661
  %682 = vst [vmem:[#allocation2 + $0x70] sm:$0xff] %v662
  %683 = vst [vmem:[#allocation2 + $0xa8] sm:$0xff] %v665
  %684 = vst [vmem:[#allocation2 + $0xb0] sm:$0xff] %v666
  %685 = vst [vmem:[#allocation2 + $0xe8] sm:$0xff] %v669
  %686 = vst [vmem:[#allocation2 + $0xf0] sm:$0xff] %v670
  %v687 = vld [vmem:[#allocation2] sm:$0xff]
  %v688 = vld [vmem:[#allocation2 + $0x8] sm:$0xff]
  %v689 = vld [vmem:[#allocation2 + $0x10] sm:$0xff]
  %v690 = vld [vmem:[#allocation2 + $0x40] sm:$0xff]
  %v691 = vld [vmem:[#allocation2 + $0x48] sm:$0xff]
  %v692 = vld [vmem:[#allocation2 + $0x50] sm:$0xff]
  %v693 = vld [vmem:[#allocation2 + $0x80] sm:$0xff]
  %v694 = vld [vmem:[#allocation2 + $0x88] sm:$0xff]
  %v695 = vld [vmem:[#allocation2 + $0x90] sm:$0xff]
  %v696 = vld [vmem:[#allocation2 + $0xc0] sm:$0xff]
  %v697 = vld [vmem:[#allocation2 + $0xc8] sm:$0xff]
  %v698 = vld [vmem:[#allocation2 + $0xd0] sm:$0xff]
  %711 = vrot.lane.b32.xlu0 %v687, 17
  %v712 = vpop.permute.xlu0 %711
  %713 = vrot.lane.b32.xlu0 %v688, 17
  %v714 = vpop.permute.xlu0 %713
  %715 = vrot.lane.b32.xlu0 %v689, 17
  %v716 = vpop.permute.xlu0 %715
  %717 = vrot.lane.b32.xlu0 %v690, 17
  %v718 = vpop.permute.xlu0 %717
  %719 = vrot.lane.b32.xlu0 %v691, 17
  %v720 = vpop.permute.xlu0 %719
  %721 = vrot.lane.b32.xlu0 %v692, 17
  %v722 = vpop.permute.xlu0 %721
  %723 = vrot.lane.b32.xlu0 %v693, 17
  %v724 = vpop.permute.xlu0 %723
  %725 = vrot.lane.b32.xlu0 %v694, 17
  %v726 = vpop.permute.xlu0 %725
  %727 = vrot.lane.b32.xlu0 %v695, 17
  %v728 = vpop.permute.xlu0 %727
  %729 = vrot.lane.b32.xlu0 %v696, 17
  %v730 = vpop.permute.xlu0 %729
  %731 = vrot.lane.b32.xlu0 %v697, 17
  %v732 = vpop.permute.xlu0 %731
  %733 = vrot.lane.b32.xlu0 %v698, 17
  %v734 = vpop.permute.xlu0 %733
  %v735 = vsel %vm104, %v712, %v714
  %v736 = vsel %vm104, %v714, %v716
  %v737 = vsel %vm104, %v718, %v720
  %v738 = vsel %vm104, %v720, %v722
  %v739 = vsel %vm104, %v724, %v726
  %v740 = vsel %vm104, %v726, %v728
  %v741 = vsel %vm104, %v730, %v732
  %v742 = vsel %vm104, %v732, %v734
  %v751 = vsel %vm93, %v735, 0.0
  %v752 = vsel %vm94, %v736, 0.0
  %v753 = vsel %vm93, %v737, 0.0
  %v754 = vsel %vm94, %v738, 0.0
  %v755 = vsel %vm93, %v739, 0.0
  %v756 = vsel %vm94, %v740, 0.0
  %v757 = vsel %vm93, %v741, 0.0
  %v758 = vsel %vm94, %v742, 0.0
  %759 = vst [vmem:[#allocation3] sm:$0xff] %v751
  %760 = vst [vmem:[#allocation3 + $0x8] sm:$0xff] %v752
  %761 = vst [vmem:[#allocation3 + $0x20] sm:$0xff] %v753
  %762 = vst [vmem:[#allocation3 + $0x28] sm:$0xff] %v754
  %763 = vst [vmem:[#allocation3 + $0x40] sm:$0xff] %v755
  %764 = vst [vmem:[#allocation3 + $0x48] sm:$0xff] %v756
  %765 = vst [vmem:[#allocation3 + $0x60] sm:$0xff] %v757
  %766 = vst [vmem:[#allocation3 + $0x68] sm:$0xff] %v758
  %v767 = vld [vmem:[#allocation2 + $0x20] sm:$0xff]
  %v768 = vld [vmem:[#allocation2 + $0x28] sm:$0xff]
  %v769 = vld [vmem:[#allocation2 + $0x30] sm:$0xff]
  %v770 = vld [vmem:[#allocation2 + $0x60] sm:$0xff]
  %v771 = vld [vmem:[#allocation2 + $0x68] sm:$0xff]
  %v772 = vld [vmem:[#allocation2 + $0x70] sm:$0xff]
  %v773 = vld [vmem:[#allocation2 + $0xa0] sm:$0xff]
  %v774 = vld [vmem:[#allocation2 + $0xa8] sm:$0xff]
  %v775 = vld [vmem:[#allocation2 + $0xb0] sm:$0xff]
  %v776 = vld [vmem:[#allocation2 + $0xe0] sm:$0xff]
  %v777 = vld [vmem:[#allocation2 + $0xe8] sm:$0xff]
  %v778 = vld [vmem:[#allocation2 + $0xf0] sm:$0xff]
  %791 = vrot.lane.b32.xlu0 %v767, 17
  %v792 = vpop.permute.xlu0 %791
  %793 = vrot.lane.b32.xlu0 %v768, 17
  %v794 = vpop.permute.xlu0 %793
  %795 = vrot.lane.b32.xlu0 %v769, 17
  %v796 = vpop.permute.xlu0 %795
  %797 = vrot.lane.b32.xlu0 %v770, 17
  %v798 = vpop.permute.xlu0 %797
  %799 = vrot.lane.b32.xlu0 %v771, 17
  %v800 = vpop.permute.xlu0 %799
  %801 = vrot.lane.b32.xlu0 %v772, 17
  %v802 = vpop.permute.xlu0 %801
  %803 = vrot.lane.b32.xlu0 %v773, 17
  %v804 = vpop.permute.xlu0 %803
  %805 = vrot.lane.b32.xlu0 %v774, 17
  %v806 = vpop.permute.xlu0 %805
  %807 = vrot.lane.b32.xlu0 %v775, 17
  %v808 = vpop.permute.xlu0 %807
  %809 = vrot.lane.b32.xlu0 %v776, 17
  %v810 = vpop.permute.xlu0 %809
  %811 = vrot.lane.b32.xlu0 %v777, 17
  %v812 = vpop.permute.xlu0 %811
  %813 = vrot.lane.b32.xlu0 %v778, 17
  %v814 = vpop.permute.xlu0 %813
  %v815 = vsel %vm104, %v792, %v794
  %v816 = vsel %vm104, %v794, %v796
  %v817 = vsel %vm104, %v798, %v800
  %v818 = vsel %vm104, %v800, %v802
  %v819 = vsel %vm104, %v804, %v806
  %v820 = vsel %vm104, %v806, %v808
  %v821 = vsel %vm104, %v810, %v812
  %v822 = vsel %vm104, %v812, %v814
  %v831 = vsel %vm93, %v815, 0.0
  %v832 = vsel %vm94, %v816, 0.0
  %v833 = vsel %vm93, %v817, 0.0
  %v834 = vsel %vm94, %v818, 0.0
  %v835 = vsel %vm93, %v819, 0.0
  %v836 = vsel %vm94, %v820, 0.0
  %v837 = vsel %vm93, %v821, 0.0
  %v838 = vsel %vm94, %v822, 0.0
  %839 = vst [vmem:[#allocation3 + $0x10] sm:$0xff] %v831
  %840 = vst [vmem:[#allocation3 + $0x18] sm:$0xff] %v832
  %841 = vst [vmem:[#allocation3 + $0x30] sm:$0xff] %v833
  %842 = vst [vmem:[#allocation3 + $0x38] sm:$0xff] %v834
  %843 = vst [vmem:[#allocation3 + $0x50] sm:$0xff] %v835
  %844 = vst [vmem:[#allocation3 + $0x58] sm:$0xff] %v836
  %845 = vst [vmem:[#allocation3 + $0x70] sm:$0xff] %v837
  %846 = vst [vmem:[#allocation3 + $0x78] sm:$0xff] %v838
  %v847 = vld [vmem:[#allocation2] sm:$0xff]
  %v848 = vld [vmem:[#allocation2 + $0x8] sm:$0xff]
  %v849 = vld [vmem:[#allocation2 + $0x10] sm:$0xff]
  %v850 = vld [vmem:[#allocation2 + $0x40] sm:$0xff]
  %v851 = vld [vmem:[#allocation2 + $0x48] sm:$0xff]
  %v852 = vld [vmem:[#allocation2 + $0x50] sm:$0xff]
  %v853 = vld [vmem:[#allocation2 + $0x80] sm:$0xff]
  %v854 = vld [vmem:[#allocation2 + $0x88] sm:$0xff]
  %v855 = vld [vmem:[#allocation2 + $0x90] sm:$0xff]
  %v856 = vld [vmem:[#allocation2 + $0xc0] sm:$0xff]
  %v857 = vld [vmem:[#allocation2 + $0xc8] sm:$0xff]
  %v858 = vld [vmem:[#allocation2 + $0xd0] sm:$0xff]
  %871 = vrot.lane.b32.xlu0 %v847, 16
  %v872 = vpop.permute.xlu0 %871
  %873 = vrot.lane.b32.xlu0 %v848, 16
  %v874 = vpop.permute.xlu0 %873
  %875 = vrot.lane.b32.xlu0 %v849, 16
  %v876 = vpop.permute.xlu0 %875
  %877 = vrot.lane.b32.xlu0 %v850, 16
  %v878 = vpop.permute.xlu0 %877
  %879 = vrot.lane.b32.xlu0 %v851, 16
  %v880 = vpop.permute.xlu0 %879
  %881 = vrot.lane.b32.xlu0 %v852, 16
  %v882 = vpop.permute.xlu0 %881
  %883 = vrot.lane.b32.xlu0 %v853, 16
  %v884 = vpop.permute.xlu0 %883
  %885 = vrot.lane.b32.xlu0 %v854, 16
  %v886 = vpop.permute.xlu0 %885
  %887 = vrot.lane.b32.xlu0 %v855, 16
  %v888 = vpop.permute.xlu0 %887
  %889 = vrot.lane.b32.xlu0 %v856, 16
  %v890 = vpop.permute.xlu0 %889
  %891 = vrot.lane.b32.xlu0 %v857, 16
  %v892 = vpop.permute.xlu0 %891
  %893 = vrot.lane.b32.xlu0 %v858, 16
  %v894 = vpop.permute.xlu0 %893
  %v895 = vsel %vm145, %v872, %v874
  %v896 = vsel %vm145, %v874, %v876
  %v897 = vsel %vm145, %v878, %v880
  %v898 = vsel %vm145, %v880, %v882
  %v899 = vsel %vm145, %v884, %v886
  %v900 = vsel %vm145, %v886, %v888
  %v901 = vsel %vm145, %v890, %v892
  %v902 = vsel %vm145, %v892, %v894
  %911 = vst [vmem:[#allocation3 + $0x80] sm:$0xff] %v895
  %912 = vst [vmem:[#allocation3 + $0x88] sm:$0xff] %v896
  %913 = vst [vmem:[#allocation3 + $0xa0] sm:$0xff] %v897
  %914 = vst [vmem:[#allocation3 + $0xa8] sm:$0xff] %v898
  %915 = vst [vmem:[#allocation3 + $0xc0] sm:$0xff] %v899
  %916 = vst [vmem:[#allocation3 + $0xc8] sm:$0xff] %v900
  %917 = vst [vmem:[#allocation3 + $0xe0] sm:$0xff] %v901
  %918 = vst [vmem:[#allocation3 + $0xe8] sm:$0xff] %v902
  %v919 = vld [vmem:[#allocation2 + $0x20] sm:$0xff]
  %v920 = vld [vmem:[#allocation2 + $0x28] sm:$0xff]
  %v921 = vld [vmem:[#allocation2 + $0x30] sm:$0xff]
  %v922 = vld [vmem:[#allocation2 + $0x60] sm:$0xff]
  %v923 = vld [vmem:[#allocation2 + $0x68] sm:$0xff]
  %v924 = vld [vmem:[#allocation2 + $0x70] sm:$0xff]
  %v925 = vld [vmem:[#allocation2 + $0xa0] sm:$0xff]
  %v926 = vld [vmem:[#allocation2 + $0xa8] sm:$0xff]
  %v927 = vld [vmem:[#allocation2 + $0xb0] sm:$0xff]
  %v928 = vld [vmem:[#allocation2 + $0xe0] sm:$0xff]
  %v929 = vld [vmem:[#allocation2 + $0xe8] sm:$0xff]
  %v930 = vld [vmem:[#allocation2 + $0xf0] sm:$0xff]
  %943 = vrot.lane.b32.xlu0 %v919, 16
  %v944 = vpop.permute.xlu0 %943
  %945 = vrot.lane.b32.xlu0 %v920, 16
  %v946 = vpop.permute.xlu0 %945
  %947 = vrot.lane.b32.xlu0 %v921, 16
  %v948 = vpop.permute.xlu0 %947
  %949 = vrot.lane.b32.xlu0 %v922, 16
  %v950 = vpop.permute.xlu0 %949
  %951 = vrot.lane.b32.xlu0 %v923, 16
  %v952 = vpop.permute.xlu0 %951
  %953 = vrot.lane.b32.xlu0 %v924, 16
  %v954 = vpop.permute.xlu0 %953
  %955 = vrot.lane.b32.xlu0 %v925, 16
  %v956 = vpop.permute.xlu0 %955
  %957 = vrot.lane.b32.xlu0 %v926, 16
  %v958 = vpop.permute.xlu0 %957
  %959 = vrot.lane.b32.xlu0 %v927, 16
  %v960 = vpop.permute.xlu0 %959
  %961 = vrot.lane.b32.xlu0 %v928, 16
  %v962 = vpop.permute.xlu0 %961
  %963 = vrot.lane.b32.xlu0 %v929, 16
  %v964 = vpop.permute.xlu0 %963
  %965 = vrot.lane.b32.xlu0 %v930, 16
  %v966 = vpop.permute.xlu0 %965
  %v967 = vsel %vm145, %v944, %v946
  %v968 = vsel %vm145, %v946, %v948
  %v969 = vsel %vm145, %v950, %v952
  %v970 = vsel %vm145, %v952, %v954
  %v971 = vsel %vm145, %v956, %v958
  %v972 = vsel %vm145, %v958, %v960
  %v973 = vsel %vm145, %v962, %v964
  %v974 = vsel %vm145, %v964, %v966
  %983 = vst [vmem:[#allocation3 + $0x90] sm:$0xff] %v967
  %984 = vst [vmem:[#allocation3 + $0x98] sm:$0xff] %v968
  %985 = vst [vmem:[#allocation3 + $0xb0] sm:$0xff] %v969
  %986 = vst [vmem:[#allocation3 + $0xb8] sm:$0xff] %v970
  %987 = vst [vmem:[#allocation3 + $0xd0] sm:$0xff] %v971
  %988 = vst [vmem:[#allocation3 + $0xd8] sm:$0xff] %v972
  %989 = vst [vmem:[#allocation3 + $0xf0] sm:$0xff] %v973
  %990 = vst [vmem:[#allocation3 + $0xf8] sm:$0xff] %v974
  %v991 = vld [vmem:[#allocation2] sm:$0xff]
  %v992 = vld [vmem:[#allocation2 + $0x8] sm:$0xff]
  %v993 = vld [vmem:[#allocation2 + $0x10] sm:$0xff]
  %v994 = vld [vmem:[#allocation2 + $0x40] sm:$0xff]
  %v995 = vld [vmem:[#allocation2 + $0x48] sm:$0xff]
  %v996 = vld [vmem:[#allocation2 + $0x50] sm:$0xff]
  %v997 = vld [vmem:[#allocation2 + $0x80] sm:$0xff]
  %v998 = vld [vmem:[#allocation2 + $0x88] sm:$0xff]
  %v999 = vld [vmem:[#allocation2 + $0x90] sm:$0xff]
  %v1000 = vld [vmem:[#allocation2 + $0xc0] sm:$0xff]
  %v1001 = vld [vmem:[#allocation2 + $0xc8] sm:$0xff]
  %v1002 = vld [vmem:[#allocation2 + $0xd0] sm:$0xff]
  %1015 = vrot.lane.b32.xlu0 %v991, 15
  %v1016 = vpop.permute.xlu0 %1015
  %1017 = vrot.lane.b32.xlu0 %v992, 15
  %v1018 = vpop.permute.xlu0 %1017
  %1019 = vrot.lane.b32.xlu0 %v993, 15
  %v1020 = vpop.permute.xlu0 %1019
  %1021 = vrot.lane.b32.xlu0 %v994, 15
  %v1022 = vpop.permute.xlu0 %1021
  %1023 = vrot.lane.b32.xlu0 %v995, 15
  %v1024 = vpop.permute.xlu0 %1023
  %1025 = vrot.lane.b32.xlu0 %v996, 15
  %v1026 = vpop.permute.xlu0 %1025
  %1027 = vrot.lane.b32.xlu0 %v997, 15
  %v1028 = vpop.permute.xlu0 %1027
  %1029 = vrot.lane.b32.xlu0 %v998, 15
  %v1030 = vpop.permute.xlu0 %1029
  %1031 = vrot.lane.b32.xlu0 %v999, 15
  %v1032 = vpop.permute.xlu0 %1031
  %1033 = vrot.lane.b32.xlu0 %v1000, 15
  %v1034 = vpop.permute.xlu0 %1033
  %1035 = vrot.lane.b32.xlu0 %v1001, 15
  %v1036 = vpop.permute.xlu0 %1035
  %1037 = vrot.lane.b32.xlu0 %v1002, 15
  %v1038 = vpop.permute.xlu0 %1037
  %v1039 = vsel %vm186, %v1016, %v1018
  %v1040 = vsel %vm186, %v1018, %v1020
  %v1041 = vsel %vm186, %v1022, %v1024
  %v1042 = vsel %vm186, %v1024, %v1026
  %v1043 = vsel %vm186, %v1028, %v1030
  %v1044 = vsel %vm186, %v1030, %v1032
  %v1045 = vsel %vm186, %v1034, %v1036
  %v1046 = vsel %vm186, %v1036, %v1038
  %v1055 = vsel %vm175, %v1039, 0.0
  %v1056 = vsel %vm176, %v1040, 0.0
  %v1057 = vsel %vm175, %v1041, 0.0
  %v1058 = vsel %vm176, %v1042, 0.0
  %v1059 = vsel %vm175, %v1043, 0.0
  %v1060 = vsel %vm176, %v1044, 0.0
  %v1061 = vsel %vm175, %v1045, 0.0
  %v1062 = vsel %vm176, %v1046, 0.0
  %1063 = vst [vmem:[#allocation3 + $0x100] sm:$0xff] %v1055
  %1064 = vst [vmem:[#allocation3 + $0x108] sm:$0xff] %v1056
  %1065 = vst [vmem:[#allocation3 + $0x120] sm:$0xff] %v1057
  %1066 = vst [vmem:[#allocation3 + $0x128] sm:$0xff] %v1058
  %1067 = vst [vmem:[#allocation3 + $0x140] sm:$0xff] %v1059
  %1068 = vst [vmem:[#allocation3 + $0x148] sm:$0xff] %v1060
  %1069 = vst [vmem:[#allocation3 + $0x160] sm:$0xff] %v1061
  %1070 = vst [vmem:[#allocation3 + $0x168] sm:$0xff] %v1062
  %v1071 = vld [vmem:[#allocation2 + $0x20] sm:$0xff]
  %v1072 = vld [vmem:[#allocation2 + $0x28] sm:$0xff]
  %v1073 = vld [vmem:[#allocation2 + $0x30] sm:$0xff]
  %v1074 = vld [vmem:[#allocation2 + $0x60] sm:$0xff]
  %v1075 = vld [vmem:[#allocation2 + $0x68] sm:$0xff]
  %v1076 = vld [vmem:[#allocation2 + $0x70] sm:$0xff]
  %v1077 = vld [vmem:[#allocation2 + $0xa0] sm:$0xff]
  %v1078 = vld [vmem:[#allocation2 + $0xa8] sm:$0xff]
  %v1079 = vld [vmem:[#allocation2 + $0xb0] sm:$0xff]
  %v1080 = vld [vmem:[#allocation2 + $0xe0] sm:$0xff]
  %v1081 = vld [vmem:[#allocation2 + $0xe8] sm:$0xff]
  %v1082 = vld [vmem:[#allocation2 + $0xf0] sm:$0xff]
  %1095 = vrot.lane.b32.xlu0 %v1071, 15
  %v1096 = vpop.permute.xlu0 %1095
  %1097 = vrot.lane.b32.xlu0 %v1072, 15
  %v1098 = vpop.permute.xlu0 %1097
  %1099 = vrot.lane.b32.xlu0 %v1073, 15
  %v1100 = vpop.permute.xlu0 %1099
  %1101 = vrot.lane.b32.xlu0 %v1074, 15
  %v1102 = vpop.permute.xlu0 %1101
  %1103 = vrot.lane.b32.xlu0 %v1075, 15
  %v1104 = vpop.permute.xlu0 %1103
  %1105 = vrot.lane.b32.xlu0 %v1076, 15
  %v1106 = vpop.permute.xlu0 %1105
  %1107 = vrot.lane.b32.xlu0 %v1077, 15
  %v1108 = vpop.permute.xlu0 %1107
  %1109 = vrot.lane.b32.xlu0 %v1078, 15
  %v1110 = vpop.permute.xlu0 %1109
  %1111 = vrot.lane.b32.xlu0 %v1079, 15
  %v1112 = vpop.permute.xlu0 %1111
  %1113 = vrot.lane.b32.xlu0 %v1080, 15
  %v1114 = vpop.permute.xlu0 %1113
  %1115 = vrot.lane.b32.xlu0 %v1081, 15
  %v1116 = vpop.permute.xlu0 %1115
  %1117 = vrot.lane.b32.xlu0 %v1082, 15
  %v1118 = vpop.permute.xlu0 %1117
  %v1119 = vsel %vm186, %v1096, %v1098
  %v1120 = vsel %vm186, %v1098, %v1100
  %v1121 = vsel %vm186, %v1102, %v1104
  %v1122 = vsel %vm186, %v1104, %v1106
  %v1123 = vsel %vm186, %v1108, %v1110
  %v1124 = vsel %vm186, %v1110, %v1112
  %v1125 = vsel %vm186, %v1114, %v1116
  %v1126 = vsel %vm186, %v1116, %v1118
  %v1135 = vsel %vm175, %v1119, 0.0
  %v1136 = vsel %vm176, %v1120, 0.0
  %v1137 = vsel %vm175, %v1121, 0.0
  %v1138 = vsel %vm176, %v1122, 0.0
  %v1139 = vsel %vm175, %v1123, 0.0
  %v1140 = vsel %vm176, %v1124, 0.0
  %v1141 = vsel %vm175, %v1125, 0.0
  %v1142 = vsel %vm176, %v1126, 0.0
  %1143 = vst [vmem:[#allocation3 + $0x110] sm:$0xff] %v1135
  %1144 = vst [vmem:[#allocation3 + $0x118] sm:$0xff] %v1136
  %1145 = vst [vmem:[#allocation3 + $0x130] sm:$0xff] %v1137
  %1146 = vst [vmem:[#allocation3 + $0x138] sm:$0xff] %v1138
  %1147 = vst [vmem:[#allocation3 + $0x150] sm:$0xff] %v1139
  %1148 = vst [vmem:[#allocation3 + $0x158] sm:$0xff] %v1140
  %1149 = vst [vmem:[#allocation3 + $0x170] sm:$0xff] %v1141
  %1150 = vst [vmem:[#allocation3 + $0x178] sm:$0xff] %v1142
  %v1151 = vld [vmem:[#allocation2] sm:$0xff]
  %v1152 = vld [vmem:[#allocation2 + $0x8] sm:$0xff]
  %v1153 = vld [vmem:[#allocation2 + $0x10] sm:$0xff]
  %v1154 = vld [vmem:[#allocation2 + $0x40] sm:$0xff]
  %v1155 = vld [vmem:[#allocation2 + $0x48] sm:$0xff]
  %v1156 = vld [vmem:[#allocation2 + $0x50] sm:$0xff]
  %v1157 = vld [vmem:[#allocation2 + $0x80] sm:$0xff]
  %v1158 = vld [vmem:[#allocation2 + $0x88] sm:$0xff]
  %v1159 = vld [vmem:[#allocation2 + $0x90] sm:$0xff]
  %v1160 = vld [vmem:[#allocation2 + $0xc0] sm:$0xff]
  %v1161 = vld [vmem:[#allocation2 + $0xc8] sm:$0xff]
  %v1162 = vld [vmem:[#allocation2 + $0xd0] sm:$0xff]
  %1175 = vrot.lane.b32.xlu0 %v1151, 1
  %v1176 = vpop.permute.xlu0 %1175
  %1177 = vrot.lane.b32.xlu0 %v1152, 1
  %v1178 = vpop.permute.xlu0 %1177
  %1179 = vrot.lane.b32.xlu0 %v1153, 1
  %v1180 = vpop.permute.xlu0 %1179
  %1181 = vrot.lane.b32.xlu0 %v1154, 1
  %v1182 = vpop.permute.xlu0 %1181
  %1183 = vrot.lane.b32.xlu0 %v1155, 1
  %v1184 = vpop.permute.xlu0 %1183
  %1185 = vrot.lane.b32.xlu0 %v1156, 1
  %v1186 = vpop.permute.xlu0 %1185
  %1187 = vrot.lane.b32.xlu0 %v1157, 1
  %v1188 = vpop.permute.xlu0 %1187
  %1189 = vrot.lane.b32.xlu0 %v1158, 1
  %v1190 = vpop.permute.xlu0 %1189
  %1191 = vrot.lane.b32.xlu0 %v1159, 1
  %v1192 = vpop.permute.xlu0 %1191
  %1193 = vrot.lane.b32.xlu0 %v1160, 1
  %v1194 = vpop.permute.xlu0 %1193
  %1195 = vrot.lane.b32.xlu0 %v1161, 1
  %v1196 = vpop.permute.xlu0 %1195
  %1197 = vrot.lane.b32.xlu0 %v1162, 1
  %v1198 = vpop.permute.xlu0 %1197
  %v1199 = vsel %vm227, %v1176, %v1178
  %v1200 = vsel %vm227, %v1178, %v1180
  %v1201 = vsel %vm227, %v1182, %v1184
  %v1202 = vsel %vm227, %v1184, %v1186
  %v1203 = vsel %vm227, %v1188, %v1190
  %v1204 = vsel %vm227, %v1190, %v1192
  %v1205 = vsel %vm227, %v1194, %v1196
  %v1206 = vsel %vm227, %v1196, %v1198
  %v1215 = vsel %vm93, %v1199, 0.0
  %v1216 = vsel %vm94, %v1200, 0.0
  %v1217 = vsel %vm93, %v1201, 0.0
  %v1218 = vsel %vm94, %v1202, 0.0
  %v1219 = vsel %vm93, %v1203, 0.0
  %v1220 = vsel %vm94, %v1204, 0.0
  %v1221 = vsel %vm93, %v1205, 0.0
  %v1222 = vsel %vm94, %v1206, 0.0
  %1223 = vst [vmem:[#allocation3 + $0x180] sm:$0xff] %v1215
  %1224 = vst [vmem:[#allocation3 + $0x188] sm:$0xff] %v1216
  %1225 = vst [vmem:[#allocation3 + $0x1a0] sm:$0xff] %v1217
  %1226 = vst [vmem:[#allocation3 + $0x1a8] sm:$0xff] %v1218
  %1227 = vst [vmem:[#allocation3 + $0x1c0] sm:$0xff] %v1219
  %1228 = vst [vmem:[#allocation3 + $0x1c8] sm:$0xff] %v1220
  %1229 = vst [vmem:[#allocation3 + $0x1e0] sm:$0xff] %v1221
  %1230 = vst [vmem:[#allocation3 + $0x1e8] sm:$0xff] %v1222
  %v1231 = vld [vmem:[#allocation2 + $0x20] sm:$0xff]
  %v1232 = vld [vmem:[#allocation2 + $0x28] sm:$0xff]
  %v1233 = vld [vmem:[#allocation2 + $0x30] sm:$0xff]
  %v1234 = vld [vmem:[#allocation2 + $0x60] sm:$0xff]
  %v1235 = vld [vmem:[#allocation2 + $0x68] sm:$0xff]
  %v1236 = vld [vmem:[#allocation2 + $0x70] sm:$0xff]
  %v1237 = vld [vmem:[#allocation2 + $0xa0] sm:$0xff]
  %v1238 = vld [vmem:[#allocation2 + $0xa8] sm:$0xff]
  %v1239 = vld [vmem:[#allocation2 + $0xb0] sm:$0xff]
  %v1240 = vld [vmem:[#allocation2 + $0xe0] sm:$0xff]
  %v1241 = vld [vmem:[#allocation2 + $0xe8] sm:$0xff]
  %v1242 = vld [vmem:[#allocation2 + $0xf0] sm:$0xff]
  %1255 = vrot.lane.b32.xlu0 %v1231, 1
  %v1256 = vpop.permute.xlu0 %1255
  %1257 = vrot.lane.b32.xlu0 %v1232, 1
  %v1258 = vpop.permute.xlu0 %1257
  %1259 = vrot.lane.b32.xlu0 %v1233, 1
  %v1260 = vpop.permute.xlu0 %1259
  %1261 = vrot.lane.b32.xlu0 %v1234, 1
  %v1262 = vpop.permute.xlu0 %1261
  %1263 = vrot.lane.b32.xlu0 %v1235, 1
  %v1264 = vpop.permute.xlu0 %1263
  %1265 = vrot.lane.b32.xlu0 %v1236, 1
  %v1266 = vpop.permute.xlu0 %1265
  %1267 = vrot.lane.b32.xlu0 %v1237, 1
  %v1268 = vpop.permute.xlu0 %1267
  %1269 = vrot.lane.b32.xlu0 %v1238, 1
  %v1270 = vpop.permute.xlu0 %1269
  %1271 = vrot.lane.b32.xlu0 %v1239, 1
  %v1272 = vpop.permute.xlu0 %1271
  %1273 = vrot.lane.b32.xlu0 %v1240, 1
  %v1274 = vpop.permute.xlu0 %1273
  %1275 = vrot.lane.b32.xlu0 %v1241, 1
  %v1276 = vpop.permute.xlu0 %1275
  %1277 = vrot.lane.b32.xlu0 %v1242, 1
  %v1278 = vpop.permute.xlu0 %1277
  %v1279 = vsel %vm227, %v1256, %v1258
  %v1280 = vsel %vm227, %v1258, %v1260
  %v1281 = vsel %vm227, %v1262, %v1264
  %v1282 = vsel %vm227, %v1264, %v1266
  %v1283 = vsel %vm227, %v1268, %v1270
  %v1284 = vsel %vm227, %v1270, %v1272
  %v1285 = vsel %vm227, %v1274, %v1276
  %v1286 = vsel %vm227, %v1276, %v1278
  %v1295 = vsel %vm93, %v1279, 0.0
  %v1296 = vsel %vm94, %v1280, 0.0
  %v1297 = vsel %vm93, %v1281, 0.0
  %v1298 = vsel %vm94, %v1282, 0.0
  %v1299 = vsel %vm93, %v1283, 0.0
  %v1300 = vsel %vm94, %v1284, 0.0
  %v1301 = vsel %vm93, %v1285, 0.0
  %v1302 = vsel %vm94, %v1286, 0.0
  %1303 = vst [vmem:[#allocation3 + $0x190] sm:$0xff] %v1295
  %1304 = vst [vmem:[#allocation3 + $0x198] sm:$0xff] %v1296
  %1305 = vst [vmem:[#allocation3 + $0x1b0] sm:$0xff] %v1297
  %1306 = vst [vmem:[#allocation3 + $0x1b8] sm:$0xff] %v1298
  %1307 = vst [vmem:[#allocation3 + $0x1d0] sm:$0xff] %v1299
  %1308 = vst [vmem:[#allocation3 + $0x1d8] sm:$0xff] %v1300
  %1309 = vst [vmem:[#allocation3 + $0x1f0] sm:$0xff] %v1301
  %1310 = vst [vmem:[#allocation3 + $0x1f8] sm:$0xff] %v1302
  %v1311 = vld [vmem:[#allocation2 + $0x8] sm:$0xff]
  %v1312 = vld [vmem:[#allocation2 + $0x10] sm:$0xff]
  %v1313 = vld [vmem:[#allocation2 + $0x48] sm:$0xff]
  %v1314 = vld [vmem:[#allocation2 + $0x50] sm:$0xff]
  %v1315 = vld [vmem:[#allocation2 + $0x88] sm:$0xff]
  %v1316 = vld [vmem:[#allocation2 + $0x90] sm:$0xff]
  %v1317 = vld [vmem:[#allocation2 + $0xc8] sm:$0xff]
  %v1318 = vld [vmem:[#allocation2 + $0xd0] sm:$0xff]
  %1319 = vst [vmem:[#allocation3 + $0x200] sm:$0xff] %v1311
  %1320 = vst [vmem:[#allocation3 + $0x208] sm:$0xff] %v1312
  %1321 = vst [vmem:[#allocation3 + $0x220] sm:$0xff] %v1313
  %1322 = vst [vmem:[#allocation3 + $0x228] sm:$0xff] %v1314
  %1323 = vst [vmem:[#allocation3 + $0x240] sm:$0xff] %v1315
  %1324 = vst [vmem:[#allocation3 + $0x248] sm:$0xff] %v1316
  %1325 = vst [vmem:[#allocation3 + $0x260] sm:$0xff] %v1317
  %1326 = vst [vmem:[#allocation3 + $0x268] sm:$0xff] %v1318
  %v1327 = vld [vmem:[#allocation2 + $0x28] sm:$0xff]
  %v1328 = vld [vmem:[#allocation2 + $0x30] sm:$0xff]
  %v1329 = vld [vmem:[#allocation2 + $0x68] sm:$0xff]
  %v1330 = vld [vmem:[#allocation2 + $0x70] sm:$0xff]
  %v1331 = vld [vmem:[#allocation2 + $0xa8] sm:$0xff]
  %v1332 = vld [vmem:[#allocation2 + $0xb0] sm:$0xff]
  %v1333 = vld [vmem:[#allocation2 + $0xe8] sm:$0xff]
  %v1334 = vld [vmem:[#allocation2 + $0xf0] sm:$0xff]
  %1335 = vst [vmem:[#allocation3 + $0x210] sm:$0xff] %v1327
  %1336 = vst [vmem:[#allocation3 + $0x218] sm:$0xff] %v1328
  %1337 = vst [vmem:[#allocation3 + $0x230] sm:$0xff] %v1329
  %1338 = vst [vmem:[#allocation3 + $0x238] sm:$0xff] %v1330
  %1339 = vst [vmem:[#allocation3 + $0x250] sm:$0xff] %v1331
  %1340 = vst [vmem:[#allocation3 + $0x258] sm:$0xff] %v1332
  %1341 = vst [vmem:[#allocation3 + $0x270] sm:$0xff] %v1333
  %1342 = vst [vmem:[#allocation3 + $0x278] sm:$0xff] %v1334
  %v1343 = vld [vmem:[#allocation2 + $0x8] sm:$0xff]
  %v1344 = vld [vmem:[#allocation2 + $0x10] sm:$0xff]
  %v1345 = vld [vmem:[#allocation2 + $0x18] sm:$0xff]
  %v1346 = vld [vmem:[#allocation2 + $0x48] sm:$0xff]
  %v1347 = vld [vmem:[#allocation2 + $0x50] sm:$0xff]
  %v1348 = vld [vmem:[#allocation2 + $0x58] sm:$0xff]
  %v1349 = vld [vmem:[#allocation2 + $0x88] sm:$0xff]
  %v1350 = vld [vmem:[#allocation2 + $0x90] sm:$0xff]
  %v1351 = vld [vmem:[#allocation2 + $0x98] sm:$0xff]
  %v1352 = vld [vmem:[#allocation2 + $0xc8] sm:$0xff]
  %v1353 = vld [vmem:[#allocation2 + $0xd0] sm:$0xff]
  %v1354 = vld [vmem:[#allocation2 + $0xd8] sm:$0xff]
  %1367 = vrot.lane.b32.xlu0 %v1343, 127
  %v1368 = vpop.permute.xlu0 %1367
  %1369 = vrot.lane.b32.xlu0 %v1344, 127
  %v1370 = vpop.permute.xlu0 %1369
  %1371 = vrot.lane.b32.xlu0 %v1345, 127
  %v1372 = vpop.permute.xlu0 %1371
  %1373 = vrot.lane.b32.xlu0 %v1346, 127
  %v1374 = vpop.permute.xlu0 %1373
  %1375 = vrot.lane.b32.xlu0 %v1347, 127
  %v1376 = vpop.permute.xlu0 %1375
  %1377 = vrot.lane.b32.xlu0 %v1348, 127
  %v1378 = vpop.permute.xlu0 %1377
  %1379 = vrot.lane.b32.xlu0 %v1349, 127
  %v1380 = vpop.permute.xlu0 %1379
  %1381 = vrot.lane.b32.xlu0 %v1350, 127
  %v1382 = vpop.permute.xlu0 %1381
  %1383 = vrot.lane.b32.xlu0 %v1351, 127
  %v1384 = vpop.permute.xlu0 %1383
  %1385 = vrot.lane.b32.xlu0 %v1352, 127
  %v1386 = vpop.permute.xlu0 %1385
  %1387 = vrot.lane.b32.xlu0 %v1353, 127
  %v1388 = vpop.permute.xlu0 %1387
  %1389 = vrot.lane.b32.xlu0 %v1354, 127
  %v1390 = vpop.permute.xlu0 %1389
  %v1391 = vsel %vm276, %v1368, %v1370
  %v1392 = vsel %vm276, %v1370, %v1372
  %v1393 = vsel %vm276, %v1374, %v1376
  %v1394 = vsel %vm276, %v1376, %v1378
  %v1395 = vsel %vm276, %v1380, %v1382
  %v1396 = vsel %vm276, %v1382, %v1384
  %v1397 = vsel %vm276, %v1386, %v1388
  %v1398 = vsel %vm276, %v1388, %v1390
  %v1407 = vsel %vm175, %v1391, 0.0
  %v1408 = vsel %vm176, %v1392, 0.0
  %v1409 = vsel %vm175, %v1393, 0.0
  %v1410 = vsel %vm176, %v1394, 0.0
  %v1411 = vsel %vm175, %v1395, 0.0
  %v1412 = vsel %vm176, %v1396, 0.0
  %v1413 = vsel %vm175, %v1397, 0.0
  %v1414 = vsel %vm176, %v1398, 0.0
  %1415 = vst [vmem:[#allocation3 + $0x280] sm:$0xff] %v1407
  %1416 = vst [vmem:[#allocation3 + $0x288] sm:$0xff] %v1408
  %1417 = vst [vmem:[#allocation3 + $0x2a0] sm:$0xff] %v1409
  %1418 = vst [vmem:[#allocation3 + $0x2a8] sm:$0xff] %v1410
  %1419 = vst [vmem:[#allocation3 + $0x2c0] sm:$0xff] %v1411
  %1420 = vst [vmem:[#allocation3 + $0x2c8] sm:$0xff] %v1412
  %1421 = vst [vmem:[#allocation3 + $0x2e0] sm:$0xff] %v1413
  %1422 = vst [vmem:[#allocation3 + $0x2e8] sm:$0xff] %v1414
  %v1423 = vld [vmem:[#allocation2 + $0x28] sm:$0xff]
  %v1424 = vld [vmem:[#allocation2 + $0x30] sm:$0xff]
  %v1425 = vld [vmem:[#allocation2 + $0x38] sm:$0xff]
  %v1426 = vld [vmem:[#allocation2 + $0x68] sm:$0xff]
  %v1427 = vld [vmem:[#allocation2 + $0x70] sm:$0xff]
  %v1428 = vld [vmem:[#allocation2 + $0x78] sm:$0xff]
  %v1429 = vld [vmem:[#allocation2 + $0xa8] sm:$0xff]
  %v1430 = vld [vmem:[#allocation2 + $0xb0] sm:$0xff]
  %v1431 = vld [vmem:[#allocation2 + $0xb8] sm:$0xff]
  %v1432 = vld [vmem:[#allocation2 + $0xe8] sm:$0xff]
  %v1433 = vld [vmem:[#allocation2 + $0xf0] sm:$0xff]
  %v1434 = vld [vmem:[#allocation2 + $0xf8] sm:$0xff]
  %1447 = vrot.lane.b32.xlu0 %v1423, 127
  %v1448 = vpop.permute.xlu0 %1447
  %1449 = vrot.lane.b32.xlu0 %v1424, 127
  %v1450 = vpop.permute.xlu0 %1449
  %1451 = vrot.lane.b32.xlu0 %v1425, 127
  %v1452 = vpop.permute.xlu0 %1451
  %1453 = vrot.lane.b32.xlu0 %v1426, 127
  %v1454 = vpop.permute.xlu0 %1453
  %1455 = vrot.lane.b32.xlu0 %v1427, 127
  %v1456 = vpop.permute.xlu0 %1455
  %1457 = vrot.lane.b32.xlu0 %v1428, 127
  %v1458 = vpop.permute.xlu0 %1457
  %1459 = vrot.lane.b32.xlu0 %v1429, 127
  %v1460 = vpop.permute.xlu0 %1459
  %1461 = vrot.lane.b32.xlu0 %v1430, 127
  %v1462 = vpop.permute.xlu0 %1461
  %1463 = vrot.lane.b32.xlu0 %v1431, 127
  %v1464 = vpop.permute.xlu0 %1463
  %1465 = vrot.lane.b32.xlu0 %v1432, 127
  %v1466 = vpop.permute.xlu0 %1465
  %1467 = vrot.lane.b32.xlu0 %v1433, 127
  %v1468 = vpop.permute.xlu0 %1467
  %1469 = vrot.lane.b32.xlu0 %v1434, 127
  %v1470 = vpop.permute.xlu0 %1469
  %v1471 = vsel %vm276, %v1448, %v1450
  %v1472 = vsel %vm276, %v1450, %v1452
  %v1473 = vsel %vm276, %v1454, %v1456
  %v1474 = vsel %vm276, %v1456, %v1458
  %v1475 = vsel %vm276, %v1460, %v1462
  %v1476 = vsel %vm276, %v1462, %v1464
  %v1477 = vsel %vm276, %v1466, %v1468
  %v1478 = vsel %vm276, %v1468, %v1470
  %v1487 = vsel %vm175, %v1471, 0.0
  %v1488 = vsel %vm176, %v1472, 0.0
  %v1489 = vsel %vm175, %v1473, 0.0
  %v1490 = vsel %vm176, %v1474, 0.0
  %v1491 = vsel %vm175, %v1475, 0.0
  %v1492 = vsel %vm176, %v1476, 0.0
  %v1493 = vsel %vm175, %v1477, 0.0
  %v1494 = vsel %vm176, %v1478, 0.0
  %1495 = vst [vmem:[#allocation3 + $0x290] sm:$0xff] %v1487
  %1496 = vst [vmem:[#allocation3 + $0x298] sm:$0xff] %v1488
  %1497 = vst [vmem:[#allocation3 + $0x2b0] sm:$0xff] %v1489
  %1498 = vst [vmem:[#allocation3 + $0x2b8] sm:$0xff] %v1490
  %1499 = vst [vmem:[#allocation3 + $0x2d0] sm:$0xff] %v1491
  %1500 = vst [vmem:[#allocation3 + $0x2d8] sm:$0xff] %v1492
  %1501 = vst [vmem:[#allocation3 + $0x2f0] sm:$0xff] %v1493
  %1502 = vst [vmem:[#allocation3 + $0x2f8] sm:$0xff] %v1494
  %v1503 = vld [vmem:[#allocation2 + $0x8] sm:$0xff]
  %v1504 = vld [vmem:[#allocation2 + $0x10] sm:$0xff]
  %v1505 = vld [vmem:[#allocation2 + $0x18] sm:$0xff]
  %v1506 = vld [vmem:[#allocation2 + $0x48] sm:$0xff]
  %v1507 = vld [vmem:[#allocation2 + $0x50] sm:$0xff]
  %v1508 = vld [vmem:[#allocation2 + $0x58] sm:$0xff]
  %v1509 = vld [vmem:[#allocation2 + $0x88] sm:$0xff]
  %v1510 = vld [vmem:[#allocation2 + $0x90] sm:$0xff]
  %v1511 = vld [vmem:[#allocation2 + $0x98] sm:$0xff]
  %v1512 = vld [vmem:[#allocation2 + $0xc8] sm:$0xff]
  %v1513 = vld [vmem:[#allocation2 + $0xd0] sm:$0xff]
  %v1514 = vld [vmem:[#allocation2 + $0xd8] sm:$0xff]
  %1527 = vrot.lane.b32.xlu0 %v1503, 113
  %v1528 = vpop.permute.xlu0 %1527
  %1529 = vrot.lane.b32.xlu0 %v1504, 113
  %v1530 = vpop.permute.xlu0 %1529
  %1531 = vrot.lane.b32.xlu0 %v1505, 113
  %v1532 = vpop.permute.xlu0 %1531
  %1533 = vrot.lane.b32.xlu0 %v1506, 113
  %v1534 = vpop.permute.xlu0 %1533
  %1535 = vrot.lane.b32.xlu0 %v1507, 113
  %v1536 = vpop.permute.xlu0 %1535
  %1537 = vrot.lane.b32.xlu0 %v1508, 113
  %v1538 = vpop.permute.xlu0 %1537
  %1539 = vrot.lane.b32.xlu0 %v1509, 113
  %v1540 = vpop.permute.xlu0 %1539
  %1541 = vrot.lane.b32.xlu0 %v1510, 113
  %v1542 = vpop.permute.xlu0 %1541
  %1543 = vrot.lane.b32.xlu0 %v1511, 113
  %v1544 = vpop.permute.xlu0 %1543
  %1545 = vrot.lane.b32.xlu0 %v1512, 113
  %v1546 = vpop.permute.xlu0 %1545
  %1547 = vrot.lane.b32.xlu0 %v1513, 113
  %v1548 = vpop.permute.xlu0 %1547
  %1549 = vrot.lane.b32.xlu0 %v1514, 113
  %v1550 = vpop.permute.xlu0 %1549
  %v1551 = vsel %vm317, %v1528, %v1530
  %v1552 = vsel %vm317, %v1530, %v1532
  %v1553 = vsel %vm317, %v1534, %v1536
  %v1554 = vsel %vm317, %v1536, %v1538
  %v1555 = vsel %vm317, %v1540, %v1542
  %v1556 = vsel %vm317, %v1542, %v1544
  %v1557 = vsel %vm317, %v1546, %v1548
  %v1558 = vsel %vm317, %v1548, %v1550
  %v1567 = vsel %vm93, %v1551, 0.0
  %v1568 = vsel %vm94, %v1552, 0.0
  %v1569 = vsel %vm93, %v1553, 0.0
  %v1570 = vsel %vm94, %v1554, 0.0
  %v1571 = vsel %vm93, %v1555, 0.0
  %v1572 = vsel %vm94, %v1556, 0.0
  %v1573 = vsel %vm93, %v1557, 0.0
  %v1574 = vsel %vm94, %v1558, 0.0
  %1575 = vst [vmem:[#allocation3 + $0x300] sm:$0xff] %v1567
  %1576 = vst [vmem:[#allocation3 + $0x308] sm:$0xff] %v1568
  %1577 = vst [vmem:[#allocation3 + $0x320] sm:$0xff] %v1569
  %1578 = vst [vmem:[#allocation3 + $0x328] sm:$0xff] %v1570
  %1579 = vst [vmem:[#allocation3 + $0x340] sm:$0xff] %v1571
  %1580 = vst [vmem:[#allocation3 + $0x348] sm:$0xff] %v1572
  %1581 = vst [vmem:[#allocation3 + $0x360] sm:$0xff] %v1573
  %1582 = vst [vmem:[#allocation3 + $0x368] sm:$0xff] %v1574
  %v1583 = vld [vmem:[#allocation2 + $0x28] sm:$0xff]
  %v1584 = vld [vmem:[#allocation2 + $0x30] sm:$0xff]
  %v1585 = vld [vmem:[#allocation2 + $0x38] sm:$0xff]
  %v1586 = vld [vmem:[#allocation2 + $0x68] sm:$0xff]
  %v1587 = vld [vmem:[#allocation2 + $0x70] sm:$0xff]
  %v1588 = vld [vmem:[#allocation2 + $0x78] sm:$0xff]
  %v1589 = vld [vmem:[#allocation2 + $0xa8] sm:$0xff]
  %v1590 = vld [vmem:[#allocation2 + $0xb0] sm:$0xff]
  %v1591 = vld [vmem:[#allocation2 + $0xb8] sm:$0xff]
  %v1592 = vld [vmem:[#allocation2 + $0xe8] sm:$0xff]
  %v1593 = vld [vmem:[#allocation2 + $0xf0] sm:$0xff]
  %v1594 = vld [vmem:[#allocation2 + $0xf8] sm:$0xff]
  %1607 = vrot.lane.b32.xlu0 %v1583, 113
  %v1608 = vpop.permute.xlu0 %1607
  %1609 = vrot.lane.b32.xlu0 %v1584, 113
  %v1610 = vpop.permute.xlu0 %1609
  %1611 = vrot.lane.b32.xlu0 %v1585, 113
  %v1612 = vpop.permute.xlu0 %1611
  %1613 = vrot.lane.b32.xlu0 %v1586, 113
  %v1614 = vpop.permute.xlu0 %1613
  %1615 = vrot.lane.b32.xlu0 %v1587, 113
  %v1616 = vpop.permute.xlu0 %1615
  %1617 = vrot.lane.b32.xlu0 %v1588, 113
  %v1618 = vpop.permute.xlu0 %1617
  %1619 = vrot.lane.b32.xlu0 %v1589, 113
  %v1620 = vpop.permute.xlu0 %1619
  %1621 = vrot.lane.b32.xlu0 %v1590, 113
  %v1622 = vpop.permute.xlu0 %1621
  %1623 = vrot.lane.b32.xlu0 %v1591, 113
  %v1624 = vpop.permute.xlu0 %1623
  %1625 = vrot.lane.b32.xlu0 %v1592, 113
  %v1626 = vpop.permute.xlu0 %1625
  %1627 = vrot.lane.b32.xlu0 %v1593, 113
  %v1628 = vpop.permute.xlu0 %1627
  %1629 = vrot.lane.b32.xlu0 %v1594, 113
  %v1630 = vpop.permute.xlu0 %1629
  %v1631 = vsel %vm317, %v1608, %v1610
  %v1632 = vsel %vm317, %v1610, %v1612
  %v1633 = vsel %vm317, %v1614, %v1616
  %v1634 = vsel %vm317, %v1616, %v1618
  %v1635 = vsel %vm317, %v1620, %v1622
  %v1636 = vsel %vm317, %v1622, %v1624
  %v1637 = vsel %vm317, %v1626, %v1628
  %v1638 = vsel %vm317, %v1628, %v1630
  %v1647 = vsel %vm93, %v1631, 0.0
  %v1648 = vsel %vm94, %v1632, 0.0
  %v1649 = vsel %vm93, %v1633, 0.0
  %v1650 = vsel %vm94, %v1634, 0.0
  %v1651 = vsel %vm93, %v1635, 0.0
  %v1652 = vsel %vm94, %v1636, 0.0
  %v1653 = vsel %vm93, %v1637, 0.0
  %v1654 = vsel %vm94, %v1638, 0.0
  %1655 = vst [vmem:[#allocation3 + $0x310] sm:$0xff] %v1647
  %1656 = vst [vmem:[#allocation3 + $0x318] sm:$0xff] %v1648
  %1657 = vst [vmem:[#allocation3 + $0x330] sm:$0xff] %v1649
  %1658 = vst [vmem:[#allocation3 + $0x338] sm:$0xff] %v1650
  %1659 = vst [vmem:[#allocation3 + $0x350] sm:$0xff] %v1651
  %1660 = vst [vmem:[#allocation3 + $0x358] sm:$0xff] %v1652
  %1661 = vst [vmem:[#allocation3 + $0x370] sm:$0xff] %v1653
  %1662 = vst [vmem:[#allocation3 + $0x378] sm:$0xff] %v1654
  %v1663 = vld [vmem:[#allocation2 + $0x8] sm:$0xff]
  %v1664 = vld [vmem:[#allocation2 + $0x10] sm:$0xff]
  %v1665 = vld [vmem:[#allocation2 + $0x18] sm:$0xff]
  %v1666 = vld [vmem:[#allocation2 + $0x48] sm:$0xff]
  %v1667 = vld [vmem:[#allocation2 + $0x50] sm:$0xff]
  %v1668 = vld [vmem:[#allocation2 + $0x58] sm:$0xff]
  %v1669 = vld [vmem:[#allocation2 + $0x88] sm:$0xff]
  %v1670 = vld [vmem:[#allocation2 + $0x90] sm:$0xff]
  %v1671 = vld [vmem:[#allocation2 + $0x98] sm:$0xff]
  %v1672 = vld [vmem:[#allocation2 + $0xc8] sm:$0xff]
  %v1673 = vld [vmem:[#allocation2 + $0xd0] sm:$0xff]
  %v1674 = vld [vmem:[#allocation2 + $0xd8] sm:$0xff]
  %1687 = vrot.lane.b32.xlu0 %v1663, 112
  %v1688 = vpop.permute.xlu0 %1687
  %1689 = vrot.lane.b32.xlu0 %v1664, 112
  %v1690 = vpop.permute.xlu0 %1689
  %1691 = vrot.lane.b32.xlu0 %v1665, 112
  %v1692 = vpop.permute.xlu0 %1691
  %1693 = vrot.lane.b32.xlu0 %v1666, 112
  %v1694 = vpop.permute.xlu0 %1693
  %1695 = vrot.lane.b32.xlu0 %v1667, 112
  %v1696 = vpop.permute.xlu0 %1695
  %1697 = vrot.lane.b32.xlu0 %v1668, 112
  %v1698 = vpop.permute.xlu0 %1697
  %1699 = vrot.lane.b32.xlu0 %v1669, 112
  %v1700 = vpop.permute.xlu0 %1699
  %1701 = vrot.lane.b32.xlu0 %v1670, 112
  %v1702 = vpop.permute.xlu0 %1701
  %1703 = vrot.lane.b32.xlu0 %v1671, 112
  %v1704 = vpop.permute.xlu0 %1703
  %1705 = vrot.lane.b32.xlu0 %v1672, 112
  %v1706 = vpop.permute.xlu0 %1705
  %1707 = vrot.lane.b32.xlu0 %v1673, 112
  %v1708 = vpop.permute.xlu0 %1707
  %1709 = vrot.lane.b32.xlu0 %v1674, 112
  %v1710 = vpop.permute.xlu0 %1709
  %v1711 = vsel %vm358, %v1688, %v1690
  %v1712 = vsel %vm358, %v1690, %v1692
  %v1713 = vsel %vm358, %v1694, %v1696
  %v1714 = vsel %vm358, %v1696, %v1698
  %v1715 = vsel %vm358, %v1700, %v1702
  %v1716 = vsel %vm358, %v1702, %v1704
  %v1717 = vsel %vm358, %v1706, %v1708
  %v1718 = vsel %vm358, %v1708, %v1710
  %1727 = vst [vmem:[#allocation3 + $0x380] sm:$0xff] %v1711
  %1728 = vst [vmem:[#allocation3 + $0x388] sm:$0xff] %v1712
  %1729 = vst [vmem:[#allocation3 + $0x3a0] sm:$0xff] %v1713
  %1730 = vst [vmem:[#allocation3 + $0x3a8] sm:$0xff] %v1714
  %1731 = vst [vmem:[#allocation3 + $0x3c0] sm:$0xff] %v1715
  %1732 = vst [vmem:[#allocation3 + $0x3c8] sm:$0xff] %v1716
  %1733 = vst [vmem:[#allocation3 + $0x3e0] sm:$0xff] %v1717
  %1734 = vst [vmem:[#allocation3 + $0x3e8] sm:$0xff] %v1718
  %v1735 = vld [vmem:[#allocation2 + $0x28] sm:$0xff]
  %v1736 = vld [vmem:[#allocation2 + $0x30] sm:$0xff]
  %v1737 = vld [vmem:[#allocation2 + $0x38] sm:$0xff]
  %v1738 = vld [vmem:[#allocation2 + $0x68] sm:$0xff]
  %v1739 = vld [vmem:[#allocation2 + $0x70] sm:$0xff]
  %v1740 = vld [vmem:[#allocation2 + $0x78] sm:$0xff]
  %v1741 = vld [vmem:[#allocation2 + $0xa8] sm:$0xff]
  %v1742 = vld [vmem:[#allocation2 + $0xb0] sm:$0xff]
  %v1743 = vld [vmem:[#allocation2 + $0xb8] sm:$0xff]
  %v1744 = vld [vmem:[#allocation2 + $0xe8] sm:$0xff]
  %v1745 = vld [vmem:[#allocation2 + $0xf0] sm:$0xff]
  %v1746 = vld [vmem:[#allocation2 + $0xf8] sm:$0xff]
  %1759 = vrot.lane.b32.xlu0 %v1735, 112
  %v1760 = vpop.permute.xlu0 %1759
  %1761 = vrot.lane.b32.xlu0 %v1736, 112
  %v1762 = vpop.permute.xlu0 %1761
  %1763 = vrot.lane.b32.xlu0 %v1737, 112
  %v1764 = vpop.permute.xlu0 %1763
  %1765 = vrot.lane.b32.xlu0 %v1738, 112
  %v1766 = vpop.permute.xlu0 %1765
  %1767 = vrot.lane.b32.xlu0 %v1739, 112
  %v1768 = vpop.permute.xlu0 %1767
  %1769 = vrot.lane.b32.xlu0 %v1740, 112
  %v1770 = vpop.permute.xlu0 %1769
  %1771 = vrot.lane.b32.xlu0 %v1741, 112
  %v1772 = vpop.permute.xlu0 %1771
  %1773 = vrot.lane.b32.xlu0 %v1742, 112
  %v1774 = vpop.permute.xlu0 %1773
  %1775 = vrot.lane.b32.xlu0 %v1743, 112
  %v1776 = vpop.permute.xlu0 %1775
  %1777 = vrot.lane.b32.xlu0 %v1744, 112
  %v1778 = vpop.permute.xlu0 %1777
  %1779 = vrot.lane.b32.xlu0 %v1745, 112
  %v1780 = vpop.permute.xlu0 %1779
  %1781 = vrot.lane.b32.xlu0 %v1746, 112
  %v1782 = vpop.permute.xlu0 %1781
  %v1783 = vsel %vm358, %v1760, %v1762
  %v1784 = vsel %vm358, %v1762, %v1764
  %v1785 = vsel %vm358, %v1766, %v1768
  %v1786 = vsel %vm358, %v1768, %v1770
  %v1787 = vsel %vm358, %v1772, %v1774
  %v1788 = vsel %vm358, %v1774, %v1776
  %v1789 = vsel %vm358, %v1778, %v1780
  %v1790 = vsel %vm358, %v1780, %v1782
  %1799 = vst [vmem:[#allocation3 + $0x390] sm:$0xff] %v1783
  %1800 = vst [vmem:[#allocation3 + $0x398] sm:$0xff] %v1784
  %1801 = vst [vmem:[#allocation3 + $0x3b0] sm:$0xff] %v1785
  %1802 = vst [vmem:[#allocation3 + $0x3b8] sm:$0xff] %v1786
  %1803 = vst [vmem:[#allocation3 + $0x3d0] sm:$0xff] %v1787
  %1804 = vst [vmem:[#allocation3 + $0x3d8] sm:$0xff] %v1788
  %1805 = vst [vmem:[#allocation3 + $0x3f0] sm:$0xff] %v1789
  %1806 = vst [vmem:[#allocation3 + $0x3f8] sm:$0xff] %v1790
  %v1807 = vld [vmem:[#allocation2 + $0x8] sm:$0xff]
  %v1808 = vld [vmem:[#allocation2 + $0x10] sm:$0xff]
  %v1809 = vld [vmem:[#allocation2 + $0x18] sm:$0xff]
  %v1810 = vld [vmem:[#allocation2 + $0x48] sm:$0xff]
  %v1811 = vld [vmem:[#allocation2 + $0x50] sm:$0xff]
  %v1812 = vld [vmem:[#allocation2 + $0x58] sm:$0xff]
  %v1813 = vld [vmem:[#allocation2 + $0x88] sm:$0xff]
  %v1814 = vld [vmem:[#allocation2 + $0x90] sm:$0xff]
  %v1815 = vld [vmem:[#allocation2 + $0x98] sm:$0xff]
  %v1816 = vld [vmem:[#allocation2 + $0xc8] sm:$0xff]
  %v1817 = vld [vmem:[#allocation2 + $0xd0] sm:$0xff]
  %v1818 = vld [vmem:[#allocation2 + $0xd8] sm:$0xff]
  %1831 = vrot.lane.b32.xlu0 %v1807, 111
  %v1832 = vpop.permute.xlu0 %1831
  %1833 = vrot.lane.b32.xlu0 %v1808, 111
  %v1834 = vpop.permute.xlu0 %1833
  %1835 = vrot.lane.b32.xlu0 %v1809, 111
  %v1836 = vpop.permute.xlu0 %1835
  %1837 = vrot.lane.b32.xlu0 %v1810, 111
  %v1838 = vpop.permute.xlu0 %1837
  %1839 = vrot.lane.b32.xlu0 %v1811, 111
  %v1840 = vpop.permute.xlu0 %1839
  %1841 = vrot.lane.b32.xlu0 %v1812, 111
  %v1842 = vpop.permute.xlu0 %1841
  %1843 = vrot.lane.b32.xlu0 %v1813, 111
  %v1844 = vpop.permute.xlu0 %1843
  %1845 = vrot.lane.b32.xlu0 %v1814, 111
  %v1846 = vpop.permute.xlu0 %1845
  %1847 = vrot.lane.b32.xlu0 %v1815, 111
  %v1848 = vpop.permute.xlu0 %1847
  %1849 = vrot.lane.b32.xlu0 %v1816, 111
  %v1850 = vpop.permute.xlu0 %1849
  %1851 = vrot.lane.b32.xlu0 %v1817, 111
  %v1852 = vpop.permute.xlu0 %1851
  %1853 = vrot.lane.b32.xlu0 %v1818, 111
  %v1854 = vpop.permute.xlu0 %1853
  %v1855 = vsel %vm395, %v1832, %v1834
  %v1856 = vsel %vm395, %v1834, %v1836
  %v1857 = vsel %vm395, %v1838, %v1840
  %v1858 = vsel %vm395, %v1840, %v1842
  %v1859 = vsel %vm395, %v1844, %v1846
  %v1860 = vsel %vm395, %v1846, %v1848
  %v1861 = vsel %vm395, %v1850, %v1852
  %v1862 = vsel %vm395, %v1852, %v1854
  %v1871 = vsel %vm175, %v1855, 0.0
  %v1872 = vsel %vm176, %v1856, 0.0
  %v1873 = vsel %vm175, %v1857, 0.0
  %v1874 = vsel %vm176, %v1858, 0.0
  %v1875 = vsel %vm175, %v1859, 0.0
  %v1876 = vsel %vm176, %v1860, 0.0
  %v1877 = vsel %vm175, %v1861, 0.0
  %v1878 = vsel %vm176, %v1862, 0.0
  %1879 = vst [vmem:[#allocation3 + $0x400] sm:$0xff] %v1871
  %1880 = vst [vmem:[#allocation3 + $0x408] sm:$0xff] %v1872
  %1881 = vst [vmem:[#allocation3 + $0x420] sm:$0xff] %v1873
  %1882 = vst [vmem:[#allocation3 + $0x428] sm:$0xff] %v1874
  %1883 = vst [vmem:[#allocation3 + $0x440] sm:$0xff] %v1875
  %1884 = vst [vmem:[#allocation3 + $0x448] sm:$0xff] %v1876
  %1885 = vst [vmem:[#allocation3 + $0x460] sm:$0xff] %v1877
  %1886 = vst [vmem:[#allocation3 + $0x468] sm:$0xff] %v1878
  %v1887 = vld [vmem:[#allocation2 + $0x28] sm:$0xff]
  %v1888 = vld [vmem:[#allocation2 + $0x30] sm:$0xff]
  %v1889 = vld [vmem:[#allocation2 + $0x38] sm:$0xff]
  %v1890 = vld [vmem:[#allocation2 + $0x68] sm:$0xff]
  %v1891 = vld [vmem:[#allocation2 + $0x70] sm:$0xff]
  %v1892 = vld [vmem:[#allocation2 + $0x78] sm:$0xff]
  %v1893 = vld [vmem:[#allocation2 + $0xa8] sm:$0xff]
  %v1894 = vld [vmem:[#allocation2 + $0xb0] sm:$0xff]
  %v1895 = vld [vmem:[#allocation2 + $0xb8] sm:$0xff]
  %v1896 = vld [vmem:[#allocation2 + $0xe8] sm:$0xff]
  %v1897 = vld [vmem:[#allocation2 + $0xf0] sm:$0xff]
  %v1898 = vld [vmem:[#allocation2 + $0xf8] sm:$0xff]
  %1911 = vrot.lane.b32.xlu0 %v1887, 111
  %v1912 = vpop.permute.xlu0 %1911
  %1913 = vrot.lane.b32.xlu0 %v1888, 111
  %v1914 = vpop.permute.xlu0 %1913
  %1915 = vrot.lane.b32.xlu0 %v1889, 111
  %v1916 = vpop.permute.xlu0 %1915
  %1917 = vrot.lane.b32.xlu0 %v1890, 111
  %v1918 = vpop.permute.xlu0 %1917
  %1919 = vrot.lane.b32.xlu0 %v1891, 111
  %v1920 = vpop.permute.xlu0 %1919
  %1921 = vrot.lane.b32.xlu0 %v1892, 111
  %v1922 = vpop.permute.xlu0 %1921
  %1923 = vrot.lane.b32.xlu0 %v1893, 111
  %v1924 = vpop.permute.xlu0 %1923
  %1925 = vrot.lane.b32.xlu0 %v1894, 111
  %v1926 = vpop.permute.xlu0 %1925
  %1927 = vrot.lane.b32.xlu0 %v1895, 111
  %v1928 = vpop.permute.xlu0 %1927
  %1929 = vrot.lane.b32.xlu0 %v1896, 111
  %v1930 = vpop.permute.xlu0 %1929
  %1931 = vrot.lane.b32.xlu0 %v1897, 111
  %v1932 = vpop.permute.xlu0 %1931
  %1933 = vrot.lane.b32.xlu0 %v1898, 111
  %v1934 = vpop.permute.xlu0 %1933
  %v1935 = vsel %vm395, %v1912, %v1914
  %v1936 = vsel %vm395, %v1914, %v1916
  %v1937 = vsel %vm395, %v1918, %v1920
  %v1938 = vsel %vm395, %v1920, %v1922
  %v1939 = vsel %vm395, %v1924, %v1926
  %v1940 = vsel %vm395, %v1926, %v1928
  %v1941 = vsel %vm395, %v1930, %v1932
  %v1942 = vsel %vm395, %v1932, %v1934
  %v1951 = vsel %vm175, %v1935, 0.0
  %v1952 = vsel %vm176, %v1936, 0.0
  %v1953 = vsel %vm175, %v1937, 0.0
  %v1954 = vsel %vm176, %v1938, 0.0
  %v1955 = vsel %vm175, %v1939, 0.0
  %v1956 = vsel %vm176, %v1940, 0.0
  %v1957 = vsel %vm175, %v1941, 0.0
  %v1958 = vsel %vm176, %v1942, 0.0
  %1959 = vst [vmem:[#allocation3 + $0x410] sm:$0xff] %v1951
  %1960 = vst [vmem:[#allocation3 + $0x418] sm:$0xff] %v1952
  %1961 = vst [vmem:[#allocation3 + $0x430] sm:$0xff] %v1953
  %1962 = vst [vmem:[#allocation3 + $0x438] sm:$0xff] %v1954
  %1963 = vst [vmem:[#allocation3 + $0x450] sm:$0xff] %v1955
  %1964 = vst [vmem:[#allocation3 + $0x458] sm:$0xff] %v1956
  %1965 = vst [vmem:[#allocation3 + $0x470] sm:$0xff] %v1957
  %1966 = vst [vmem:[#allocation3 + $0x478] sm:$0xff] %v1958
  %v1967 = vld [vmem:[%s2] sm:$0xff]
  %v1968 = vld [vmem:[%s2 + $0x8] sm:$0xff]
  %v1969 = vld [vmem:[%s2 + $0x10] sm:$0xff]
  %v1970 = vld [vmem:[%s2 + $0x18] sm:$0xff]
  %v1971 = vld [vmem:[%s2 + $0x20] sm:$0xff]
  %v1972 = vld [vmem:[%s2 + $0x28] sm:$0xff]
  %v1973 = vld [vmem:[%s2 + $0x30] sm:$0xff]
  %v1974 = vld [vmem:[%s2 + $0x38] sm:$0xff]
  %v1975 = vld [vmem:[%s2 + $0x40] sm:$0xff]
  %v1976 = vld [vmem:[%s2 + $0x48] sm:$0xff]
  %v1977 = vld [vmem:[%s2 + $0x50] sm:$0xff]
  %v1978 = vld [vmem:[%s2 + $0x58] sm:$0xff]
  %v1979 = vld [vmem:[#allocation3] sm:$0xff]
  %v1980 = vld [vmem:[#allocation3 + $0x8] sm:$0xff]
  %v1981 = vld [vmem:[#allocation3 + $0x10] sm:$0xff]
  %v1982 = vld [vmem:[#allocation3 + $0x18] sm:$0xff]
  %v1983 = vld [vmem:[#allocation3 + $0x20] sm:$0xff]
  %v1984 = vld [vmem:[#allocation3 + $0x28] sm:$0xff]
  %v1985 = vld [vmem:[#allocation3 + $0x30] sm:$0xff]
  %v1986 = vld [vmem:[#allocation3 + $0x38] sm:$0xff]
  %v1987 = vld [vmem:[#allocation3 + $0x40] sm:$0xff]
  %v1988 = vld [vmem:[#allocation3 + $0x48] sm:$0xff]
  %v1989 = vld [vmem:[#allocation3 + $0x50] sm:$0xff]
  %v1990 = vld [vmem:[#allocation3 + $0x58] sm:$0xff]
  %v1991 = vld [vmem:[#allocation3 + $0x60] sm:$0xff]
  %v1992 = vld [vmem:[#allocation3 + $0x68] sm:$0xff]
  %v1993 = vld [vmem:[#allocation3 + $0x70] sm:$0xff]
  %v1994 = vld [vmem:[#allocation3 + $0x78] sm:$0xff]
  %v1995 = vld [vmem:[#allocation3 + $0x80] sm:$0xff]
  %v1996 = vld [vmem:[#allocation3 + $0x88] sm:$0xff]
  %v1997 = vld [vmem:[#allocation3 + $0x90] sm:$0xff]
  %v1998 = vld [vmem:[#allocation3 + $0x98] sm:$0xff]
  %v1999 = vld [vmem:[#allocation3 + $0xa0] sm:$0xff]
  %v2000 = vld [vmem:[#allocation3 + $0xa8] sm:$0xff]
  %v2001 = vld [vmem:[#allocation3 + $0xb0] sm:$0xff]
  %v2002 = vld [vmem:[#allocation3 + $0xb8] sm:$0xff]
  %v2003 = vld [vmem:[#allocation3 + $0xc0] sm:$0xff]
  %v2004 = vld [vmem:[#allocation3 + $0xc8] sm:$0xff]
  %v2005 = vld [vmem:[#allocation3 + $0xd0] sm:$0xff]
  %v2006 = vld [vmem:[#allocation3 + $0xd8] sm:$0xff]
  %v2007 = vld [vmem:[#allocation3 + $0xe0] sm:$0xff]
  %v2008 = vld [vmem:[#allocation3 + $0xe8] sm:$0xff]
  %v2009 = vld [vmem:[#allocation3 + $0xf0] sm:$0xff]
  %v2010 = vld [vmem:[#allocation3 + $0xf8] sm:$0xff]
  %v2011 = vld [vmem:[#allocation3 + $0x100] sm:$0xff]
  %v2012 = vld [vmem:[#allocation3 + $0x108] sm:$0xff]
  %v2013 = vld [vmem:[#allocation3 + $0x110] sm:$0xff]
  %v2014 = vld [vmem:[#allocation3 + $0x118] sm:$0xff]
  %v2015 = vld [vmem:[#allocation3 + $0x120] sm:$0xff]
  %v2016 = vld [vmem:[#allocation3 + $0x128] sm:$0xff]
  %v2017 = vld [vmem:[#allocation3 + $0x130] sm:$0xff]
  %v2018 = vld [vmem:[#allocation3 + $0x138] sm:$0xff]
  %v2019 = vld [vmem:[#allocation3 + $0x140] sm:$0xff]
  %v2020 = vld [vmem:[#allocation3 + $0x148] sm:$0xff]
  %v2021 = vld [vmem:[#allocation3 + $0x150] sm:$0xff]
  %v2022 = vld [vmem:[#allocation3 + $0x158] sm:$0xff]
  %v2023 = vld [vmem:[#allocation3 + $0x160] sm:$0xff]
  %v2024 = vld [vmem:[#allocation3 + $0x168] sm:$0xff]
  %v2025 = vld [vmem:[#allocation3 + $0x170] sm:$0xff]
  %v2026 = vld [vmem:[#allocation3 + $0x178] sm:$0xff]
  %v2027 = vld [vmem:[#allocation3 + $0x180] sm:$0xff]
  %v2028 = vld [vmem:[#allocation3 + $0x188] sm:$0xff]
  %v2029 = vld [vmem:[#allocation3 + $0x190] sm:$0xff]
  %v2030 = vld [vmem:[#allocation3 + $0x198] sm:$0xff]
  %v2031 = vld [vmem:[#allocation3 + $0x1a0] sm:$0xff]
  %v2032 = vld [vmem:[#allocation3 + $0x1a8] sm:$0xff]
  %v2033 = vld [vmem:[#allocation3 + $0x1b0] sm:$0xff]
  %v2034 = vld [vmem:[#allocation3 + $0x1b8] sm:$0xff]
  %v2035 = vld [vmem:[#allocation3 + $0x1c0] sm:$0xff]
  %v2036 = vld [vmem:[#allocation3 + $0x1c8] sm:$0xff]
  %v2037 = vld [vmem:[#allocation3 + $0x1d0] sm:$0xff]
  %v2038 = vld [vmem:[#allocation3 + $0x1d8] sm:$0xff]
  %v2039 = vld [vmem:[#allocation3 + $0x1e0] sm:$0xff]
  %v2040 = vld [vmem:[#allocation3 + $0x1e8] sm:$0xff]
  %v2041 = vld [vmem:[#allocation3 + $0x1f0] sm:$0xff]
  %v2042 = vld [vmem:[#allocation3 + $0x1f8] sm:$0xff]
  %v2043 = vld [vmem:[#allocation3 + $0x200] sm:$0xff]
  %v2044 = vld [vmem:[#allocation3 + $0x208] sm:$0xff]
  %v2045 = vld [vmem:[#allocation3 + $0x210] sm:$0xff]
  %v2046 = vld [vmem:[#allocation3 + $0x218] sm:$0xff]
  %v2047 = vld [vmem:[#allocation3 + $0x220] sm:$0xff]
  %v2048 = vld [vmem:[#allocation3 + $0x228] sm:$0xff]
  %v2049 = vld [vmem:[#allocation3 + $0x230] sm:$0xff]
  %v2050 = vld [vmem:[#allocation3 + $0x238] sm:$0xff]
  %v2051 = vld [vmem:[#allocation3 + $0x240] sm:$0xff]
  %v2052 = vld [vmem:[#allocation3 + $0x248] sm:$0xff]
  %v2053 = vld [vmem:[#allocation3 + $0x250] sm:$0xff]
  %v2054 = vld [vmem:[#allocation3 + $0x258] sm:$0xff]
  %v2055 = vld [vmem:[#allocation3 + $0x260] sm:$0xff]
  %v2056 = vld [vmem:[#allocation3 + $0x268] sm:$0xff]
  %v2057 = vld [vmem:[#allocation3 + $0x270] sm:$0xff]
  %v2058 = vld [vmem:[#allocation3 + $0x278] sm:$0xff]
  %v2059 = vld [vmem:[#allocation3 + $0x280] sm:$0xff]
  %v2060 = vld [vmem:[#allocation3 + $0x288] sm:$0xff]
  %v2061 = vld [vmem:[#allocation3 + $0x290] sm:$0xff]
  %v2062 = vld [vmem:[#allocation3 + $0x298] sm:$0xff]
  %v2063 = vld [vmem:[#allocation3 + $0x2a0] sm:$0xff]
  %v2064 = vld [vmem:[#allocation3 + $0x2a8] sm:$0xff]
  %v2065 = vld [vmem:[#allocation3 + $0x2b0] sm:$0xff]
  %v2066 = vld [vmem:[#allocation3 + $0x2b8] sm:$0xff]
  %v2067 = vld [vmem:[#allocation3 + $0x2c0] sm:$0xff]
  %v2068 = vld [vmem:[#allocation3 + $0x2c8] sm:$0xff]
  %v2069 = vld [vmem:[#allocation3 + $0x2d0] sm:$0xff]
  %v2070 = vld [vmem:[#allocation3 + $0x2d8] sm:$0xff]
  %v2071 = vld [vmem:[#allocation3 + $0x2e0] sm:$0xff]
  %v2072 = vld [vmem:[#allocation3 + $0x2e8] sm:$0xff]
  %v2073 = vld [vmem:[#allocation3 + $0x2f0] sm:$0xff]
  %v2074 = vld [vmem:[#allocation3 + $0x2f8] sm:$0xff]
  %v2075 = vld [vmem:[#allocation3 + $0x300] sm:$0xff]
  %v2076 = vld [vmem:[#allocation3 + $0x308] sm:$0xff]
  %v2077 = vld [vmem:[#allocation3 + $0x310] sm:$0xff]
  %v2078 = vld [vmem:[#allocation3 + $0x318] sm:$0xff]
  %v2079 = vld [vmem:[#allocation3 + $0x320] sm:$0xff]
  %v2080 = vld [vmem:[#allocation3 + $0x328] sm:$0xff]
  %v2081 = vld [vmem:[#allocation3 + $0x330] sm:$0xff]
  %v2082 = vld [vmem:[#allocation3 + $0x338] sm:$0xff]
  %v2083 = vld [vmem:[#allocation3 + $0x340] sm:$0xff]
  %v2084 = vld [vmem:[#allocation3 + $0x348] sm:$0xff]
  %v2085 = vld [vmem:[#allocation3 + $0x350] sm:$0xff]
  %v2086 = vld [vmem:[#allocation3 + $0x358] sm:$0xff]
  %v2087 = vld [vmem:[#allocation3 + $0x360] sm:$0xff]
  %v2088 = vld [vmem:[#allocation3 + $0x368] sm:$0xff]
  %v2089 = vld [vmem:[#allocation3 + $0x370] sm:$0xff]
  %v2090 = vld [vmem:[#allocation3 + $0x378] sm:$0xff]
  %v2091 = vld [vmem:[#allocation3 + $0x380] sm:$0xff]
  %v2092 = vld [vmem:[#allocation3 + $0x388] sm:$0xff]
  %v2093 = vld [vmem:[#allocation3 + $0x390] sm:$0xff]
  %v2094 = vld [vmem:[#allocation3 + $0x398] sm:$0xff]
  %v2095 = vld [vmem:[#allocation3 + $0x3a0] sm:$0xff]
  %v2096 = vld [vmem:[#allocation3 + $0x3a8] sm:$0xff]
  %v2097 = vld [vmem:[#allocation3 + $0x3b0] sm:$0xff]
  %v2098 = vld [vmem:[#allocation3 + $0x3b8] sm:$0xff]
  %v2099 = vld [vmem:[#allocation3 + $0x3c0] sm:$0xff]
  %v2100 = vld [vmem:[#allocation3 + $0x3c8] sm:$0xff]
  %v2101 = vld [vmem:[#allocation3 + $0x3d0] sm:$0xff]
  %v2102 = vld [vmem:[#allocation3 + $0x3d8] sm:$0xff]
  %v2103 = vld [vmem:[#allocation3 + $0x3e0] sm:$0xff]
  %v2104 = vld [vmem:[#allocation3 + $0x3e8] sm:$0xff]
  %v2105 = vld [vmem:[#allocation3 + $0x3f0] sm:$0xff]
  %v2106 = vld [vmem:[#allocation3 + $0x3f8] sm:$0xff]
  %v2107 = vld [vmem:[#allocation3 + $0x400] sm:$0xff]
  %v2108 = vld [vmem:[#allocation3 + $0x408] sm:$0xff]
  %v2109 = vld [vmem:[#allocation3 + $0x410] sm:$0xff]
  %v2110 = vld [vmem:[#allocation3 + $0x418] sm:$0xff]
  %v2111 = vld [vmem:[#allocation3 + $0x420] sm:$0xff]
  %v2112 = vld [vmem:[#allocation3 + $0x428] sm:$0xff]
  %v2113 = vld [vmem:[#allocation3 + $0x430] sm:$0xff]
  %v2114 = vld [vmem:[#allocation3 + $0x438] sm:$0xff]
  %v2115 = vld [vmem:[#allocation3 + $0x440] sm:$0xff]
  %v2116 = vld [vmem:[#allocation3 + $0x448] sm:$0xff]
  %v2117 = vld [vmem:[#allocation3 + $0x450] sm:$0xff]
  %v2118 = vld [vmem:[#allocation3 + $0x458] sm:$0xff]
  %v2119 = vld [vmem:[#allocation3 + $0x460] sm:$0xff]
  %v2120 = vld [vmem:[#allocation3 + $0x468] sm:$0xff]
  %v2121 = vld [vmem:[#allocation3 + $0x470] sm:$0xff]
  %v2122 = vld [vmem:[#allocation3 + $0x478] sm:$0xff]
  %vm2123 = vcmask 261120
  %v2125 = vsel %vm2123, %v1969, 0
  %v2128 = vsel %vm2123, %v1972, 0
  %v2131 = vsel %vm2123, %v1975, 0
  %v2134 = vsel %vm2123, %v1978, 0
  %2136 = vmatprep.subr.mxu0 %v1980
  %2137 = vmatpush1.msra.mxu0 %v1979
  %2138 = vmatprep.subr.mxu0 %v1984
  %2139 = vmatpush1.msra.mxu0 %v1983
  %2140 = vmatprep.subr.mxu0 %v1988
  %2141 = vmatpush1.msra.mxu0 %v1987
  %2142 = vmatprep.subr.mxu0 %v1992
  %2143 = vmatpush1.msra.mxu0 %v1991
  %2144 = vmatprep.subr.mxu0 %v1996
  %2145 = vmatpush1.msra.mxu0 %v1995
  %2146 = vmatprep.subr.mxu0 %v2000
  %2147 = vmatpush1.msra.mxu0 %v1999
  %2148 = vmatprep.subr.mxu0 %v2004
  %2149 = vmatpush1.msra.mxu0 %v2003
  %2150 = vmatprep.subr.mxu0 %v2008
  %2151 = vmatpush1.msra.mxu0 %v2007
  %2152 = vmatprep.subr.mxu0 %v2012
  %2153 = vmatpush1.msra.mxu0 %v2011
  %2154 = vmatprep.subr.mxu0 %v2016
  %2155 = vmatpush1.msra.mxu0 %v2015
  %2156 = vmatprep.subr.mxu0 %v2020
  %2157 = vmatpush1.msra.mxu0 %v2019
  %2158 = vmatprep.subr.mxu0 %v2024
  %2159 = vmatpush1.msra.mxu0 %v2023
  %2160 = vmatprep.subr.mxu0 %v2028
  %2161 = vmatpush1.msra.mxu0 %v2027
  %2162 = vmatprep.subr.mxu0 %v2032
  %2163 = vmatpush1.msra.mxu0 %v2031
  %2164 = vmatprep.subr.mxu0 %v2036
  %2165 = vmatpush1.msra.mxu0 %v2035
  %2166 = vmatprep.subr.mxu0 %v2040
  %2167 = vmatpush1.msra.mxu0 %v2039
  %2168 = vmatprep.subr.mxu0 %v2044
  %2169 = vmatpush1.msra.mxu0 %v2043
  %2170 = vmatprep.subr.mxu0 %v2048
  %2171 = vmatpush1.msra.mxu0 %v2047
  %2172 = vmatprep.subr.mxu0 %v2052
  %2173 = vmatpush1.msra.mxu0 %v2051
  %2174 = vmatprep.subr.mxu0 %v2056
  %2175 = vmatpush1.msra.mxu0 %v2055
  %2176 = vmatprep.subr.mxu0 %v2060
  %2177 = vmatpush1.msra.mxu0 %v2059
  %2178 = vmatprep.subr.mxu0 %v2064
  %2179 = vmatpush1.msra.mxu0 %v2063
  %2180 = vmatprep.subr.mxu0 %v2068
  %2181 = vmatpush1.msra.mxu0 %v2067
  %2182 = vmatprep.subr.mxu0 %v2072
  %2183 = vmatpush1.msra.mxu0 %v2071
  %2184 = vmatprep.subr.mxu0 %v2076
  %2185 = vmatpush1.msra.mxu0 %v2075
  %2186 = vmatprep.subr.mxu0 %v2080
  %2187 = vmatpush1.msra.mxu0 %v2079
  %2188 = vmatprep.subr.mxu0 %v2084
  %2189 = vmatpush1.msra.mxu0 %v2083
  %2190 = vmatprep.subr.mxu0 %v2088
  %2191 = vmatpush1.msra.mxu0 %v2087
  %2192 = vmatprep.subr.mxu0 %v2092
  %2193 = vmatpush1.msra.mxu0 %v2091
  %2194 = vmatprep.subr.mxu0 %v2096
  %2195 = vmatpush1.msra.mxu0 %v2095
  %2196 = vmatprep.subr.mxu0 %v2100
  %2197 = vmatpush1.msra.mxu0 %v2099
  %2198 = vmatprep.subr.mxu0 %v2104
  %2199 = vmatpush1.msra.mxu0 %v2103
  %2200 = vmatprep.mubr.f32.mxu0 %v1968
  %2201 = vmatmul.mubr.f32.gmra.mrb[0].mxu0 %v1967
  %v2202 = vpop.f32.mrb[0].mxu0
  %v2203 = vadd.f32 0.0, %v2202
  %v2204 = vpop.f32.mrb[0].mxu0
  %v2205 = vadd.f32 0.0, %v2204
  %2206 = vmatprep.mubr.f32.mxu0 %v1971
  %2207 = vmatmul.mubr.f32.gmra.mrb[0].mxu0 %v1970
  %v2208 = vpop.f32.mrb[0].mxu0
  %v2209 = vadd.f32 0.0, %v2208
  %v2210 = vpop.f32.mrb[0].mxu0
  %v2211 = vadd.f32 0.0, %v2210
  %2212 = vmatprep.mubr.f32.mxu0 %v1974
  %2213 = vmatmul.mubr.f32.gmra.mrb[0].mxu0 %v1973
  %v2214 = vpop.f32.mrb[0].mxu0
  %v2215 = vadd.f32 0.0, %v2214
  %v2216 = vpop.f32.mrb[0].mxu0
  %v2217 = vadd.f32 0.0, %v2216
  %2218 = vmatprep.mubr.f32.mxu0 %v1977
  %2219 = vmatmul.mubr.f32.gmra.mrb[0].mxu0 %v1976
  %v2220 = vpop.f32.mrb[0].mxu0
  %v2221 = vadd.f32 0.0, %v2220
  %v2222 = vpop.f32.mrb[0].mxu0
  %v2223 = vadd.f32 0.0, %v2222
  %2224 = vdwg.mxu0
  %2225 = vmatprep.subr.mxu0 %v2108
  %2226 = vmatpush1.msra.mxu0 %v2107
  %2227 = vmatprep.subr.mxu0 %v2112
  %2228 = vmatpush1.msra.mxu0 %v2111
  %2229 = vmatprep.subr.mxu0 %v2116
  %2230 = vmatpush1.msra.mxu0 %v2115
  %2231 = vmatprep.subr.mxu0 %v2120
  %2232 = vmatpush1.msra.mxu0 %v2119
  %2233 = vmatprep.subr.mxu0 0.0
  %2234 = vmatpush1.msra.mxu0 0.0
  %2235 = vmatprep.subr.mxu0 0.0
  %2236 = vmatpush1.msra.mxu0 0.0
  %2237 = vmatprep.subr.mxu0 0.0
  %2238 = vmatpush1.msra.mxu0 0.0
  %2239 = vmatprep.subr.mxu0 0.0
  %2240 = vmatpush1.msra.mxu0 0.0
  %2241 = vmatprep.subr.mxu0 0.0
  %2242 = vmatpush1.msra.mxu0 0.0
  %2243 = vmatprep.subr.mxu0 0.0
  %2244 = vmatpush1.msra.mxu0 0.0
  %2245 = vmatprep.subr.mxu0 0.0
  %2246 = vmatpush1.msra.mxu0 0.0
  %2247 = vmatprep.subr.mxu0 0.0
  %2248 = vmatpush1.msra.mxu0 0.0
  %2249 = vmatprep.subr.mxu0 0.0
  %2250 = vmatpush1.msra.mxu0 0.0
  %2251 = vmatprep.subr.mxu0 0.0
  %2252 = vmatpush1.msra.mxu0 0.0
  %2253 = vmatprep.subr.mxu0 0.0
  %2254 = vmatpush1.msra.mxu0 0.0
  %2255 = vmatprep.subr.mxu0 0.0
  %2256 = vmatpush1.msra.mxu0 0.0
  %2257 = vmatprep.subr.mxu0 0.0
  %2258 = vmatpush1.msra.mxu0 0.0
  %2259 = vmatprep.subr.mxu0 0.0
  %2260 = vmatpush1.msra.mxu0 0.0
  %2261 = vmatprep.subr.mxu0 0.0
  %2262 = vmatpush1.msra.mxu0 0.0
  %2263 = vmatprep.subr.mxu0 0.0
  %2264 = vmatpush1.msra.mxu0 0.0
  %2265 = vmatprep.subr.mxu0 0.0
  %2266 = vmatpush1.msra.mxu0 0.0
  %2267 = vmatprep.subr.mxu0 0.0
  %2268 = vmatpush1.msra.mxu0 0.0
  %2269 = vmatprep.subr.mxu0 0.0
  %2270 = vmatpush1.msra.mxu0 0.0
  %2271 = vmatprep.subr.mxu0 0.0
  %2272 = vmatpush1.msra.mxu0 0.0
  %2273 = vmatprep.subr.mxu0 0.0
  %2274 = vmatpush1.msra.mxu0 0.0
  %2275 = vmatprep.subr.mxu0 0.0
  %2276 = vmatpush1.msra.mxu0 0.0
  %2277 = vmatprep.subr.mxu0 0.0
  %2278 = vmatpush1.msra.mxu0 0.0
  %2279 = vmatprep.subr.mxu0 0.0
  %2280 = vmatpush1.msra.mxu0 0.0
  %2281 = vmatprep.subr.mxu0 0.0
  %2282 = vmatpush1.msra.mxu0 0.0
  %2283 = vmatprep.subr.mxu0 0.0
  %2284 = vmatpush1.msra.mxu0 0.0
  %2285 = vmatprep.subr.mxu0 0.0
  %2286 = vmatpush1.msra.mxu0 0.0
  %2287 = vmatprep.subr.mxu0 0.0
  %2288 = vmatpush1.msra.mxu0 0.0
  %2289 = vmatprep.mubr.f32.mxu0 0.0
  %2290 = vmatmul.mubr.f32.gmra.mrb[0].mxu0 %v2125
  %v2291 = vpop.f32.mrb[0].mxu0
  %v2292 = vadd.f32 %v2203, %v2291
  %v2293 = vpop.f32.mrb[0].mxu0
  %v2294 = vadd.f32 %v2205, %v2293
  %2295 = vmatprep.mubr.f32.mxu0 0.0
  %2296 = vmatmul.mubr.f32.gmra.mrb[0].mxu0 %v2128
  %v2297 = vpop.f32.mrb[0].mxu0
  %v2298 = vadd.f32 %v2209, %v2297
  %v2299 = vpop.f32.mrb[0].mxu0
  %v2300 = vadd.f32 %v2211, %v2299
  %2301 = vmatprep.mubr.f32.mxu0 0.0
  %2302 = vmatmul.mubr.f32.gmra.mrb[0].mxu0 %v2131
  %v2303 = vpop.f32.mrb[0].mxu0
  %v2304 = vadd.f32 %v2215, %v2303
  %v2305 = vpop.f32.mrb[0].mxu0
  %v2306 = vadd.f32 %v2217, %v2305
  %2307 = vmatprep.mubr.f32.mxu0 0.0
  %2308 = vmatmul.mubr.f32.gmra.mrb[0].mxu0 %v2134
  %v2309 = vpop.f32.mrb[0].mxu0
  %v2310 = vadd.f32 %v2221, %v2309
  %v2311 = vpop.f32.mrb[0].mxu0
  %v2312 = vadd.f32 %v2223, %v2311
  %2313 = vdwg.mxu0
  %2314 = vmatprep.subr.mxu0 %v1982
  %2315 = vmatpush1.msra.mxu0 %v1981
  %2316 = vmatprep.subr.mxu0 %v1986
  %2317 = vmatpush1.msra.mxu0 %v1985
  %2318 = vmatprep.subr.mxu0 %v1990
  %2319 = vmatpush1.msra.mxu0 %v1989
  %2320 = vmatprep.subr.mxu0 %v1994
  %2321 = vmatpush1.msra.mxu0 %v1993
  %2322 = vmatprep.subr.mxu0 %v1998
  %2323 = vmatpush1.msra.mxu0 %v1997
  %2324 = vmatprep.subr.mxu0 %v2002
  %2325 = vmatpush1.msra.mxu0 %v2001
  %2326 = vmatprep.subr.mxu0 %v2006
  %2327 = vmatpush1.msra.mxu0 %v2005
  %2328 = vmatprep.subr.mxu0 %v2010
  %2329 = vmatpush1.msra.mxu0 %v2009
  %2330 = vmatprep.subr.mxu0 %v2014
  %2331 = vmatpush1.msra.mxu0 %v2013
  %2332 = vmatprep.subr.mxu0 %v2018
  %2333 = vmatpush1.msra.mxu0 %v2017
  %2334 = vmatprep.subr.mxu0 %v2022
  %2335 = vmatpush1.msra.mxu0 %v2021
  %2336 = vmatprep.subr.mxu0 %v2026
  %2337 = vmatpush1.msra.mxu0 %v2025
  %2338 = vmatprep.subr.mxu0 %v2030
  %2339 = vmatpush1.msra.mxu0 %v2029
  %2340 = vmatprep.subr.mxu0 %v2034
  %2341 = vmatpush1.msra.mxu0 %v2033
  %2342 = vmatprep.subr.mxu0 %v2038
  %2343 = vmatpush1.msra.mxu0 %v2037
  %2344 = vmatprep.subr.mxu0 %v2042
  %2345 = vmatpush1.msra.mxu0 %v2041
  %2346 = vmatprep.subr.mxu0 %v2046
  %2347 = vmatpush1.msra.mxu0 %v2045
  %2348 = vmatprep.subr.mxu0 %v2050
  %2349 = vmatpush1.msra.mxu0 %v2049
  %2350 = vmatprep.subr.mxu0 %v2054
  %2351 = vmatpush1.msra.mxu0 %v2053
  %2352 = vmatprep.subr.mxu0 %v2058
  %2353 = vmatpush1.msra.mxu0 %v2057
  %2354 = vmatprep.subr.mxu0 %v2062
  %2355 = vmatpush1.msra.mxu0 %v2061
  %2356 = vmatprep.subr.mxu0 %v2066
  %2357 = vmatpush1.msra.mxu0 %v2065
  %2358 = vmatprep.subr.mxu0 %v2070
  %2359 = vmatpush1.msra.mxu0 %v2069
  %2360 = vmatprep.subr.mxu0 %v2074
  %2361 = vmatpush1.msra.mxu0 %v2073
  %2362 = vmatprep.subr.mxu0 %v2078
  %2363 = vmatpush1.msra.mxu0 %v2077
  %2364 = vmatprep.subr.mxu0 %v2082
  %2365 = vmatpush1.msra.mxu0 %v2081
  %2366 = vmatprep.subr.mxu0 %v2086
  %2367 = vmatpush1.msra.mxu0 %v2085
  %2368 = vmatprep.subr.mxu0 %v2090
  %2369 = vmatpush1.msra.mxu0 %v2089
  %2370 = vmatprep.subr.mxu0 %v2094
  %2371 = vmatpush1.msra.mxu0 %v2093
  %2372 = vmatprep.subr.mxu0 %v2098
  %2373 = vmatpush1.msra.mxu0 %v2097
  %2374 = vmatprep.subr.mxu0 %v2102
  %2375 = vmatpush1.msra.mxu0 %v2101
  %2376 = vmatprep.subr.mxu0 %v2106
  %2377 = vmatpush1.msra.mxu0 %v2105
  %2378 = vmatprep.mubr.f32.mxu0 %v1968
  %2379 = vmatmul.mubr.f32.gmra.mrb[0].mxu0 %v1967
  %v2380 = vpop.f32.mrb[0].mxu0
  %v2381 = vadd.f32 0.0, %v2380
  %v2382 = vpop.f32.mrb[0].mxu0
  %v2383 = vadd.f32 0.0, %v2382
  %2384 = vmatprep.mubr.f32.mxu0 %v1971
  %2385 = vmatmul.mubr.f32.gmra.mrb[0].mxu0 %v1970
  %v2386 = vpop.f32.mrb[0].mxu0
  %v2387 = vadd.f32 0.0, %v2386
  %v2388 = vpop.f32.mrb[0].mxu0
  %v2389 = vadd.f32 0.0, %v2388
  %2390 = vmatprep.mubr.f32.mxu0 %v1974
  %2391 = vmatmul.mubr.f32.gmra.mrb[0].mxu0 %v1973
  %v2392 = vpop.f32.mrb[0].mxu0
  %v2393 = vadd.f32 0.0, %v2392
  %v2394 = vpop.f32.mrb[0].mxu0
  %v2395 = vadd.f32 0.0, %v2394
  %2396 = vmatprep.mubr.f32.mxu0 %v1977
  %2397 = vmatmul.mubr.f32.gmra.mrb[0].mxu0 %v1976
  %v2398 = vpop.f32.mrb[0].mxu0
  %v2399 = vadd.f32 0.0, %v2398
  %v2400 = vpop.f32.mrb[0].mxu0
  %v2401 = vadd.f32 0.0, %v2400
  %2402 = vdwg.mxu0
  %2403 = vmatprep.subr.mxu0 %v2110
  %2404 = vmatpush1.msra.mxu0 %v2109
  %2405 = vmatprep.subr.mxu0 %v2114
  %2406 = vmatpush1.msra.mxu0 %v2113
  %2407 = vmatprep.subr.mxu0 %v2118
  %2408 = vmatpush1.msra.mxu0 %v2117
  %2409 = vmatprep.subr.mxu0 %v2122
  %2410 = vmatpush1.msra.mxu0 %v2121
  %2411 = vmatprep.subr.mxu0 0.0
  %2412 = vmatpush1.msra.mxu0 0.0
  %2413 = vmatprep.subr.mxu0 0.0
  %2414 = vmatpush1.msra.mxu0 0.0
  %2415 = vmatprep.subr.mxu0 0.0
  %2416 = vmatpush1.msra.mxu0 0.0
  %2417 = vmatprep.subr.mxu0 0.0
  %2418 = vmatpush1.msra.mxu0 0.0
  %2419 = vmatprep.subr.mxu0 0.0
  %2420 = vmatpush1.msra.mxu0 0.0
  %2421 = vmatprep.subr.mxu0 0.0
  %2422 = vmatpush1.msra.mxu0 0.0
  %2423 = vmatprep.subr.mxu0 0.0
  %2424 = vmatpush1.msra.mxu0 0.0
  %2425 = vmatprep.subr.mxu0 0.0
  %2426 = vmatpush1.msra.mxu0 0.0
  %2427 = vmatprep.subr.mxu0 0.0
  %2428 = vmatpush1.msra.mxu0 0.0
  %2429 = vmatprep.subr.mxu0 0.0
  %2430 = vmatpush1.msra.mxu0 0.0
  %2431 = vmatprep.subr.mxu0 0.0
  %2432 = vmatpush1.msra.mxu0 0.0
  %2433 = vmatprep.subr.mxu0 0.0
  %2434 = vmatpush1.msra.mxu0 0.0
  %2435 = vmatprep.subr.mxu0 0.0
  %2436 = vmatpush1.msra.mxu0 0.0
  %2437 = vmatprep.subr.mxu0 0.0
  %2438 = vmatpush1.msra.mxu0 0.0
  %2439 = vmatprep.subr.mxu0 0.0
  %2440 = vmatpush1.msra.mxu0 0.0
  %2441 = vmatprep.subr.mxu0 0.0
  %2442 = vmatpush1.msra.mxu0 0.0
  %2443 = vmatprep.subr.mxu0 0.0
  %2444 = vmatpush1.msra.mxu0 0.0
  %2445 = vmatprep.subr.mxu0 0.0
  %2446 = vmatpush1.msra.mxu0 0.0
  %2447 = vmatprep.subr.mxu0 0.0
  %2448 = vmatpush1.msra.mxu0 0.0
  %2449 = vmatprep.subr.mxu0 0.0
  %2450 = vmatpush1.msra.mxu0 0.0
  %2451 = vmatprep.subr.mxu0 0.0
  %2452 = vmatpush1.msra.mxu0 0.0
  %2453 = vmatprep.subr.mxu0 0.0
  %2454 = vmatpush1.msra.mxu0 0.0
  %2455 = vmatprep.subr.mxu0 0.0
  %2456 = vmatpush1.msra.mxu0 0.0
  %2457 = vmatprep.subr.mxu0 0.0
  %2458 = vmatpush1.msra.mxu0 0.0
  %2459 = vmatprep.subr.mxu0 0.0
  %2460 = vmatpush1.msra.mxu0 0.0
  %2461 = vmatprep.subr.mxu0 0.0
  %2462 = vmatpush1.msra.mxu0 0.0
  %2463 = vmatprep.subr.mxu0 0.0
  %2464 = vmatpush1.msra.mxu0 0.0
  %2465 = vmatprep.subr.mxu0 0.0
  %2466 = vmatpush1.msra.mxu0 0.0
  %2467 = vmatprep.mubr.f32.mxu0 0.0
  %2468 = vmatmul.mubr.f32.gmra.mrb[0].mxu0 %v2125
  %v2469 = vpop.f32.mrb[0].mxu0
  %v2470 = vadd.f32 %v2381, %v2469
  %v2471 = vpop.f32.mrb[0].mxu0
  %v2472 = vadd.f32 %v2383, %v2471
  %2473 = vmatprep.mubr.f32.mxu0 0.0
  %2474 = vmatmul.mubr.f32.gmra.mrb[0].mxu0 %v2128
  %v2475 = vpop.f32.mrb[0].mxu0
  %v2476 = vadd.f32 %v2387, %v2475
  %v2477 = vpop.f32.mrb[0].mxu0
  %v2478 = vadd.f32 %v2389, %v2477
  %2479 = vmatprep.mubr.f32.mxu0 0.0
  %2480 = vmatmul.mubr.f32.gmra.mrb[0].mxu0 %v2131
  %v2481 = vpop.f32.mrb[0].mxu0
  %v2482 = vadd.f32 %v2393, %v2481
  %v2483 = vpop.f32.mrb[0].mxu0
  %v2484 = vadd.f32 %v2395, %v2483
  %2485 = vmatprep.mubr.f32.mxu0 0.0
  %2486 = vmatmul.mubr.f32.gmra.mrb[0].mxu0 %v2134
  %v2487 = vpop.f32.mrb[0].mxu0
  %v2488 = vadd.f32 %v2399, %v2487
  %v2489 = vpop.f32.mrb[0].mxu0
  %v2490 = vadd.f32 %v2401, %v2489
  %2491 = vdwg.mxu0
  %v2492 = vmax.f32 %v2292, 0.0
  %v2493 = vmax.f32 %v2294, 0.0
  %v2494 = vmax.f32 %v2470, 0.0
  %v2495 = vmax.f32 %v2472, 0.0
  %v2496 = vmax.f32 %v2298, 0.0
  %v2497 = vmax.f32 %v2300, 0.0
  %v2498 = vmax.f32 %v2476, 0.0
  %v2499 = vmax.f32 %v2478, 0.0
  %v2500 = vmax.f32 %v2304, 0.0
  %v2501 = vmax.f32 %v2306, 0.0
  %v2502 = vmax.f32 %v2482, 0.0
  %v2503 = vmax.f32 %v2484, 0.0
  %v2504 = vmax.f32 %v2310, 0.0
  %v2505 = vmax.f32 %v2312, 0.0
  %v2506 = vmax.f32 %v2488, 0.0
  %v2507 = vmax.f32 %v2490, 0.0
  %2508 = vst [vmem:[#allocation2 + $0x8] sm:$0xff] %v2492
  %2509 = vst [vmem:[#allocation2 + $0x10] sm:$0xff] %v2493
  %2510 = vst [vmem:[#allocation2 + $0x48] sm:$0xff] %v2496
  %2511 = vst [vmem:[#allocation2 + $0x50] sm:$0xff] %v2497
  %2512 = vst [vmem:[#allocation2 + $0x88] sm:$0xff] %v2500
  %2513 = vst [vmem:[#allocation2 + $0x90] sm:$0xff] %v2501
  %2514 = vst [vmem:[#allocation2 + $0xc8] sm:$0xff] %v2504
  %2515 = vst [vmem:[#allocation2 + $0xd0] sm:$0xff] %v2505
  %2516 = vst [vmem:[#allocation2 + $0x28] sm:$0xff] %v2494
  %2517 = vst [vmem:[#allocation2 + $0x30] sm:$0xff] %v2495
  %2518 = vst [vmem:[#allocation2 + $0x68] sm:$0xff] %v2498
  %2519 = vst [vmem:[#allocation2 + $0x70] sm:$0xff] %v2499
  %2520 = vst [vmem:[#allocation2 + $0xa8] sm:$0xff] %v2502
  %2521 = vst [vmem:[#allocation2 + $0xb0] sm:$0xff] %v2503
  %2522 = vst [vmem:[#allocation2 + $0xe8] sm:$0xff] %v2506
  %2523 = vst [vmem:[#allocation2 + $0xf0] sm:$0xff] %v2507
  %v2524 = vld [vmem:[#allocation2] sm:$0xff]
  %v2525 = vld [vmem:[#allocation2 + $0x8] sm:$0xff]
  %v2526 = vld [vmem:[#allocation2 + $0x10] sm:$0xff]
  %v2527 = vld [vmem:[#allocation2 + $0x40] sm:$0xff]
  %v2528 = vld [vmem:[#allocation2 + $0x48] sm:$0xff]
  %v2529 = vld [vmem:[#allocation2 + $0x50] sm:$0xff]
  %v2530 = vld [vmem:[#allocation2 + $0x80] sm:$0xff]
  %v2531 = vld [vmem:[#allocation2 + $0x88] sm:$0xff]
  %v2532 = vld [vmem:[#allocation2 + $0x90] sm:$0xff]
  %v2533 = vld [vmem:[#allocation2 + $0xc0] sm:$0xff]
  %v2534 = vld [vmem:[#allocation2 + $0xc8] sm:$0xff]
  %v2535 = vld [vmem:[#allocation2 + $0xd0] sm:$0xff]
  %2548 = vrot.lane.b32.xlu0 %v2524, 17
  %v2549 = vpop.permute.xlu0 %2548
  %2550 = vrot.lane.b32.xlu0 %v2525, 17
  %v2551 = vpop.permute.xlu0 %2550
  %2552 = vrot.lane.b32.xlu0 %v2526, 17
  %v2553 = vpop.permute.xlu0 %2552
  %2554 = vrot.lane.b32.xlu0 %v2527, 17
  %v2555 = vpop.permute.xlu0 %2554
  %2556 = vrot.lane.b32.xlu0 %v2528, 17
  %v2557 = vpop.permute.xlu0 %2556
  %2558 = vrot.lane.b32.xlu0 %v2529, 17
  %v2559 = vpop.permute.xlu0 %2558
  %2560 = vrot.lane.b32.xlu0 %v2530, 17
  %v2561 = vpop.permute.xlu0 %2560
  %2562 = vrot.lane.b32.xlu0 %v2531, 17
  %v2563 = vpop.permute.xlu0 %2562
  %2564 = vrot.lane.b32.xlu0 %v2532, 17
  %v2565 = vpop.permute.xlu0 %2564
  %2566 = vrot.lane.b32.xlu0 %v2533, 17
  %v2567 = vpop.permute.xlu0 %2566
  %2568 = vrot.lane.b32.xlu0 %v2534, 17
  %v2569 = vpop.permute.xlu0 %2568
  %2570 = vrot.lane.b32.xlu0 %v2535, 17
  %v2571 = vpop.permute.xlu0 %2570
  %v2572 = vsel %vm104, %v2549, %v2551
  %v2573 = vsel %vm104, %v2551, %v2553
  %v2574 = vsel %vm104, %v2555, %v2557
  %v2575 = vsel %vm104, %v2557, %v2559
  %v2576 = vsel %vm104, %v2561, %v2563
  %v2577 = vsel %vm104, %v2563, %v2565
  %v2578 = vsel %vm104, %v2567, %v2569
  %v2579 = vsel %vm104, %v2569, %v2571
  %v2588 = vsel %vm93, %v2572, 0.0
  %v2589 = vsel %vm94, %v2573, 0.0
  %v2590 = vsel %vm93, %v2574, 0.0
  %v2591 = vsel %vm94, %v2575, 0.0
  %v2592 = vsel %vm93, %v2576, 0.0
  %v2593 = vsel %vm94, %v2577, 0.0
  %v2594 = vsel %vm93, %v2578, 0.0
  %v2595 = vsel %vm94, %v2579, 0.0
  %2596 = vst [vmem:[#allocation3] sm:$0xff] %v2588
  %2597 = vst [vmem:[#allocation3 + $0x8] sm:$0xff] %v2589
  %2598 = vst [vmem:[#allocation3 + $0x20] sm:$0xff] %v2590
  %2599 = vst [vmem:[#allocation3 + $0x28] sm:$0xff] %v2591
  %2600 = vst [vmem:[#allocation3 + $0x40] sm:$0xff] %v2592
  %2601 = vst [vmem:[#allocation3 + $0x48] sm:$0xff] %v2593
  %2602 = vst [vmem:[#allocation3 + $0x60] sm:$0xff] %v2594
  %2603 = vst [vmem:[#allocation3 + $0x68] sm:$0xff] %v2595
  %v2604 = vld [vmem:[#allocation2 + $0x20] sm:$0xff]
  %v2605 = vld [vmem:[#allocation2 + $0x28] sm:$0xff]
  %v2606 = vld [vmem:[#allocation2 + $0x30] sm:$0xff]
  %v2607 = vld [vmem:[#allocation2 + $0x60] sm:$0xff]
  %v2608 = vld [vmem:[#allocation2 + $0x68] sm:$0xff]
  %v2609 = vld [vmem:[#allocation2 + $0x70] sm:$0xff]
  %v2610 = vld [vmem:[#allocation2 + $0xa0] sm:$0xff]
  %v2611 = vld [vmem:[#allocation2 + $0xa8] sm:$0xff]
  %v2612 = vld [vmem:[#allocation2 + $0xb0] sm:$0xff]
  %v2613 = vld [vmem:[#allocation2 + $0xe0] sm:$0xff]
  %v2614 = vld [vmem:[#allocation2 + $0xe8] sm:$0xff]
  %v2615 = vld [vmem:[#allocation2 + $0xf0] sm:$0xff]
  %2628 = vrot.lane.b32.xlu0 %v2604, 17
  %v2629 = vpop.permute.xlu0 %2628
  %2630 = vrot.lane.b32.xlu0 %v2605, 17
  %v2631 = vpop.permute.xlu0 %2630
  %2632 = vrot.lane.b32.xlu0 %v2606, 17
  %v2633 = vpop.permute.xlu0 %2632
  %2634 = vrot.lane.b32.xlu0 %v2607, 17
  %v2635 = vpop.permute.xlu0 %2634
  %2636 = vrot.lane.b32.xlu0 %v2608, 17
  %v2637 = vpop.permute.xlu0 %2636
  %2638 = vrot.lane.b32.xlu0 %v2609, 17
  %v2639 = vpop.permute.xlu0 %2638
  %2640 = vrot.lane.b32.xlu0 %v2610, 17
  %v2641 = vpop.permute.xlu0 %2640
  %2642 = vrot.lane.b32.xlu0 %v2611, 17
  %v2643 = vpop.permute.xlu0 %2642
  %2644 = vrot.lane.b32.xlu0 %v2612, 17
  %v2645 = vpop.permute.xlu0 %2644
  %2646 = vrot.lane.b32.xlu0 %v2613, 17
  %v2647 = vpop.permute.xlu0 %2646
  %2648 = vrot.lane.b32.xlu0 %v2614, 17
  %v2649 = vpop.permute.xlu0 %2648
  %2650 = vrot.lane.b32.xlu0 %v2615, 17
  %v2651 = vpop.permute.xlu0 %2650
  %v2652 = vsel %vm104, %v2629, %v2631
  %v2653 = vsel %vm104, %v2631, %v2633
  %v2654 = vsel %vm104, %v2635, %v2637
  %v2655 = vsel %vm104, %v2637, %v2639
  %v2656 = vsel %vm104, %v2641, %v2643
  %v2657 = vsel %vm104, %v2643, %v2645
  %v2658 = vsel %vm104, %v2647, %v2649
  %v2659 = vsel %vm104, %v2649, %v2651
  %v2668 = vsel %vm93, %v2652, 0.0
  %v2669 = vsel %vm94, %v2653, 0.0
  %v2670 = vsel %vm93, %v2654, 0.0
  %v2671 = vsel %vm94, %v2655, 0.0
  %v2672 = vsel %vm93, %v2656, 0.0
  %v2673 = vsel %vm94, %v2657, 0.0
  %v2674 = vsel %vm93, %v2658, 0.0
  %v2675 = vsel %vm94, %v2659, 0.0
  %2676 = vst [vmem:[#allocation3 + $0x10] sm:$0xff] %v2668
  %2677 = vst [vmem:[#allocation3 + $0x18] sm:$0xff] %v2669
  %2678 = vst [vmem:[#allocation3 + $0x30] sm:$0xff] %v2670
  %2679 = vst [vmem:[#allocation3 + $0x38] sm:$0xff] %v2671
  %2680 = vst [vmem:[#allocation3 + $0x50] sm:$0xff] %v2672
  %2681 = vst [vmem:[#allocation3 + $0x58] sm:$0xff] %v2673
  %2682 = vst [vmem:[#allocation3 + $0x70] sm:$0xff] %v2674
  %2683 = vst [vmem:[#allocation3 + $0x78] sm:$0xff] %v2675
  %v2684 = vld [vmem:[#allocation2] sm:$0xff]
  %v2685 = vld [vmem:[#allocation2 + $0x8] sm:$0xff]
  %v2686 = vld [vmem:[#allocation2 + $0x10] sm:$0xff]
  %v2687 = vld [vmem:[#allocation2 + $0x40] sm:$0xff]
  %v2688 = vld [vmem:[#allocation2 + $0x48] sm:$0xff]
  %v2689 = vld [vmem:[#allocation2 + $0x50] sm:$0xff]
  %v2690 = vld [vmem:[#allocation2 + $0x80] sm:$0xff]
  %v2691 = vld [vmem:[#allocation2 + $0x88] sm:$0xff]
  %v2692 = vld [vmem:[#allocation2 + $0x90] sm:$0xff]
  %v2693 = vld [vmem:[#allocation2 + $0xc0] sm:$0xff]
  %v2694 = vld [vmem:[#allocation2 + $0xc8] sm:$0xff]
  %v2695 = vld [vmem:[#allocation2 + $0xd0] sm:$0xff]
  %2708 = vrot.lane.b32.xlu0 %v2684, 16
  %v2709 = vpop.permute.xlu0 %2708
  %2710 = vrot.lane.b32.xlu0 %v2685, 16
  %v2711 = vpop.permute.xlu0 %2710
  %2712 = vrot.lane.b32.xlu0 %v2686, 16
  %v2713 = vpop.permute.xlu0 %2712
  %2714 = vrot.lane.b32.xlu0 %v2687, 16
  %v2715 = vpop.permute.xlu0 %2714
  %2716 = vrot.lane.b32.xlu0 %v2688, 16
  %v2717 = vpop.permute.xlu0 %2716
  %2718 = vrot.lane.b32.xlu0 %v2689, 16
  %v2719 = vpop.permute.xlu0 %2718
  %2720 = vrot.lane.b32.xlu0 %v2690, 16
  %v2721 = vpop.permute.xlu0 %2720
  %2722 = vrot.lane.b32.xlu0 %v2691, 16
  %v2723 = vpop.permute.xlu0 %2722
  %2724 = vrot.lane.b32.xlu0 %v2692, 16
  %v2725 = vpop.permute.xlu0 %2724
  %2726 = vrot.lane.b32.xlu0 %v2693, 16
  %v2727 = vpop.permute.xlu0 %2726
  %2728 = vrot.lane.b32.xlu0 %v2694, 16
  %v2729 = vpop.permute.xlu0 %2728
  %2730 = vrot.lane.b32.xlu0 %v2695, 16
  %v2731 = vpop.permute.xlu0 %2730
  %v2732 = vsel %vm145, %v2709, %v2711
  %v2733 = vsel %vm145, %v2711, %v2713
  %v2734 = vsel %vm145, %v2715, %v2717
  %v2735 = vsel %vm145, %v2717, %v2719
  %v2736 = vsel %vm145, %v2721, %v2723
  %v2737 = vsel %vm145, %v2723, %v2725
  %v2738 = vsel %vm145, %v2727, %v2729
  %v2739 = vsel %vm145, %v2729, %v2731
  %2748 = vst [vmem:[#allocation3 + $0x80] sm:$0xff] %v2732
  %2749 = vst [vmem:[#allocation3 + $0x88] sm:$0xff] %v2733
  %2750 = vst [vmem:[#allocation3 + $0xa0] sm:$0xff] %v2734
  %2751 = vst [vmem:[#allocation3 + $0xa8] sm:$0xff] %v2735
  %2752 = vst [vmem:[#allocation3 + $0xc0] sm:$0xff] %v2736
  %2753 = vst [vmem:[#allocation3 + $0xc8] sm:$0xff] %v2737
  %2754 = vst [vmem:[#allocation3 + $0xe0] sm:$0xff] %v2738
  %2755 = vst [vmem:[#allocation3 + $0xe8] sm:$0xff] %v2739
  %v2756 = vld [vmem:[#allocation2 + $0x20] sm:$0xff]
  %v2757 = vld [vmem:[#allocation2 + $0x28] sm:$0xff]
  %v2758 = vld [vmem:[#allocation2 + $0x30] sm:$0xff]
  %v2759 = vld [vmem:[#allocation2 + $0x60] sm:$0xff]
  %v2760 = vld [vmem:[#allocation2 + $0x68] sm:$0xff]
  %v2761 = vld [vmem:[#allocation2 + $0x70] sm:$0xff]
  %v2762 = vld [vmem:[#allocation2 + $0xa0] sm:$0xff]
  %v2763 = vld [vmem:[#allocation2 + $0xa8] sm:$0xff]
  %v2764 = vld [vmem:[#allocation2 + $0xb0] sm:$0xff]
  %v2765 = vld [vmem:[#allocation2 + $0xe0] sm:$0xff]
  %v2766 = vld [vmem:[#allocation2 + $0xe8] sm:$0xff]
  %v2767 = vld [vmem:[#allocation2 + $0xf0] sm:$0xff]
  %2780 = vrot.lane.b32.xlu0 %v2756, 16
  %v2781 = vpop.permute.xlu0 %2780
  %2782 = vrot.lane.b32.xlu0 %v2757, 16
  %v2783 = vpop.permute.xlu0 %2782
  %2784 = vrot.lane.b32.xlu0 %v2758, 16
  %v2785 = vpop.permute.xlu0 %2784
  %2786 = vrot.lane.b32.xlu0 %v2759, 16
  %v2787 = vpop.permute.xlu0 %2786
  %2788 = vrot.lane.b32.xlu0 %v2760, 16
  %v2789 = vpop.permute.xlu0 %2788
  %2790 = vrot.lane.b32.xlu0 %v2761, 16
  %v2791 = vpop.permute.xlu0 %2790
  %2792 = vrot.lane.b32.xlu0 %v2762, 16
  %v2793 = vpop.permute.xlu0 %2792
  %2794 = vrot.lane.b32.xlu0 %v2763, 16
  %v2795 = vpop.permute.xlu0 %2794
  %2796 = vrot.lane.b32.xlu0 %v2764, 16
  %v2797 = vpop.permute.xlu0 %2796
  %2798 = vrot.lane.b32.xlu0 %v2765, 16
  %v2799 = vpop.permute.xlu0 %2798
  %2800 = vrot.lane.b32.xlu0 %v2766, 16
  %v2801 = vpop.permute.xlu0 %2800
  %2802 = vrot.lane.b32.xlu0 %v2767, 16
  %v2803 = vpop.permute.xlu0 %2802
  %v2804 = vsel %vm145, %v2781, %v2783
  %v2805 = vsel %vm145, %v2783, %v2785
  %v2806 = vsel %vm145, %v2787, %v2789
  %v2807 = vsel %vm145, %v2789, %v2791
  %v2808 = vsel %vm145, %v2793, %v2795
  %v2809 = vsel %vm145, %v2795, %v2797
  %v2810 = vsel %vm145, %v2799, %v2801
  %v2811 = vsel %vm145, %v2801, %v2803
  %2820 = vst [vmem:[#allocation3 + $0x90] sm:$0xff] %v2804
  %2821 = vst [vmem:[#allocation3 + $0x98] sm:$0xff] %v2805
  %2822 = vst [vmem:[#allocation3 + $0xb0] sm:$0xff] %v2806
  %2823 = vst [vmem:[#allocation3 + $0xb8] sm:$0xff] %v2807
  %2824 = vst [vmem:[#allocation3 + $0xd0] sm:$0xff] %v2808
  %2825 = vst [vmem:[#allocation3 + $0xd8] sm:$0xff] %v2809
  %2826 = vst [vmem:[#allocation3 + $0xf0] sm:$0xff] %v2810
  %2827 = vst [vmem:[#allocation3 + $0xf8] sm:$0xff] %v2811
  %v2828 = vld [vmem:[#allocation2] sm:$0xff]
  %v2829 = vld [vmem:[#allocation2 + $0x8] sm:$0xff]
  %v2830 = vld [vmem:[#allocation2 + $0x10] sm:$0xff]
  %v2831 = vld [vmem:[#allocation2 + $0x40] sm:$0xff]
  %v2832 = vld [vmem:[#allocation2 + $0x48] sm:$0xff]
  %v2833 = vld [vmem:[#allocation2 + $0x50] sm:$0xff]
  %v2834 = vld [vmem:[#allocation2 + $0x80] sm:$0xff]
  %v2835 = vld [vmem:[#allocation2 + $0x88] sm:$0xff]
  %v2836 = vld [vmem:[#allocation2 + $0x90] sm:$0xff]
  %v2837 = vld [vmem:[#allocation2 + $0xc0] sm:$0xff]
  %v2838 = vld [vmem:[#allocation2 + $0xc8] sm:$0xff]
  %v2839 = vld [vmem:[#allocation2 + $0xd0] sm:$0xff]
  %2852 = vrot.lane.b32.xlu0 %v2828, 15
  %v2853 = vpop.permute.xlu0 %2852
  %2854 = vrot.lane.b32.xlu0 %v2829, 15
  %v2855 = vpop.permute.xlu0 %2854
  %2856 = vrot.lane.b32.xlu0 %v2830, 15
  %v2857 = vpop.permute.xlu0 %2856
  %2858 = vrot.lane.b32.xlu0 %v2831, 15
  %v2859 = vpop.permute.xlu0 %2858
  %2860 = vrot.lane.b32.xlu0 %v2832, 15
  %v2861 = vpop.permute.xlu0 %2860
  %2862 = vrot.lane.b32.xlu0 %v2833, 15
  %v2863 = vpop.permute.xlu0 %2862
  %2864 = vrot.lane.b32.xlu0 %v2834, 15
  %v2865 = vpop.permute.xlu0 %2864
  %2866 = vrot.lane.b32.xlu0 %v2835, 15
  %v2867 = vpop.permute.xlu0 %2866
  %2868 = vrot.lane.b32.xlu0 %v2836, 15
  %v2869 = vpop.permute.xlu0 %2868
  %2870 = vrot.lane.b32.xlu0 %v2837, 15
  %v2871 = vpop.permute.xlu0 %2870
  %2872 = vrot.lane.b32.xlu0 %v2838, 15
  %v2873 = vpop.permute.xlu0 %2872
  %2874 = vrot.lane.b32.xlu0 %v2839, 15
  %v2875 = vpop.permute.xlu0 %2874
  %v2876 = vsel %vm186, %v2853, %v2855
  %v2877 = vsel %vm186, %v2855, %v2857
  %v2878 = vsel %vm186, %v2859, %v2861
  %v2879 = vsel %vm186, %v2861, %v2863
  %v2880 = vsel %vm186, %v2865, %v2867
  %v2881 = vsel %vm186, %v2867, %v2869
  %v2882 = vsel %vm186, %v2871, %v2873
  %v2883 = vsel %vm186, %v2873, %v2875
  %v2892 = vsel %vm175, %v2876, 0.0
  %v2893 = vsel %vm176, %v2877, 0.0
  %v2894 = vsel %vm175, %v2878, 0.0
  %v2895 = vsel %vm176, %v2879, 0.0
  %v2896 = vsel %vm175, %v2880, 0.0
  %v2897 = vsel %vm176, %v2881, 0.0
  %v2898 = vsel %vm175, %v2882, 0.0
  %v2899 = vsel %vm176, %v2883, 0.0
  %2900 = vst [vmem:[#allocation3 + $0x100] sm:$0xff] %v2892
  %2901 = vst [vmem:[#allocation3 + $0x108] sm:$0xff] %v2893
  %2902 = vst [vmem:[#allocation3 + $0x120] sm:$0xff] %v2894
  %2903 = vst [vmem:[#allocation3 + $0x128] sm:$0xff] %v2895
  %2904 = vst [vmem:[#allocation3 + $0x140] sm:$0xff] %v2896
  %2905 = vst [vmem:[#allocation3 + $0x148] sm:$0xff] %v2897
  %2906 = vst [vmem:[#allocation3 + $0x160] sm:$0xff] %v2898
  %2907 = vst [vmem:[#allocation3 + $0x168] sm:$0xff] %v2899
  %v2908 = vld [vmem:[#allocation2 + $0x20] sm:$0xff]
  %v2909 = vld [vmem:[#allocation2 + $0x28] sm:$0xff]
  %v2910 = vld [vmem:[#allocation2 + $0x30] sm:$0xff]
  %v2911 = vld [vmem:[#allocation2 + $0x60] sm:$0xff]
  %v2912 = vld [vmem:[#allocation2 + $0x68] sm:$0xff]
  %v2913 = vld [vmem:[#allocation2 + $0x70] sm:$0xff]
  %v2914 = vld [vmem:[#allocation2 + $0xa0] sm:$0xff]
  %v2915 = vld [vmem:[#allocation2 + $0xa8] sm:$0xff]
  %v2916 = vld [vmem:[#allocation2 + $0xb0] sm:$0xff]
  %v2917 = vld [vmem:[#allocation2 + $0xe0] sm:$0xff]
  %v2918 = vld [vmem:[#allocation2 + $0xe8] sm:$0xff]
  %v2919 = vld [vmem:[#allocation2 + $0xf0] sm:$0xff]
  %2932 = vrot.lane.b32.xlu0 %v2908, 15
  %v2933 = vpop.permute.xlu0 %2932
  %2934 = vrot.lane.b32.xlu0 %v2909, 15
  %v2935 = vpop.permute.xlu0 %2934
  %2936 = vrot.lane.b32.xlu0 %v2910, 15
  %v2937 = vpop.permute.xlu0 %2936
  %2938 = vrot.lane.b32.xlu0 %v2911, 15
  %v2939 = vpop.permute.xlu0 %2938
  %2940 = vrot.lane.b32.xlu0 %v2912, 15
  %v2941 = vpop.permute.xlu0 %2940
  %2942 = vrot.lane.b32.xlu0 %v2913, 15
  %v2943 = vpop.permute.xlu0 %2942
  %2944 = vrot.lane.b32.xlu0 %v2914, 15
  %v2945 = vpop.permute.xlu0 %2944
  %2946 = vrot.lane.b32.xlu0 %v2915, 15
  %v2947 = vpop.permute.xlu0 %2946
  %2948 = vrot.lane.b32.xlu0 %v2916, 15
  %v2949 = vpop.permute.xlu0 %2948
  %2950 = vrot.lane.b32.xlu0 %v2917, 15
  %v2951 = vpop.permute.xlu0 %2950
  %2952 = vrot.lane.b32.xlu0 %v2918, 15
  %v2953 = vpop.permute.xlu0 %2952
  %2954 = vrot.lane.b32.xlu0 %v2919, 15
  %v2955 = vpop.permute.xlu0 %2954
  %v2956 = vsel %vm186, %v2933, %v2935
  %v2957 = vsel %vm186, %v2935, %v2937
  %v2958 = vsel %vm186, %v2939, %v2941
  %v2959 = vsel %vm186, %v2941, %v2943
  %v2960 = vsel %vm186, %v2945, %v2947
  %v2961 = vsel %vm186, %v2947, %v2949
  %v2962 = vsel %vm186, %v2951, %v2953
  %v2963 = vsel %vm186, %v2953, %v2955
  %v2972 = vsel %vm175, %v2956, 0.0
  %v2973 = vsel %vm176, %v2957, 0.0
  %v2974 = vsel %vm175, %v2958, 0.0
  %v2975 = vsel %vm176, %v2959, 0.0
  %v2976 = vsel %vm175, %v2960, 0.0
  %v2977 = vsel %vm176, %v2961, 0.0
  %v2978 = vsel %vm175, %v2962, 0.0
  %v2979 = vsel %vm176, %v2963, 0.0
  %2980 = vst [vmem:[#allocation3 + $0x110] sm:$0xff] %v2972
  %2981 = vst [vmem:[#allocation3 + $0x118] sm:$0xff] %v2973
  %2982 = vst [vmem:[#allocation3 + $0x130] sm:$0xff] %v2974
  %2983 = vst [vmem:[#allocation3 + $0x138] sm:$0xff] %v2975
  %2984 = vst [vmem:[#allocation3 + $0x150] sm:$0xff] %v2976
  %2985 = vst [vmem:[#allocation3 + $0x158] sm:$0xff] %v2977
  %2986 = vst [vmem:[#allocation3 + $0x170] sm:$0xff] %v2978
  %2987 = vst [vmem:[#allocation3 + $0x178] sm:$0xff] %v2979
  %v2988 = vld [vmem:[#allocation2] sm:$0xff]
  %v2989 = vld [vmem:[#allocation2 + $0x8] sm:$0xff]
  %v2990 = vld [vmem:[#allocation2 + $0x10] sm:$0xff]
  %v2991 = vld [vmem:[#allocation2 + $0x40] sm:$0xff]
  %v2992 = vld [vmem:[#allocation2 + $0x48] sm:$0xff]
  %v2993 = vld [vmem:[#allocation2 + $0x50] sm:$0xff]
  %v2994 = vld [vmem:[#allocation2 + $0x80] sm:$0xff]
  %v2995 = vld [vmem:[#allocation2 + $0x88] sm:$0xff]
  %v2996 = vld [vmem:[#allocation2 + $0x90] sm:$0xff]
  %v2997 = vld [vmem:[#allocation2 + $0xc0] sm:$0xff]
  %v2998 = vld [vmem:[#allocation2 + $0xc8] sm:$0xff]
  %v2999 = vld [vmem:[#allocation2 + $0xd0] sm:$0xff]
  %3012 = vrot.lane.b32.xlu0 %v2988, 1
  %v3013 = vpop.permute.xlu0 %3012
  %3014 = vrot.lane.b32.xlu0 %v2989, 1
  %v3015 = vpop.permute.xlu0 %3014
  %3016 = vrot.lane.b32.xlu0 %v2990, 1
  %v3017 = vpop.permute.xlu0 %3016
  %3018 = vrot.lane.b32.xlu0 %v2991, 1
  %v3019 = vpop.permute.xlu0 %3018
  %3020 = vrot.lane.b32.xlu0 %v2992, 1
  %v3021 = vpop.permute.xlu0 %3020
  %3022 = vrot.lane.b32.xlu0 %v2993, 1
  %v3023 = vpop.permute.xlu0 %3022
  %3024 = vrot.lane.b32.xlu0 %v2994, 1
  %v3025 = vpop.permute.xlu0 %3024
  %3026 = vrot.lane.b32.xlu0 %v2995, 1
  %v3027 = vpop.permute.xlu0 %3026
  %3028 = vrot.lane.b32.xlu0 %v2996, 1
  %v3029 = vpop.permute.xlu0 %3028
  %3030 = vrot.lane.b32.xlu0 %v2997, 1
  %v3031 = vpop.permute.xlu0 %3030
  %3032 = vrot.lane.b32.xlu0 %v2998, 1
  %v3033 = vpop.permute.xlu0 %3032
  %3034 = vrot.lane.b32.xlu0 %v2999, 1
  %v3035 = vpop.permute.xlu0 %3034
  %v3036 = vsel %vm227, %v3013, %v3015
  %v3037 = vsel %vm227, %v3015, %v3017
  %v3038 = vsel %vm227, %v3019, %v3021
  %v3039 = vsel %vm227, %v3021, %v3023
  %v3040 = vsel %vm227, %v3025, %v3027
  %v3041 = vsel %vm227, %v3027, %v3029
  %v3042 = vsel %vm227, %v3031, %v3033
  %v3043 = vsel %vm227, %v3033, %v3035
  %v3052 = vsel %vm93, %v3036, 0.0
  %v3053 = vsel %vm94, %v3037, 0.0
  %v3054 = vsel %vm93, %v3038, 0.0
  %v3055 = vsel %vm94, %v3039, 0.0
  %v3056 = vsel %vm93, %v3040, 0.0
  %v3057 = vsel %vm94, %v3041, 0.0
  %v3058 = vsel %vm93, %v3042, 0.0
  %v3059 = vsel %vm94, %v3043, 0.0
  %3060 = vst [vmem:[#allocation3 + $0x180] sm:$0xff] %v3052
  %3061 = vst [vmem:[#allocation3 + $0x188] sm:$0xff] %v3053
  %3062 = vst [vmem:[#allocation3 + $0x1a0] sm:$0xff] %v3054
  %3063 = vst [vmem:[#allocation3 + $0x1a8] sm:$0xff] %v3055
  %3064 = vst [vmem:[#allocation3 + $0x1c0] sm:$0xff] %v3056
  %3065 = vst [vmem:[#allocation3 + $0x1c8] sm:$0xff] %v3057
  %3066 = vst [vmem:[#allocation3 + $0x1e0] sm:$0xff] %v3058
  %3067 = vst [vmem:[#allocation3 + $0x1e8] sm:$0xff] %v3059
  %v3068 = vld [vmem:[#allocation2 + $0x20] sm:$0xff]
  %v3069 = vld [vmem:[#allocation2 + $0x28] sm:$0xff]
  %v3070 = vld [vmem:[#allocation2 + $0x30] sm:$0xff]
  %v3071 = vld [vmem:[#allocation2 + $0x60] sm:$0xff]
  %v3072 = vld [vmem:[#allocation2 + $0x68] sm:$0xff]
  %v3073 = vld [vmem:[#allocation2 + $0x70] sm:$0xff]
  %v3074 = vld [vmem:[#allocation2 + $0xa0] sm:$0xff]
  %v3075 = vld [vmem:[#allocation2 + $0xa8] sm:$0xff]
  %v3076 = vld [vmem:[#allocation2 + $0xb0] sm:$0xff]
  %v3077 = vld [vmem:[#allocation2 + $0xe0] sm:$0xff]
  %v3078 = vld [vmem:[#allocation2 + $0xe8] sm:$0xff]
  %v3079 = vld [vmem:[#allocation2 + $0xf0] sm:$0xff]
  %3092 = vrot.lane.b32.xlu0 %v3068, 1
  %v3093 = vpop.permute.xlu0 %3092
  %3094 = vrot.lane.b32.xlu0 %v3069, 1
  %v3095 = vpop.permute.xlu0 %3094
  %3096 = vrot.lane.b32.xlu0 %v3070, 1
  %v3097 = vpop.permute.xlu0 %3096
  %3098 = vrot.lane.b32.xlu0 %v3071, 1
  %v3099 = vpop.permute.xlu0 %3098
  %3100 = vrot.lane.b32.xlu0 %v3072, 1
  %v3101 = vpop.permute.xlu0 %3100
  %3102 = vrot.lane.b32.xlu0 %v3073, 1
  %v3103 = vpop.permute.xlu0 %3102
  %3104 = vrot.lane.b32.xlu0 %v3074, 1
  %v3105 = vpop.permute.xlu0 %3104
  %3106 = vrot.lane.b32.xlu0 %v3075, 1
  %v3107 = vpop.permute.xlu0 %3106
  %3108 = vrot.lane.b32.xlu0 %v3076, 1
  %v3109 = vpop.permute.xlu0 %3108
  %3110 = vrot.lane.b32.xlu0 %v3077, 1
  %v3111 = vpop.permute.xlu0 %3110
  %3112 = vrot.lane.b32.xlu0 %v3078, 1
  %v3113 = vpop.permute.xlu0 %3112
  %3114 = vrot.lane.b32.xlu0 %v3079, 1
  %v3115 = vpop.permute.xlu0 %3114
  %v3116 = vsel %vm227, %v3093, %v3095
  %v3117 = vsel %vm227, %v3095, %v3097
  %v3118 = vsel %vm227, %v3099, %v3101
  %v3119 = vsel %vm227, %v3101, %v3103
  %v3120 = vsel %vm227, %v3105, %v3107
  %v3121 = vsel %vm227, %v3107, %v3109
  %v3122 = vsel %vm227, %v3111, %v3113
  %v3123 = vsel %vm227, %v3113, %v3115
  %v3132 = vsel %vm93, %v3116, 0.0
  %v3133 = vsel %vm94, %v3117, 0.0
  %v3134 = vsel %vm93, %v3118, 0.0
  %v3135 = vsel %vm94, %v3119, 0.0
  %v3136 = vsel %vm93, %v3120, 0.0
  %v3137 = vsel %vm94, %v3121, 0.0
  %v3138 = vsel %vm93, %v3122, 0.0
  %v3139 = vsel %vm94, %v3123, 0.0
  %3140 = vst [vmem:[#allocation3 + $0x190] sm:$0xff] %v3132
  %3141 = vst [vmem:[#allocation3 + $0x198] sm:$0xff] %v3133
  %3142 = vst [vmem:[#allocation3 + $0x1b0] sm:$0xff] %v3134
  %3143 = vst [vmem:[#allocation3 + $0x1b8] sm:$0xff] %v3135
  %3144 = vst [vmem:[#allocation3 + $0x1d0] sm:$0xff] %v3136
  %3145 = vst [vmem:[#allocation3 + $0x1d8] sm:$0xff] %v3137
  %3146 = vst [vmem:[#allocation3 + $0x1f0] sm:$0xff] %v3138
  %3147 = vst [vmem:[#allocation3 + $0x1f8] sm:$0xff] %v3139
  %v3148 = vld [vmem:[#allocation2 + $0x8] sm:$0xff]
  %v3149 = vld [vmem:[#allocation2 + $0x10] sm:$0xff]
  %v3150 = vld [vmem:[#allocation2 + $0x48] sm:$0xff]
  %v3151 = vld [vmem:[#allocation2 + $0x50] sm:$0xff]
  %v3152 = vld [vmem:[#allocation2 + $0x88] sm:$0xff]
  %v3153 = vld [vmem:[#allocation2 + $0x90] sm:$0xff]
  %v3154 = vld [vmem:[#allocation2 + $0xc8] sm:$0xff]
  %v3155 = vld [vmem:[#allocation2 + $0xd0] sm:$0xff]
  %3156 = vst [vmem:[#allocation3 + $0x200] sm:$0xff] %v3148
  %3157 = vst [vmem:[#allocation3 + $0x208] sm:$0xff] %v3149
  %3158 = vst [vmem:[#allocation3 + $0x220] sm:$0xff] %v3150
  %3159 = vst [vmem:[#allocation3 + $0x228] sm:$0xff] %v3151
  %3160 = vst [vmem:[#allocation3 + $0x240] sm:$0xff] %v3152
  %3161 = vst [vmem:[#allocation3 + $0x248] sm:$0xff] %v3153
  %3162 = vst [vmem:[#allocation3 + $0x260] sm:$0xff] %v3154
  %3163 = vst [vmem:[#allocation3 + $0x268] sm:$0xff] %v3155
  %v3164 = vld [vmem:[#allocation2 + $0x28] sm:$0xff]
  %v3165 = vld [vmem:[#allocation2 + $0x30] sm:$0xff]
  %v3166 = vld [vmem:[#allocation2 + $0x68] sm:$0xff]
  %v3167 = vld [vmem:[#allocation2 + $0x70] sm:$0xff]
  %v3168 = vld [vmem:[#allocation2 + $0xa8] sm:$0xff]
  %v3169 = vld [vmem:[#allocation2 + $0xb0] sm:$0xff]
  %v3170 = vld [vmem:[#allocation2 + $0xe8] sm:$0xff]
  %v3171 = vld [vmem:[#allocation2 + $0xf0] sm:$0xff]
  %3172 = vst [vmem:[#allocation3 + $0x210] sm:$0xff] %v3164
  %3173 = vst [vmem:[#allocation3 + $0x218] sm:$0xff] %v3165
  %3174 = vst [vmem:[#allocation3 + $0x230] sm:$0xff] %v3166
  %3175 = vst [vmem:[#allocation3 + $0x238] sm:$0xff] %v3167
  %3176 = vst [vmem:[#allocation3 + $0x250] sm:$0xff] %v3168
  %3177 = vst [vmem:[#allocation3 + $0x258] sm:$0xff] %v3169
  %3178 = vst [vmem:[#allocation3 + $0x270] sm:$0xff] %v3170
  %3179 = vst [vmem:[#allocation3 + $0x278] sm:$0xff] %v3171
  %v3180 = vld [vmem:[#allocation2 + $0x8] sm:$0xff]
  %v3181 = vld [vmem:[#allocation2 + $0x10] sm:$0xff]
  %v3182 = vld [vmem:[#allocation2 + $0x18] sm:$0xff]
  %v3183 = vld [vmem:[#allocation2 + $0x48] sm:$0xff]
  %v3184 = vld [vmem:[#allocation2 + $0x50] sm:$0xff]
  %v3185 = vld [vmem:[#allocation2 + $0x58] sm:$0xff]
  %v3186 = vld [vmem:[#allocation2 + $0x88] sm:$0xff]
  %v3187 = vld [vmem:[#allocation2 + $0x90] sm:$0xff]
  %v3188 = vld [vmem:[#allocation2 + $0x98] sm:$0xff]
  %v3189 = vld [vmem:[#allocation2 + $0xc8] sm:$0xff]
  %v3190 = vld [vmem:[#allocation2 + $0xd0] sm:$0xff]
  %v3191 = vld [vmem:[#allocation2 + $0xd8] sm:$0xff]
  %3204 = vrot.lane.b32.xlu0 %v3180, 127
  %v3205 = vpop.permute.xlu0 %3204
  %3206 = vrot.lane.b32.xlu0 %v3181, 127
  %v3207 = vpop.permute.xlu0 %3206
  %3208 = vrot.lane.b32.xlu0 %v3182, 127
  %v3209 = vpop.permute.xlu0 %3208
  %3210 = vrot.lane.b32.xlu0 %v3183, 127
  %v3211 = vpop.permute.xlu0 %3210
  %3212 = vrot.lane.b32.xlu0 %v3184, 127
  %v3213 = vpop.permute.xlu0 %3212
  %3214 = vrot.lane.b32.xlu0 %v3185, 127
  %v3215 = vpop.permute.xlu0 %3214
  %3216 = vrot.lane.b32.xlu0 %v3186, 127
  %v3217 = vpop.permute.xlu0 %3216
  %3218 = vrot.lane.b32.xlu0 %v3187, 127
  %v3219 = vpop.permute.xlu0 %3218
  %3220 = vrot.lane.b32.xlu0 %v3188, 127
  %v3221 = vpop.permute.xlu0 %3220
  %3222 = vrot.lane.b32.xlu0 %v3189, 127
  %v3223 = vpop.permute.xlu0 %3222
  %3224 = vrot.lane.b32.xlu0 %v3190, 127
  %v3225 = vpop.permute.xlu0 %3224
  %3226 = vrot.lane.b32.xlu0 %v3191, 127
  %v3227 = vpop.permute.xlu0 %3226
  %v3228 = vsel %vm276, %v3205, %v3207
  %v3229 = vsel %vm276, %v3207, %v3209
  %v3230 = vsel %vm276, %v3211, %v3213
  %v3231 = vsel %vm276, %v3213, %v3215
  %v3232 = vsel %vm276, %v3217, %v3219
  %v3233 = vsel %vm276, %v3219, %v3221
  %v3234 = vsel %vm276, %v3223, %v3225
  %v3235 = vsel %vm276, %v3225, %v3227
  %v3244 = vsel %vm175, %v3228, 0.0
  %v3245 = vsel %vm176, %v3229, 0.0
  %v3246 = vsel %vm175, %v3230, 0.0
  %v3247 = vsel %vm176, %v3231, 0.0
  %v3248 = vsel %vm175, %v3232, 0.0
  %v3249 = vsel %vm176, %v3233, 0.0
  %v3250 = vsel %vm175, %v3234, 0.0
  %v3251 = vsel %vm176, %v3235, 0.0
  %3252 = vst [vmem:[#allocation3 + $0x280] sm:$0xff] %v3244
  %3253 = vst [vmem:[#allocation3 + $0x288] sm:$0xff] %v3245
  %3254 = vst [vmem:[#allocation3 + $0x2a0] sm:$0xff] %v3246
  %3255 = vst [vmem:[#allocation3 + $0x2a8] sm:$0xff] %v3247
  %3256 = vst [vmem:[#allocation3 + $0x2c0] sm:$0xff] %v3248
  %3257 = vst [vmem:[#allocation3 + $0x2c8] sm:$0xff] %v3249
  %3258 = vst [vmem:[#allocation3 + $0x2e0] sm:$0xff] %v3250
  %3259 = vst [vmem:[#allocation3 + $0x2e8] sm:$0xff] %v3251
  %v3260 = vld [vmem:[#allocation2 + $0x28] sm:$0xff]
  %v3261 = vld [vmem:[#allocation2 + $0x30] sm:$0xff]
  %v3262 = vld [vmem:[#allocation2 + $0x38] sm:$0xff]
  %v3263 = vld [vmem:[#allocation2 + $0x68] sm:$0xff]
  %v3264 = vld [vmem:[#allocation2 + $0x70] sm:$0xff]
  %v3265 = vld [vmem:[#allocation2 + $0x78] sm:$0xff]
  %v3266 = vld [vmem:[#allocation2 + $0xa8] sm:$0xff]
  %v3267 = vld [vmem:[#allocation2 + $0xb0] sm:$0xff]
  %v3268 = vld [vmem:[#allocation2 + $0xb8] sm:$0xff]
  %v3269 = vld [vmem:[#allocation2 + $0xe8] sm:$0xff]
  %v3270 = vld [vmem:[#allocation2 + $0xf0] sm:$0xff]
  %v3271 = vld [vmem:[#allocation2 + $0xf8] sm:$0xff]
  %3284 = vrot.lane.b32.xlu0 %v3260, 127
  %v3285 = vpop.permute.xlu0 %3284
  %3286 = vrot.lane.b32.xlu0 %v3261, 127
  %v3287 = vpop.permute.xlu0 %3286
  %3288 = vrot.lane.b32.xlu0 %v3262, 127
  %v3289 = vpop.permute.xlu0 %3288
  %3290 = vrot.lane.b32.xlu0 %v3263, 127
  %v3291 = vpop.permute.xlu0 %3290
  %3292 = vrot.lane.b32.xlu0 %v3264, 127
  %v3293 = vpop.permute.xlu0 %3292
  %3294 = vrot.lane.b32.xlu0 %v3265, 127
  %v3295 = vpop.permute.xlu0 %3294
  %3296 = vrot.lane.b32.xlu0 %v3266, 127
  %v3297 = vpop.permute.xlu0 %3296
  %3298 = vrot.lane.b32.xlu0 %v3267, 127
  %v3299 = vpop.permute.xlu0 %3298
  %3300 = vrot.lane.b32.xlu0 %v3268, 127
  %v3301 = vpop.permute.xlu0 %3300
  %3302 = vrot.lane.b32.xlu0 %v3269, 127
  %v3303 = vpop.permute.xlu0 %3302
  %3304 = vrot.lane.b32.xlu0 %v3270, 127
  %v3305 = vpop.permute.xlu0 %3304
  %3306 = vrot.lane.b32.xlu0 %v3271, 127
  %v3307 = vpop.permute.xlu0 %3306
  %v3308 = vsel %vm276, %v3285, %v3287
  %v3309 = vsel %vm276, %v3287, %v3289
  %v3310 = vsel %vm276, %v3291, %v3293
  %v3311 = vsel %vm276, %v3293, %v3295
  %v3312 = vsel %vm276, %v3297, %v3299
  %v3313 = vsel %vm276, %v3299, %v3301
  %v3314 = vsel %vm276, %v3303, %v3305
  %v3315 = vsel %vm276, %v3305, %v3307
  %v3324 = vsel %vm175, %v3308, 0.0
  %v3325 = vsel %vm176, %v3309, 0.0
  %v3326 = vsel %vm175, %v3310, 0.0
  %v3327 = vsel %vm176, %v3311, 0.0
  %v3328 = vsel %vm175, %v3312, 0.0
  %v3329 = vsel %vm176, %v3313, 0.0
  %v3330 = vsel %vm175, %v3314, 0.0
  %v3331 = vsel %vm176, %v3315, 0.0
  %3332 = vst [vmem:[#allocation3 + $0x290] sm:$0xff] %v3324
  %3333 = vst [vmem:[#allocation3 + $0x298] sm:$0xff] %v3325
  %3334 = vst [vmem:[#allocation3 + $0x2b0] sm:$0xff] %v3326
  %3335 = vst [vmem:[#allocation3 + $0x2b8] sm:$0xff] %v3327
  %3336 = vst [vmem:[#allocation3 + $0x2d0] sm:$0xff] %v3328
  %3337 = vst [vmem:[#allocation3 + $0x2d8] sm:$0xff] %v3329
  %3338 = vst [vmem:[#allocation3 + $0x2f0] sm:$0xff] %v3330
  %3339 = vst [vmem:[#allocation3 + $0x2f8] sm:$0xff] %v3331
  %v3340 = vld [vmem:[#allocation2 + $0x8] sm:$0xff]
  %v3341 = vld [vmem:[#allocation2 + $0x10] sm:$0xff]
  %v3342 = vld [vmem:[#allocation2 + $0x18] sm:$0xff]
  %v3343 = vld [vmem:[#allocation2 + $0x48] sm:$0xff]
  %v3344 = vld [vmem:[#allocation2 + $0x50] sm:$0xff]
  %v3345 = vld [vmem:[#allocation2 + $0x58] sm:$0xff]
  %v3346 = vld [vmem:[#allocation2 + $0x88] sm:$0xff]
  %v3347 = vld [vmem:[#allocation2 + $0x90] sm:$0xff]
  %v3348 = vld [vmem:[#allocation2 + $0x98] sm:$0xff]
  %v3349 = vld [vmem:[#allocation2 + $0xc8] sm:$0xff]
  %v3350 = vld [vmem:[#allocation2 + $0xd0] sm:$0xff]
  %v3351 = vld [vmem:[#allocation2 + $0xd8] sm:$0xff]
  %3364 = vrot.lane.b32.xlu0 %v3340, 113
  %v3365 = vpop.permute.xlu0 %3364
  %3366 = vrot.lane.b32.xlu0 %v3341, 113
  %v3367 = vpop.permute.xlu0 %3366
  %3368 = vrot.lane.b32.xlu0 %v3342, 113
  %v3369 = vpop.permute.xlu0 %3368
  %3370 = vrot.lane.b32.xlu0 %v3343, 113
  %v3371 = vpop.permute.xlu0 %3370
  %3372 = vrot.lane.b32.xlu0 %v3344, 113
  %v3373 = vpop.permute.xlu0 %3372
  %3374 = vrot.lane.b32.xlu0 %v3345, 113
  %v3375 = vpop.permute.xlu0 %3374
  %3376 = vrot.lane.b32.xlu0 %v3346, 113
  %v3377 = vpop.permute.xlu0 %3376
  %3378 = vrot.lane.b32.xlu0 %v3347, 113
  %v3379 = vpop.permute.xlu0 %3378
  %3380 = vrot.lane.b32.xlu0 %v3348, 113
  %v3381 = vpop.permute.xlu0 %3380
  %3382 = vrot.lane.b32.xlu0 %v3349, 113
  %v3383 = vpop.permute.xlu0 %3382
  %3384 = vrot.lane.b32.xlu0 %v3350, 113
  %v3385 = vpop.permute.xlu0 %3384
  %3386 = vrot.lane.b32.xlu0 %v3351, 113
  %v3387 = vpop.permute.xlu0 %3386
  %v3388 = vsel %vm317, %v3365, %v3367
  %v3389 = vsel %vm317, %v3367, %v3369
  %v3390 = vsel %vm317, %v3371, %v3373
  %v3391 = vsel %vm317, %v3373, %v3375
  %v3392 = vsel %vm317, %v3377, %v3379
  %v3393 = vsel %vm317, %v3379, %v3381
  %v3394 = vsel %vm317, %v3383, %v3385
  %v3395 = vsel %vm317, %v3385, %v3387
  %v3404 = vsel %vm93, %v3388, 0.0
  %v3405 = vsel %vm94, %v3389, 0.0
  %v3406 = vsel %vm93, %v3390, 0.0
  %v3407 = vsel %vm94, %v3391, 0.0
  %v3408 = vsel %vm93, %v3392, 0.0
  %v3409 = vsel %vm94, %v3393, 0.0
  %v3410 = vsel %vm93, %v3394, 0.0
  %v3411 = vsel %vm94, %v3395, 0.0
  %3412 = vst [vmem:[#allocation3 + $0x300] sm:$0xff] %v3404
  %3413 = vst [vmem:[#allocation3 + $0x308] sm:$0xff] %v3405
  %3414 = vst [vmem:[#allocation3 + $0x320] sm:$0xff] %v3406
  %3415 = vst [vmem:[#allocation3 + $0x328] sm:$0xff] %v3407
  %3416 = vst [vmem:[#allocation3 + $0x340] sm:$0xff] %v3408
  %3417 = vst [vmem:[#allocation3 + $0x348] sm:$0xff] %v3409
  %3418 = vst [vmem:[#allocation3 + $0x360] sm:$0xff] %v3410
  %3419 = vst [vmem:[#allocation3 + $0x368] sm:$0xff] %v3411
  %v3420 = vld [vmem:[#allocation2 + $0x28] sm:$0xff]
  %v3421 = vld [vmem:[#allocation2 + $0x30] sm:$0xff]
  %v3422 = vld [vmem:[#allocation2 + $0x38] sm:$0xff]
  %v3423 = vld [vmem:[#allocation2 + $0x68] sm:$0xff]
  %v3424 = vld [vmem:[#allocation2 + $0x70] sm:$0xff]
  %v3425 = vld [vmem:[#allocation2 + $0x78] sm:$0xff]
  %v3426 = vld [vmem:[#allocation2 + $0xa8] sm:$0xff]
  %v3427 = vld [vmem:[#allocation2 + $0xb0] sm:$0xff]
  %v3428 = vld [vmem:[#allocation2 + $0xb8] sm:$0xff]
  %v3429 = vld [vmem:[#allocation2 + $0xe8] sm:$0xff]
  %v3430 = vld [vmem:[#allocation2 + $0xf0] sm:$0xff]
  %v3431 = vld [vmem:[#allocation2 + $0xf8] sm:$0xff]
  %3444 = vrot.lane.b32.xlu0 %v3420, 113
  %v3445 = vpop.permute.xlu0 %3444
  %3446 = vrot.lane.b32.xlu0 %v3421, 113
  %v3447 = vpop.permute.xlu0 %3446
  %3448 = vrot.lane.b32.xlu0 %v3422, 113
  %v3449 = vpop.permute.xlu0 %3448
  %3450 = vrot.lane.b32.xlu0 %v3423, 113
  %v3451 = vpop.permute.xlu0 %3450
  %3452 = vrot.lane.b32.xlu0 %v3424, 113
  %v3453 = vpop.permute.xlu0 %3452
  %3454 = vrot.lane.b32.xlu0 %v3425, 113
  %v3455 = vpop.permute.xlu0 %3454
  %3456 = vrot.lane.b32.xlu0 %v3426, 113
  %v3457 = vpop.permute.xlu0 %3456
  %3458 = vrot.lane.b32.xlu0 %v3427, 113
  %v3459 = vpop.permute.xlu0 %3458
  %3460 = vrot.lane.b32.xlu0 %v3428, 113
  %v3461 = vpop.permute.xlu0 %3460
  %3462 = vrot.lane.b32.xlu0 %v3429, 113
  %v3463 = vpop.permute.xlu0 %3462
  %3464 = vrot.lane.b32.xlu0 %v3430, 113
  %v3465 = vpop.permute.xlu0 %3464
  %3466 = vrot.lane.b32.xlu0 %v3431, 113
  %v3467 = vpop.permute.xlu0 %3466
  %v3468 = vsel %vm317, %v3445, %v3447
  %v3469 = vsel %vm317, %v3447, %v3449
  %v3470 = vsel %vm317, %v3451, %v3453
  %v3471 = vsel %vm317, %v3453, %v3455
  %v3472 = vsel %vm317, %v3457, %v3459
  %v3473 = vsel %vm317, %v3459, %v3461
  %v3474 = vsel %vm317, %v3463, %v3465
  %v3475 = vsel %vm317, %v3465, %v3467
  %v3484 = vsel %vm93, %v3468, 0.0
  %v3485 = vsel %vm94, %v3469, 0.0
  %v3486 = vsel %vm93, %v3470, 0.0
  %v3487 = vsel %vm94, %v3471, 0.0
  %v3488 = vsel %vm93, %v3472, 0.0
  %v3489 = vsel %vm94, %v3473, 0.0
  %v3490 = vsel %vm93, %v3474, 0.0
  %v3491 = vsel %vm94, %v3475, 0.0
  %3492 = vst [vmem:[#allocation3 + $0x310] sm:$0xff] %v3484
  %3493 = vst [vmem:[#allocation3 + $0x318] sm:$0xff] %v3485
  %3494 = vst [vmem:[#allocation3 + $0x330] sm:$0xff] %v3486
  %3495 = vst [vmem:[#allocation3 + $0x338] sm:$0xff] %v3487
  %3496 = vst [vmem:[#allocation3 + $0x350] sm:$0xff] %v3488
  %3497 = vst [vmem:[#allocation3 + $0x358] sm:$0xff] %v3489
  %3498 = vst [vmem:[#allocation3 + $0x370] sm:$0xff] %v3490
  %3499 = vst [vmem:[#allocation3 + $0x378] sm:$0xff] %v3491
  %v3500 = vld [vmem:[#allocation2 + $0x8] sm:$0xff]
  %v3501 = vld [vmem:[#allocation2 + $0x10] sm:$0xff]
  %v3502 = vld [vmem:[#allocation2 + $0x18] sm:$0xff]
  %v3503 = vld [vmem:[#allocation2 + $0x48] sm:$0xff]
  %v3504 = vld [vmem:[#allocation2 + $0x50] sm:$0xff]
  %v3505 = vld [vmem:[#allocation2 + $0x58] sm:$0xff]
  %v3506 = vld [vmem:[#allocation2 + $0x88] sm:$0xff]
  %v3507 = vld [vmem:[#allocation2 + $0x90] sm:$0xff]
  %v3508 = vld [vmem:[#allocation2 + $0x98] sm:$0xff]
  %v3509 = vld [vmem:[#allocation2 + $0xc8] sm:$0xff]
  %v3510 = vld [vmem:[#allocation2 + $0xd0] sm:$0xff]
  %v3511 = vld [vmem:[#allocation2 + $0xd8] sm:$0xff]
  %3524 = vrot.lane.b32.xlu0 %v3500, 112
  %v3525 = vpop.permute.xlu0 %3524
  %3526 = vrot.lane.b32.xlu0 %v3501, 112
  %v3527 = vpop.permute.xlu0 %3526
  %3528 = vrot.lane.b32.xlu0 %v3502, 112
  %v3529 = vpop.permute.xlu0 %3528
  %3530 = vrot.lane.b32.xlu0 %v3503, 112
  %v3531 = vpop.permute.xlu0 %3530
  %3532 = vrot.lane.b32.xlu0 %v3504, 112
  %v3533 = vpop.permute.xlu0 %3532
  %3534 = vrot.lane.b32.xlu0 %v3505, 112
  %v3535 = vpop.permute.xlu0 %3534
  %3536 = vrot.lane.b32.xlu0 %v3506, 112
  %v3537 = vpop.permute.xlu0 %3536
  %3538 = vrot.lane.b32.xlu0 %v3507, 112
  %v3539 = vpop.permute.xlu0 %3538
  %3540 = vrot.lane.b32.xlu0 %v3508, 112
  %v3541 = vpop.permute.xlu0 %3540
  %3542 = vrot.lane.b32.xlu0 %v3509, 112
  %v3543 = vpop.permute.xlu0 %3542
  %3544 = vrot.lane.b32.xlu0 %v3510, 112
  %v3545 = vpop.permute.xlu0 %3544
  %3546 = vrot.lane.b32.xlu0 %v3511, 112
  %v3547 = vpop.permute.xlu0 %3546
  %v3548 = vsel %vm358, %v3525, %v3527
  %v3549 = vsel %vm358, %v3527, %v3529
  %v3550 = vsel %vm358, %v3531, %v3533
  %v3551 = vsel %vm358, %v3533, %v3535
  %v3552 = vsel %vm358, %v3537, %v3539
  %v3553 = vsel %vm358, %v3539, %v3541
  %v3554 = vsel %vm358, %v3543, %v3545
  %v3555 = vsel %vm358, %v3545, %v3547
  %3564 = vst [vmem:[#allocation3 + $0x380] sm:$0xff] %v3548
  %3565 = vst [vmem:[#allocation3 + $0x388] sm:$0xff] %v3549
  %3566 = vst [vmem:[#allocation3 + $0x3a0] sm:$0xff] %v3550
  %3567 = vst [vmem:[#allocation3 + $0x3a8] sm:$0xff] %v3551
  %3568 = vst [vmem:[#allocation3 + $0x3c0] sm:$0xff] %v3552
  %3569 = vst [vmem:[#allocation3 + $0x3c8] sm:$0xff] %v3553
  %3570 = vst [vmem:[#allocation3 + $0x3e0] sm:$0xff] %v3554
  %3571 = vst [vmem:[#allocation3 + $0x3e8] sm:$0xff] %v3555
  %v3572 = vld [vmem:[#allocation2 + $0x28] sm:$0xff]
  %v3573 = vld [vmem:[#allocation2 + $0x30] sm:$0xff]
  %v3574 = vld [vmem:[#allocation2 + $0x38] sm:$0xff]
  %v3575 = vld [vmem:[#allocation2 + $0x68] sm:$0xff]
  %v3576 = vld [vmem:[#allocation2 + $0x70] sm:$0xff]
  %v3577 = vld [vmem:[#allocation2 + $0x78] sm:$0xff]
  %v3578 = vld [vmem:[#allocation2 + $0xa8] sm:$0xff]
  %v3579 = vld [vmem:[#allocation2 + $0xb0] sm:$0xff]
  %v3580 = vld [vmem:[#allocation2 + $0xb8] sm:$0xff]
  %v3581 = vld [vmem:[#allocation2 + $0xe8] sm:$0xff]
  %v3582 = vld [vmem:[#allocation2 + $0xf0] sm:$0xff]
  %v3583 = vld [vmem:[#allocation2 + $0xf8] sm:$0xff]
  %3596 = vrot.lane.b32.xlu0 %v3572, 112
  %v3597 = vpop.permute.xlu0 %3596
  %3598 = vrot.lane.b32.xlu0 %v3573, 112
  %v3599 = vpop.permute.xlu0 %3598
  %3600 = vrot.lane.b32.xlu0 %v3574, 112
  %v3601 = vpop.permute.xlu0 %3600
  %3602 = vrot.lane.b32.xlu0 %v3575, 112
  %v3603 = vpop.permute.xlu0 %3602
  %3604 = vrot.lane.b32.xlu0 %v3576, 112
  %v3605 = vpop.permute.xlu0 %3604
  %3606 = vrot.lane.b32.xlu0 %v3577, 112
  %v3607 = vpop.permute.xlu0 %3606
  %3608 = vrot.lane.b32.xlu0 %v3578, 112
  %v3609 = vpop.permute.xlu0 %3608
  %3610 = vrot.lane.b32.xlu0 %v3579, 112
  %v3611 = vpop.permute.xlu0 %3610
  %3612 = vrot.lane.b32.xlu0 %v3580, 112
  %v3613 = vpop.permute.xlu0 %3612
  %3614 = vrot.lane.b32.xlu0 %v3581, 112
  %v3615 = vpop.permute.xlu0 %3614
  %3616 = vrot.lane.b32.xlu0 %v3582, 112
  %v3617 = vpop.permute.xlu0 %3616
  %3618 = vrot.lane.b32.xlu0 %v3583, 112
  %v3619 = vpop.permute.xlu0 %3618
  %v3620 = vsel %vm358, %v3597, %v3599
  %v3621 = vsel %vm358, %v3599, %v3601
  %v3622 = vsel %vm358, %v3603, %v3605
  %v3623 = vsel %vm358, %v3605, %v3607
  %v3624 = vsel %vm358, %v3609, %v3611
  %v3625 = vsel %vm358, %v3611, %v3613
  %v3626 = vsel %vm358, %v3615, %v3617
  %v3627 = vsel %vm358, %v3617, %v3619
  %3636 = vst [vmem:[#allocation3 + $0x390] sm:$0xff] %v3620
  %3637 = vst [vmem:[#allocation3 + $0x398] sm:$0xff] %v3621
  %3638 = vst [vmem:[#allocation3 + $0x3b0] sm:$0xff] %v3622
  %3639 = vst [vmem:[#allocation3 + $0x3b8] sm:$0xff] %v3623
  %3640 = vst [vmem:[#allocation3 + $0x3d0] sm:$0xff] %v3624
  %3641 = vst [vmem:[#allocation3 + $0x3d8] sm:$0xff] %v3625
  %3642 = vst [vmem:[#allocation3 + $0x3f0] sm:$0xff] %v3626
  %3643 = vst [vmem:[#allocation3 + $0x3f8] sm:$0xff] %v3627
  %v3644 = vld [vmem:[#allocation2 + $0x8] sm:$0xff]
  %v3645 = vld [vmem:[#allocation2 + $0x10] sm:$0xff]
  %v3646 = vld [vmem:[#allocation2 + $0x18] sm:$0xff]
  %v3647 = vld [vmem:[#allocation2 + $0x48] sm:$0xff]
  %v3648 = vld [vmem:[#allocation2 + $0x50] sm:$0xff]
  %v3649 = vld [vmem:[#allocation2 + $0x58] sm:$0xff]
  %v3650 = vld [vmem:[#allocation2 + $0x88] sm:$0xff]
  %v3651 = vld [vmem:[#allocation2 + $0x90] sm:$0xff]
  %v3652 = vld [vmem:[#allocation2 + $0x98] sm:$0xff]
  %v3653 = vld [vmem:[#allocation2 + $0xc8] sm:$0xff]
  %v3654 = vld [vmem:[#allocation2 + $0xd0] sm:$0xff]
  %v3655 = vld [vmem:[#allocation2 + $0xd8] sm:$0xff]
  %3668 = vrot.lane.b32.xlu0 %v3644, 111
  %v3669 = vpop.permute.xlu0 %3668
  %3670 = vrot.lane.b32.xlu0 %v3645, 111
  %v3671 = vpop.permute.xlu0 %3670
  %3672 = vrot.lane.b32.xlu0 %v3646, 111
  %v3673 = vpop.permute.xlu0 %3672
  %3674 = vrot.lane.b32.xlu0 %v3647, 111
  %v3675 = vpop.permute.xlu0 %3674
  %3676 = vrot.lane.b32.xlu0 %v3648, 111
  %v3677 = vpop.permute.xlu0 %3676
  %3678 = vrot.lane.b32.xlu0 %v3649, 111
  %v3679 = vpop.permute.xlu0 %3678
  %3680 = vrot.lane.b32.xlu0 %v3650, 111
  %v3681 = vpop.permute.xlu0 %3680
  %3682 = vrot.lane.b32.xlu0 %v3651, 111
  %v3683 = vpop.permute.xlu0 %3682
  %3684 = vrot.lane.b32.xlu0 %v3652, 111
  %v3685 = vpop.permute.xlu0 %3684
  %3686 = vrot.lane.b32.xlu0 %v3653, 111
  %v3687 = vpop.permute.xlu0 %3686
  %3688 = vrot.lane.b32.xlu0 %v3654, 111
  %v3689 = vpop.permute.xlu0 %3688
  %3690 = vrot.lane.b32.xlu0 %v3655, 111
  %v3691 = vpop.permute.xlu0 %3690
  %v3692 = vsel %vm395, %v3669, %v3671
  %v3693 = vsel %vm395, %v3671, %v3673
  %v3694 = vsel %vm395, %v3675, %v3677
  %v3695 = vsel %vm395, %v3677, %v3679
  %v3696 = vsel %vm395, %v3681, %v3683
  %v3697 = vsel %vm395, %v3683, %v3685
  %v3698 = vsel %vm395, %v3687, %v3689
  %v3699 = vsel %vm395, %v3689, %v3691
  %v3708 = vsel %vm175, %v3692, 0.0
  %v3709 = vsel %vm176, %v3693, 0.0
  %v3710 = vsel %vm175, %v3694, 0.0
  %v3711 = vsel %vm176, %v3695, 0.0
  %v3712 = vsel %vm175, %v3696, 0.0
  %v3713 = vsel %vm176, %v3697, 0.0
  %v3714 = vsel %vm175, %v3698, 0.0
  %v3715 = vsel %vm176, %v3699, 0.0
  %3716 = vst [vmem:[#allocation3 + $0x400] sm:$0xff] %v3708
  %3717 = vst [vmem:[#allocation3 + $0x408] sm:$0xff] %v3709
  %3718 = vst [vmem:[#allocation3 + $0x420] sm:$0xff] %v3710
  %3719 = vst [vmem:[#allocation3 + $0x428] sm:$0xff] %v3711
  %3720 = vst [vmem:[#allocation3 + $0x440] sm:$0xff] %v3712
  %3721 = vst [vmem:[#allocation3 + $0x448] sm:$0xff] %v3713
  %3722 = vst [vmem:[#allocation3 + $0x460] sm:$0xff] %v3714
  %3723 = vst [vmem:[#allocation3 + $0x468] sm:$0xff] %v3715
  %v3724 = vld [vmem:[#allocation2 + $0x28] sm:$0xff]
  %v3725 = vld [vmem:[#allocation2 + $0x30] sm:$0xff]
  %v3726 = vld [vmem:[#allocation2 + $0x38] sm:$0xff]
  %v3727 = vld [vmem:[#allocation2 + $0x68] sm:$0xff]
  %v3728 = vld [vmem:[#allocation2 + $0x70] sm:$0xff]
  %v3729 = vld [vmem:[#allocation2 + $0x78] sm:$0xff]
  %v3730 = vld [vmem:[#allocation2 + $0xa8] sm:$0xff]
  %v3731 = vld [vmem:[#allocation2 + $0xb0] sm:$0xff]
  %v3732 = vld [vmem:[#allocation2 + $0xb8] sm:$0xff]
  %v3733 = vld [vmem:[#allocation2 + $0xe8] sm:$0xff]
  %v3734 = vld [vmem:[#allocation2 + $0xf0] sm:$0xff]
  %v3735 = vld [vmem:[#allocation2 + $0xf8] sm:$0xff]
  %3748 = vrot.lane.b32.xlu0 %v3724, 111
  %v3749 = vpop.permute.xlu0 %3748
  %3750 = vrot.lane.b32.xlu0 %v3725, 111
  %v3751 = vpop.permute.xlu0 %3750
  %3752 = vrot.lane.b32.xlu0 %v3726, 111
  %v3753 = vpop.permute.xlu0 %3752
  %3754 = vrot.lane.b32.xlu0 %v3727, 111
  %v3755 = vpop.permute.xlu0 %3754
  %3756 = vrot.lane.b32.xlu0 %v3728, 111
  %v3757 = vpop.permute.xlu0 %3756
  %3758 = vrot.lane.b32.xlu0 %v3729, 111
  %v3759 = vpop.permute.xlu0 %3758
  %3760 = vrot.lane.b32.xlu0 %v3730, 111
  %v3761 = vpop.permute.xlu0 %3760
  %3762 = vrot.lane.b32.xlu0 %v3731, 111
  %v3763 = vpop.permute.xlu0 %3762
  %3764 = vrot.lane.b32.xlu0 %v3732, 111
  %v3765 = vpop.permute.xlu0 %3764
  %3766 = vrot.lane.b32.xlu0 %v3733, 111
  %v3767 = vpop.permute.xlu0 %3766
  %3768 = vrot.lane.b32.xlu0 %v3734, 111
  %v3769 = vpop.permute.xlu0 %3768
  %3770 = vrot.lane.b32.xlu0 %v3735, 111
  %v3771 = vpop.permute.xlu0 %3770
  %v3772 = vsel %vm395, %v3749, %v3751
  %v3773 = vsel %vm395, %v3751, %v3753
  %v3774 = vsel %vm395, %v3755, %v3757
  %v3775 = vsel %vm395, %v3757, %v3759
  %v3776 = vsel %vm395, %v3761, %v3763
  %v3777 = vsel %vm395, %v3763, %v3765
  %v3778 = vsel %vm395, %v3767, %v3769
  %v3779 = vsel %vm395, %v3769, %v3771
  %v3788 = vsel %vm175, %v3772, 0.0
  %v3789 = vsel %vm176, %v3773, 0.0
  %v3790 = vsel %vm175, %v3774, 0.0
  %v3791 = vsel %vm176, %v3775, 0.0
  %v3792 = vsel %vm175, %v3776, 0.0
  %v3793 = vsel %vm176, %v3777, 0.0
  %v3794 = vsel %vm175, %v3778, 0.0
  %v3795 = vsel %vm176, %v3779, 0.0
  %3796 = vst [vmem:[#allocation3 + $0x410] sm:$0xff] %v3788
  %3797 = vst [vmem:[#allocation3 + $0x418] sm:$0xff] %v3789
  %3798 = vst [vmem:[#allocation3 + $0x430] sm:$0xff] %v3790
  %3799 = vst [vmem:[#allocation3 + $0x438] sm:$0xff] %v3791
  %3800 = vst [vmem:[#allocation3 + $0x450] sm:$0xff] %v3792
  %3801 = vst [vmem:[#allocation3 + $0x458] sm:$0xff] %v3793
  %3802 = vst [vmem:[#allocation3 + $0x470] sm:$0xff] %v3794
  %3803 = vst [vmem:[#allocation3 + $0x478] sm:$0xff] %v3795
  %v3804 = vld [vmem:[%s3] sm:$0xff]
  %v3805 = vld [vmem:[%s3 + $0x8] sm:$0xff]
  %v3806 = vld [vmem:[%s3 + $0x10] sm:$0xff]
  %v3807 = vld [vmem:[#allocation3] sm:$0xff]
  %v3808 = vld [vmem:[#allocation3 + $0x8] sm:$0xff]
  %v3809 = vld [vmem:[#allocation3 + $0x10] sm:$0xff]
  %v3810 = vld [vmem:[#allocation3 + $0x18] sm:$0xff]
  %v3811 = vld [vmem:[#allocation3 + $0x20] sm:$0xff]
  %v3812 = vld [vmem:[#allocation3 + $0x28] sm:$0xff]
  %v3813 = vld [vmem:[#allocation3 + $0x30] sm:$0xff]
  %v3814 = vld [vmem:[#allocation3 + $0x38] sm:$0xff]
  %v3815 = vld [vmem:[#allocation3 + $0x40] sm:$0xff]
  %v3816 = vld [vmem:[#allocation3 + $0x48] sm:$0xff]
  %v3817 = vld [vmem:[#allocation3 + $0x50] sm:$0xff]
  %v3818 = vld [vmem:[#allocation3 + $0x58] sm:$0xff]
  %v3819 = vld [vmem:[#allocation3 + $0x60] sm:$0xff]
  %v3820 = vld [vmem:[#allocation3 + $0x68] sm:$0xff]
  %v3821 = vld [vmem:[#allocation3 + $0x70] sm:$0xff]
  %v3822 = vld [vmem:[#allocation3 + $0x78] sm:$0xff]
  %v3823 = vld [vmem:[#allocation3 + $0x80] sm:$0xff]
  %v3824 = vld [vmem:[#allocation3 + $0x88] sm:$0xff]
  %v3825 = vld [vmem:[#allocation3 + $0x90] sm:$0xff]
  %v3826 = vld [vmem:[#allocation3 + $0x98] sm:$0xff]
  %v3827 = vld [vmem:[#allocation3 + $0xa0] sm:$0xff]
  %v3828 = vld [vmem:[#allocation3 + $0xa8] sm:$0xff]
  %v3829 = vld [vmem:[#allocation3 + $0xb0] sm:$0xff]
  %v3830 = vld [vmem:[#allocation3 + $0xb8] sm:$0xff]
  %v3831 = vld [vmem:[#allocation3 + $0xc0] sm:$0xff]
  %v3832 = vld [vmem:[#allocation3 + $0xc8] sm:$0xff]
  %v3833 = vld [vmem:[#allocation3 + $0xd0] sm:$0xff]
  %v3834 = vld [vmem:[#allocation3 + $0xd8] sm:$0xff]
  %v3835 = vld [vmem:[#allocation3 + $0xe0] sm:$0xff]
  %v3836 = vld [vmem:[#allocation3 + $0xe8] sm:$0xff]
  %v3837 = vld [vmem:[#allocation3 + $0xf0] sm:$0xff]
  %v3838 = vld [vmem:[#allocation3 + $0xf8] sm:$0xff]
  %v3839 = vld [vmem:[#allocation3 + $0x100] sm:$0xff]
  %v3840 = vld [vmem:[#allocation3 + $0x108] sm:$0xff]
  %v3841 = vld [vmem:[#allocation3 + $0x110] sm:$0xff]
  %v3842 = vld [vmem:[#allocation3 + $0x118] sm:$0xff]
  %v3843 = vld [vmem:[#allocation3 + $0x120] sm:$0xff]
  %v3844 = vld [vmem:[#allocation3 + $0x128] sm:$0xff]
  %v3845 = vld [vmem:[#allocation3 + $0x130] sm:$0xff]
  %v3846 = vld [vmem:[#allocation3 + $0x138] sm:$0xff]
  %v3847 = vld [vmem:[#allocation3 + $0x140] sm:$0xff]
  %v3848 = vld [vmem:[#allocation3 + $0x148] sm:$0xff]
  %v3849 = vld [vmem:[#allocation3 + $0x150] sm:$0xff]
  %v3850 = vld [vmem:[#allocation3 + $0x158] sm:$0xff]
  %v3851 = vld [vmem:[#allocation3 + $0x160] sm:$0xff]
  %v3852 = vld [vmem:[#allocation3 + $0x168] sm:$0xff]
  %v3853 = vld [vmem:[#allocation3 + $0x170] sm:$0xff]
  %v3854 = vld [vmem:[#allocation3 + $0x178] sm:$0xff]
  %v3855 = vld [vmem:[#allocation3 + $0x180] sm:$0xff]
  %v3856 = vld [vmem:[#allocation3 + $0x188] sm:$0xff]
  %v3857 = vld [vmem:[#allocation3 + $0x190] sm:$0xff]
  %v3858 = vld [vmem:[#allocation3 + $0x198] sm:$0xff]
  %v3859 = vld [vmem:[#allocation3 + $0x1a0] sm:$0xff]
  %v3860 = vld [vmem:[#allocation3 + $0x1a8] sm:$0xff]
  %v3861 = vld [vmem:[#allocation3 + $0x1b0] sm:$0xff]
  %v3862 = vld [vmem:[#allocation3 + $0x1b8] sm:$0xff]
  %v3863 = vld [vmem:[#allocation3 + $0x1c0] sm:$0xff]
  %v3864 = vld [vmem:[#allocation3 + $0x1c8] sm:$0xff]
  %v3865 = vld [vmem:[#allocation3 + $0x1d0] sm:$0xff]
  %v3866 = vld [vmem:[#allocation3 + $0x1d8] sm:$0xff]
  %v3867 = vld [vmem:[#allocation3 + $0x1e0] sm:$0xff]
  %v3868 = vld [vmem:[#allocation3 + $0x1e8] sm:$0xff]
  %v3869 = vld [vmem:[#allocation3 + $0x1f0] sm:$0xff]
  %v3870 = vld [vmem:[#allocation3 + $0x1f8] sm:$0xff]
  %v3871 = vld [vmem:[#allocation3 + $0x200] sm:$0xff]
  %v3872 = vld [vmem:[#allocation3 + $0x208] sm:$0xff]
  %v3873 = vld [vmem:[#allocation3 + $0x210] sm:$0xff]
  %v3874 = vld [vmem:[#allocation3 + $0x218] sm:$0xff]
  %v3875 = vld [vmem:[#allocation3 + $0x220] sm:$0xff]
  %v3876 = vld [vmem:[#allocation3 + $0x228] sm:$0xff]
  %v3877 = vld [vmem:[#allocation3 + $0x230] sm:$0xff]
  %v3878 = vld [vmem:[#allocation3 + $0x238] sm:$0xff]
  %v3879 = vld [vmem:[#allocation3 + $0x240] sm:$0xff]
  %v3880 = vld [vmem:[#allocation3 + $0x248] sm:$0xff]
  %v3881 = vld [vmem:[#allocation3 + $0x250] sm:$0xff]
  %v3882 = vld [vmem:[#allocation3 + $0x258] sm:$0xff]
  %v3883 = vld [vmem:[#allocation3 + $0x260] sm:$0xff]
  %v3884 = vld [vmem:[#allocation3 + $0x268] sm:$0xff]
  %v3885 = vld [vmem:[#allocation3 + $0x270] sm:$0xff]
  %v3886 = vld [vmem:[#allocation3 + $0x278] sm:$0xff]
  %v3887 = vld [vmem:[#allocation3 + $0x280] sm:$0xff]
  %v3888 = vld [vmem:[#allocation3 + $0x288] sm:$0xff]
  %v3889 = vld [vmem:[#allocation3 + $0x290] sm:$0xff]
  %v3890 = vld [vmem:[#allocation3 + $0x298] sm:$0xff]
  %v3891 = vld [vmem:[#allocation3 + $0x2a0] sm:$0xff]
  %v3892 = vld [vmem:[#allocation3 + $0x2a8] sm:$0xff]
  %v3893 = vld [vmem:[#allocation3 + $0x2b0] sm:$0xff]
  %v3894 = vld [vmem:[#allocation3 + $0x2b8] sm:$0xff]
  %v3895 = vld [vmem:[#allocation3 + $0x2c0] sm:$0xff]
  %v3896 = vld [vmem:[#allocation3 + $0x2c8] sm:$0xff]
  %v3897 = vld [vmem:[#allocation3 + $0x2d0] sm:$0xff]
  %v3898 = vld [vmem:[#allocation3 + $0x2d8] sm:$0xff]
  %v3899 = vld [vmem:[#allocation3 + $0x2e0] sm:$0xff]
  %v3900 = vld [vmem:[#allocation3 + $0x2e8] sm:$0xff]
  %v3901 = vld [vmem:[#allocation3 + $0x2f0] sm:$0xff]
  %v3902 = vld [vmem:[#allocation3 + $0x2f8] sm:$0xff]
  %v3903 = vld [vmem:[#allocation3 + $0x300] sm:$0xff]
  %v3904 = vld [vmem:[#allocation3 + $0x308] sm:$0xff]
  %v3905 = vld [vmem:[#allocation3 + $0x310] sm:$0xff]
  %v3906 = vld [vmem:[#allocation3 + $0x318] sm:$0xff]
  %v3907 = vld [vmem:[#allocation3 + $0x320] sm:$0xff]
  %v3908 = vld [vmem:[#allocation3 + $0x328] sm:$0xff]
  %v3909 = vld [vmem:[#allocation3 + $0x330] sm:$0xff]
  %v3910 = vld [vmem:[#allocation3 + $0x338] sm:$0xff]
  %v3911 = vld [vmem:[#allocation3 + $0x340] sm:$0xff]
  %v3912 = vld [vmem:[#allocation3 + $0x348] sm:$0xff]
  %v3913 = vld [vmem:[#allocation3 + $0x350] sm:$0xff]
  %v3914 = vld [vmem:[#allocation3 + $0x358] sm:$0xff]
  %v3915 = vld [vmem:[#allocation3 + $0x360] sm:$0xff]
  %v3916 = vld [vmem:[#allocation3 + $0x368] sm:$0xff]
  %v3917 = vld [vmem:[#allocation3 + $0x370] sm:$0xff]
  %v3918 = vld [vmem:[#allocation3 + $0x378] sm:$0xff]
  %v3919 = vld [vmem:[#allocation3 + $0x380] sm:$0xff]
  %v3920 = vld [vmem:[#allocation3 + $0x388] sm:$0xff]
  %v3921 = vld [vmem:[#allocation3 + $0x390] sm:$0xff]
  %v3922 = vld [vmem:[#allocation3 + $0x398] sm:$0xff]
  %v3923 = vld [vmem:[#allocation3 + $0x3a0] sm:$0xff]
  %v3924 = vld [vmem:[#allocation3 + $0x3a8] sm:$0xff]
  %v3925 = vld [vmem:[#allocation3 + $0x3b0] sm:$0xff]
  %v3926 = vld [vmem:[#allocation3 + $0x3b8] sm:$0xff]
  %v3927 = vld [vmem:[#allocation3 + $0x3c0] sm:$0xff]
  %v3928 = vld [vmem:[#allocation3 + $0x3c8] sm:$0xff]
  %v3929 = vld [vmem:[#allocation3 + $0x3d0] sm:$0xff]
  %v3930 = vld [vmem:[#allocation3 + $0x3d8] sm:$0xff]
  %v3931 = vld [vmem:[#allocation3 + $0x3e0] sm:$0xff]
  %v3932 = vld [vmem:[#allocation3 + $0x3e8] sm:$0xff]
  %v3933 = vld [vmem:[#allocation3 + $0x3f0] sm:$0xff]
  %v3934 = vld [vmem:[#allocation3 + $0x3f8] sm:$0xff]
  %v3935 = vld [vmem:[#allocation3 + $0x400] sm:$0xff]
  %v3936 = vld [vmem:[#allocation3 + $0x408] sm:$0xff]
  %v3937 = vld [vmem:[#allocation3 + $0x410] sm:$0xff]
  %v3938 = vld [vmem:[#allocation3 + $0x418] sm:$0xff]
  %v3939 = vld [vmem:[#allocation3 + $0x420] sm:$0xff]
  %v3940 = vld [vmem:[#allocation3 + $0x428] sm:$0xff]
  %v3941 = vld [vmem:[#allocation3 + $0x430] sm:$0xff]
  %v3942 = vld [vmem:[#allocation3 + $0x438] sm:$0xff]
  %v3943 = vld [vmem:[#allocation3 + $0x440] sm:$0xff]
  %v3944 = vld [vmem:[#allocation3 + $0x448] sm:$0xff]
  %v3945 = vld [vmem:[#allocation3 + $0x450] sm:$0xff]
  %v3946 = vld [vmem:[#allocation3 + $0x458] sm:$0xff]
  %v3947 = vld [vmem:[#allocation3 + $0x460] sm:$0xff]
  %v3948 = vld [vmem:[#allocation3 + $0x468] sm:$0xff]
  %v3949 = vld [vmem:[#allocation3 + $0x470] sm:$0xff]
  %v3950 = vld [vmem:[#allocation3 + $0x478] sm:$0xff]
  %v3952 = vsel %vm2123, %v3806, 0
  %3954 = vmatprep.subr.mxu0 %v3808
  %3955 = vmatpush1.msra.mxu0 %v3807
  %3956 = vmatprep.subr.mxu0 %v3812
  %3957 = vmatpush1.msra.mxu0 %v3811
  %3958 = vmatprep.subr.mxu0 %v3816
  %3959 = vmatpush1.msra.mxu0 %v3815
  %3960 = vmatprep.subr.mxu0 %v3820
  %3961 = vmatpush1.msra.mxu0 %v3819
  %3962 = vmatprep.subr.mxu0 %v3824
  %3963 = vmatpush1.msra.mxu0 %v3823
  %3964 = vmatprep.subr.mxu0 %v3828
  %3965 = vmatpush1.msra.mxu0 %v3827
  %3966 = vmatprep.subr.mxu0 %v3832
  %3967 = vmatpush1.msra.mxu0 %v3831
  %3968 = vmatprep.subr.mxu0 %v3836
  %3969 = vmatpush1.msra.mxu0 %v3835
  %3970 = vmatprep.subr.mxu0 %v3840
  %3971 = vmatpush1.msra.mxu0 %v3839
  %3972 = vmatprep.subr.mxu0 %v3844
  %3973 = vmatpush1.msra.mxu0 %v3843
  %3974 = vmatprep.subr.mxu0 %v3848
  %3975 = vmatpush1.msra.mxu0 %v3847
  %3976 = vmatprep.subr.mxu0 %v3852
  %3977 = vmatpush1.msra.mxu0 %v3851
  %3978 = vmatprep.subr.mxu0 %v3856
  %3979 = vmatpush1.msra.mxu0 %v3855
  %3980 = vmatprep.subr.mxu0 %v3860
  %3981 = vmatpush1.msra.mxu0 %v3859
  %3982 = vmatprep.subr.mxu0 %v3864
  %3983 = vmatpush1.msra.mxu0 %v3863
  %3984 = vmatprep.subr.mxu0 %v3868
  %3985 = vmatpush1.msra.mxu0 %v3867
  %3986 = vmatprep.subr.mxu0 %v3872
  %3987 = vmatpush1.msra.mxu0 %v3871
  %3988 = vmatprep.subr.mxu0 %v3876
  %3989 = vmatpush1.msra.mxu0 %v3875
  %3990 = vmatprep.subr.mxu0 %v3880
  %3991 = vmatpush1.msra.mxu0 %v3879
  %3992 = vmatprep.subr.mxu0 %v3884
  %3993 = vmatpush1.msra.mxu0 %v3883
  %3994 = vmatprep.subr.mxu0 %v3888
  %3995 = vmatpush1.msra.mxu0 %v3887
  %3996 = vmatprep.subr.mxu0 %v3892
  %3997 = vmatpush1.msra.mxu0 %v3891
  %3998 = vmatprep.subr.mxu0 %v3896
  %3999 = vmatpush1.msra.mxu0 %v3895
  %4000 = vmatprep.subr.mxu0 %v3900
  %4001 = vmatpush1.msra.mxu0 %v3899
  %4002 = vmatprep.subr.mxu0 %v3904
  %4003 = vmatpush1.msra.mxu0 %v3903
  %4004 = vmatprep.subr.mxu0 %v3908
  %4005 = vmatpush1.msra.mxu0 %v3907
  %4006 = vmatprep.subr.mxu0 %v3912
  %4007 = vmatpush1.msra.mxu0 %v3911
  %4008 = vmatprep.subr.mxu0 %v3916
  %4009 = vmatpush1.msra.mxu0 %v3915
  %4010 = vmatprep.subr.mxu0 %v3920
  %4011 = vmatpush1.msra.mxu0 %v3919
  %4012 = vmatprep.subr.mxu0 %v3924
  %4013 = vmatpush1.msra.mxu0 %v3923
  %4014 = vmatprep.subr.mxu0 %v3928
  %4015 = vmatpush1.msra.mxu0 %v3927
  %4016 = vmatprep.subr.mxu0 %v3932
  %4017 = vmatpush1.msra.mxu0 %v3931
  %4018 = vmatprep.mubr.f32.mxu0 %v3805
  %4019 = vmatmul.mubr.f32.gmra.mrb[0].mxu0 %v3804
  %v4020 = vpop.f32.mrb[0].mxu0
  %v4021 = vadd.f32 0.0, %v4020
  %v4022 = vpop.f32.mrb[0].mxu0
  %v4023 = vadd.f32 0.0, %v4022
  %4024 = vdwg.mxu0
  %4025 = vmatprep.subr.mxu0 %v3936
  %4026 = vmatpush1.msra.mxu0 %v3935
  %4027 = vmatprep.subr.mxu0 %v3940
  %4028 = vmatpush1.msra.mxu0 %v3939
  %4029 = vmatprep.subr.mxu0 %v3944
  %4030 = vmatpush1.msra.mxu0 %v3943
  %4031 = vmatprep.subr.mxu0 %v3948
  %4032 = vmatpush1.msra.mxu0 %v3947
  %4033 = vmatprep.subr.mxu0 0.0
  %4034 = vmatpush1.msra.mxu0 0.0
  %4035 = vmatprep.subr.mxu0 0.0
  %4036 = vmatpush1.msra.mxu0 0.0
  %4037 = vmatprep.subr.mxu0 0.0
  %4038 = vmatpush1.msra.mxu0 0.0
  %4039 = vmatprep.subr.mxu0 0.0
  %4040 = vmatpush1.msra.mxu0 0.0
  %4041 = vmatprep.subr.mxu0 0.0
  %4042 = vmatpush1.msra.mxu0 0.0
  %4043 = vmatprep.subr.mxu0 0.0
  %4044 = vmatpush1.msra.mxu0 0.0
  %4045 = vmatprep.subr.mxu0 0.0
  %4046 = vmatpush1.msra.mxu0 0.0
  %4047 = vmatprep.subr.mxu0 0.0
  %4048 = vmatpush1.msra.mxu0 0.0
  %4049 = vmatprep.subr.mxu0 0.0
  %4050 = vmatpush1.msra.mxu0 0.0
  %4051 = vmatprep.subr.mxu0 0.0
  %4052 = vmatpush1.msra.mxu0 0.0
  %4053 = vmatprep.subr.mxu0 0.0
  %4054 = vmatpush1.msra.mxu0 0.0
  %4055 = vmatprep.subr.mxu0 0.0
  %4056 = vmatpush1.msra.mxu0 0.0
  %4057 = vmatprep.subr.mxu0 0.0
  %4058 = vmatpush1.msra.mxu0 0.0
  %4059 = vmatprep.subr.mxu0 0.0
  %4060 = vmatpush1.msra.mxu0 0.0
  %4061 = vmatprep.subr.mxu0 0.0
  %4062 = vmatpush1.msra.mxu0 0.0
  %4063 = vmatprep.subr.mxu0 0.0
  %4064 = vmatpush1.msra.mxu0 0.0
  %4065 = vmatprep.subr.mxu0 0.0
  %4066 = vmatpush1.msra.mxu0 0.0
  %4067 = vmatprep.subr.mxu0 0.0
  %4068 = vmatpush1.msra.mxu0 0.0
  %4069 = vmatprep.subr.mxu0 0.0
  %4070 = vmatpush1.msra.mxu0 0.0
  %4071 = vmatprep.subr.mxu0 0.0
  %4072 = vmatpush1.msra.mxu0 0.0
  %4073 = vmatprep.subr.mxu0 0.0
  %4074 = vmatpush1.msra.mxu0 0.0
  %4075 = vmatprep.subr.mxu0 0.0
  %4076 = vmatpush1.msra.mxu0 0.0
  %4077 = vmatprep.subr.mxu0 0.0
  %4078 = vmatpush1.msra.mxu0 0.0
  %4079 = vmatprep.subr.mxu0 0.0
  %4080 = vmatpush1.msra.mxu0 0.0
  %4081 = vmatprep.subr.mxu0 0.0
  %4082 = vmatpush1.msra.mxu0 0.0
  %4083 = vmatprep.subr.mxu0 0.0
  %4084 = vmatpush1.msra.mxu0 0.0
  %4085 = vmatprep.subr.mxu0 0.0
  %4086 = vmatpush1.msra.mxu0 0.0
  %4087 = vmatprep.subr.mxu0 0.0
  %4088 = vmatpush1.msra.mxu0 0.0
  %4089 = vmatprep.mubr.f32.mxu0 0.0
  %4090 = vmatmul.mubr.f32.gmra.mrb[0].mxu0 %v3952
  %v4091 = vpop.f32.mrb[0].mxu0
  %v4092 = vadd.f32 %v4021, %v4091
  %v4093 = vpop.f32.mrb[0].mxu0
  %v4094 = vadd.f32 %v4023, %v4093
  %4095 = vdwg.mxu0
  %4096 = vmatprep.subr.mxu0 %v3810
  %4097 = vmatpush1.msra.mxu0 %v3809
  %4098 = vmatprep.subr.mxu0 %v3814
  %4099 = vmatpush1.msra.mxu0 %v3813
  %4100 = vmatprep.subr.mxu0 %v3818
  %4101 = vmatpush1.msra.mxu0 %v3817
  %4102 = vmatprep.subr.mxu0 %v3822
  %4103 = vmatpush1.msra.mxu0 %v3821
  %4104 = vmatprep.subr.mxu0 %v3826
  %4105 = vmatpush1.msra.mxu0 %v3825
  %4106 = vmatprep.subr.mxu0 %v3830
  %4107 = vmatpush1.msra.mxu0 %v3829
  %4108 = vmatprep.subr.mxu0 %v3834
  %4109 = vmatpush1.msra.mxu0 %v3833
  %4110 = vmatprep.subr.mxu0 %v3838
  %4111 = vmatpush1.msra.mxu0 %v3837
  %4112 = vmatprep.subr.mxu0 %v3842
  %4113 = vmatpush1.msra.mxu0 %v3841
  %4114 = vmatprep.subr.mxu0 %v3846
  %4115 = vmatpush1.msra.mxu0 %v3845
  %4116 = vmatprep.subr.mxu0 %v3850
  %4117 = vmatpush1.msra.mxu0 %v3849
  %4118 = vmatprep.subr.mxu0 %v3854
  %4119 = vmatpush1.msra.mxu0 %v3853
  %4120 = vmatprep.subr.mxu0 %v3858
  %4121 = vmatpush1.msra.mxu0 %v3857
  %4122 = vmatprep.subr.mxu0 %v3862
  %4123 = vmatpush1.msra.mxu0 %v3861
  %4124 = vmatprep.subr.mxu0 %v3866
  %4125 = vmatpush1.msra.mxu0 %v3865
  %4126 = vmatprep.subr.mxu0 %v3870
  %4127 = vmatpush1.msra.mxu0 %v3869
  %4128 = vmatprep.subr.mxu0 %v3874
  %4129 = vmatpush1.msra.mxu0 %v3873
  %4130 = vmatprep.subr.mxu0 %v3878
  %4131 = vmatpush1.msra.mxu0 %v3877
  %4132 = vmatprep.subr.mxu0 %v3882
  %4133 = vmatpush1.msra.mxu0 %v3881
  %4134 = vmatprep.subr.mxu0 %v3886
  %4135 = vmatpush1.msra.mxu0 %v3885
  %4136 = vmatprep.subr.mxu0 %v3890
  %4137 = vmatpush1.msra.mxu0 %v3889
  %4138 = vmatprep.subr.mxu0 %v3894
  %4139 = vmatpush1.msra.mxu0 %v3893
  %4140 = vmatprep.subr.mxu0 %v3898
  %4141 = vmatpush1.msra.mxu0 %v3897
  %4142 = vmatprep.subr.mxu0 %v3902
  %4143 = vmatpush1.msra.mxu0 %v3901
  %4144 = vmatprep.subr.mxu0 %v3906
  %4145 = vmatpush1.msra.mxu0 %v3905
  %4146 = vmatprep.subr.mxu0 %v3910
  %4147 = vmatpush1.msra.mxu0 %v3909
  %4148 = vmatprep.subr.mxu0 %v3914
  %4149 = vmatpush1.msra.mxu0 %v3913
  %4150 = vmatprep.subr.mxu0 %v3918
  %4151 = vmatpush1.msra.mxu0 %v3917
  %4152 = vmatprep.subr.mxu0 %v3922
  %4153 = vmatpush1.msra.mxu0 %v3921
  %4154 = vmatprep.subr.mxu0 %v3926
  %4155 = vmatpush1.msra.mxu0 %v3925
  %4156 = vmatprep.subr.mxu0 %v3930
  %4157 = vmatpush1.msra.mxu0 %v3929
  %4158 = vmatprep.subr.mxu0 %v3934
  %4159 = vmatpush1.msra.mxu0 %v3933
  %4160 = vmatprep.mubr.f32.mxu0 %v3805
  %4161 = vmatmul.mubr.f32.gmra.mrb[0].mxu0 %v3804
  %v4162 = vpop.f32.mrb[0].mxu0
  %v4163 = vadd.f32 0.0, %v4162
  %v4164 = vpop.f32.mrb[0].mxu0
  %v4165 = vadd.f32 0.0, %v4164
  %4166 = vdwg.mxu0
  %4167 = vmatprep.subr.mxu0 %v3938
  %4168 = vmatpush1.msra.mxu0 %v3937
  %4169 = vmatprep.subr.mxu0 %v3942
  %4170 = vmatpush1.msra.mxu0 %v3941
  %4171 = vmatprep.subr.mxu0 %v3946
  %4172 = vmatpush1.msra.mxu0 %v3945
  %4173 = vmatprep.subr.mxu0 %v3950
  %4174 = vmatpush1.msra.mxu0 %v3949
  %4175 = vmatprep.subr.mxu0 0.0
  %4176 = vmatpush1.msra.mxu0 0.0
  %4177 = vmatprep.subr.mxu0 0.0
  %4178 = vmatpush1.msra.mxu0 0.0
  %4179 = vmatprep.subr.mxu0 0.0
  %4180 = vmatpush1.msra.mxu0 0.0
  %4181 = vmatprep.subr.mxu0 0.0
  %4182 = vmatpush1.msra.mxu0 0.0
  %4183 = vmatprep.subr.mxu0 0.0
  %4184 = vmatpush1.msra.mxu0 0.0
  %4185 = vmatprep.subr.mxu0 0.0
  %4186 = vmatpush1.msra.mxu0 0.0
  %4187 = vmatprep.subr.mxu0 0.0
  %4188 = vmatpush1.msra.mxu0 0.0
  %4189 = vmatprep.subr.mxu0 0.0
  %4190 = vmatpush1.msra.mxu0 0.0
  %4191 = vmatprep.subr.mxu0 0.0
  %4192 = vmatpush1.msra.mxu0 0.0
  %4193 = vmatprep.subr.mxu0 0.0
  %4194 = vmatpush1.msra.mxu0 0.0
  %4195 = vmatprep.subr.mxu0 0.0
  %4196 = vmatpush1.msra.mxu0 0.0
  %4197 = vmatprep.subr.mxu0 0.0
  %4198 = vmatpush1.msra.mxu0 0.0
  %4199 = vmatprep.subr.mxu0 0.0
  %4200 = vmatpush1.msra.mxu0 0.0
  %4201 = vmatprep.subr.mxu0 0.0
  %4202 = vmatpush1.msra.mxu0 0.0
  %4203 = vmatprep.subr.mxu0 0.0
  %4204 = vmatpush1.msra.mxu0 0.0
  %4205 = vmatprep.subr.mxu0 0.0
  %4206 = vmatpush1.msra.mxu0 0.0
  %4207 = vmatprep.subr.mxu0 0.0
  %4208 = vmatpush1.msra.mxu0 0.0
  %4209 = vmatprep.subr.mxu0 0.0
  %4210 = vmatpush1.msra.mxu0 0.0
  %4211 = vmatprep.subr.mxu0 0.0
  %4212 = vmatpush1.msra.mxu0 0.0
  %4213 = vmatprep.subr.mxu0 0.0
  %4214 = vmatpush1.msra.mxu0 0.0
  %4215 = vmatprep.subr.mxu0 0.0
  %4216 = vmatpush1.msra.mxu0 0.0
  %4217 = vmatprep.subr.mxu0 0.0
  %4218 = vmatpush1.msra.mxu0 0.0
  %4219 = vmatprep.subr.mxu0 0.0
  %4220 = vmatpush1.msra.mxu0 0.0
  %4221 = vmatprep.subr.mxu0 0.0
  %4222 = vmatpush1.msra.mxu0 0.0
  %4223 = vmatprep.subr.mxu0 0.0
  %4224 = vmatpush1.msra.mxu0 0.0
  %4225 = vmatprep.subr.mxu0 0.0
  %4226 = vmatpush1.msra.mxu0 0.0
  %4227 = vmatprep.subr.mxu0 0.0
  %4228 = vmatpush1.msra.mxu0 0.0
  %4229 = vmatprep.subr.mxu0 0.0
  %4230 = vmatpush1.msra.mxu0 0.0
  %4231 = vmatprep.mubr.f32.mxu0 0.0
  %4232 = vmatmul.mubr.f32.gmra.mrb[0].mxu0 %v3952
  %v4233 = vpop.f32.mrb[0].mxu0
  %v4234 = vadd.f32 %v4163, %v4233
  %v4235 = vpop.f32.mrb[0].mxu0
  %v4236 = vadd.f32 %v4165, %v4235
  %4237 = vdwg.mxu0
  %4238 = vst [vmem:[%s4] sm:$0xff] %v4092
  %4239 = vst [vmem:[%s4 + $0x8] sm:$0xff] %v4094
  %4240 = vst [vmem:[%s4 + $0x10] sm:$0xff] %v4234
  %4241 = vst [vmem:[%s4 + $0x18] sm:$0xff] %v4236
  // Predicated region
  $region18: #{vanilla_cnn_forward.1} parent=0 // pred_check
    _
  $region19: #{vanilla_cnn_forward.1} parent=0 // pred_check_branch
    %4243 = sbr.rel (0) target = $region21
  $region20: #{vanilla_cnn_forward.1} parent=0 // pred_region
    _
  $region21: #{vanilla_cnn_forward.1} parent=0 // pred_fallthru
    _
  // Predicated region
  $region22: #{vanilla_cnn_forward.1} parent=0 // pred_check
    _
  $region23: #{vanilla_cnn_forward.1} parent=0 // pred_check_branch
    %4245 = sbr.rel (0) target = $region25
  $region24: #{vanilla_cnn_forward.1} parent=0 // pred_region
    _
  $region25: #{vanilla_cnn_forward.1} parent=0 // pred_fallthru
    _

</llo_original>
